<compile_context>
chip_gen: v7x
topology: tpu7x:2x2x1
jax: 0.10.0
libtpu: 0.0.40
codegen_flags: <defaults>
</compile_context>

<pallas_src>
import functools

import jax
import jax.numpy as jnp
from jax.experimental import pallas as pl
from jax.experimental.pallas import tpu as pltpu


def _round_up(x, m):
    return (x + m - 1) // m * m


def _sepconv_kernel(x_hbm, w_ref, b_ref, o_ref, xbuf, sem,
                    *, TH, THp, Wp8, K, num_tiles, extra):
    """One (batch, row-tile) grid step.

    x_hbm : (N, Hpad*Wp8, Cp)  padded input, flattened rows, stays in HBM
    w_ref : (K*K, Cp, Coutp)   folded depthwise*BNscale*pointwise weights
    b_ref : (1, Coutp)         BN bias pushed through the pointwise conv (f32)
    o_ref : (1, TH, Wp8, Coutp)
    xbuf  : (2, THp*Wp8 + extra, Cp) VMEM double buffer for the halo window
    sem   : (2,) DMA semaphores
    """
    n = pl.program_id(0)
    t = pl.program_id(1)
    Cp = xbuf.shape[-1]
    Coutp = o_ref.shape[-1]
    M = TH * Wp8          # output pixels per tile (full padded width)
    rows = THp * Wp8      # flattened input rows per halo window

    def start_fetch(tile, slot):
        pltpu.make_async_copy(
            x_hbm.at[n, pl.ds(tile * (TH * Wp8), rows)],
            xbuf.at[slot, pl.ds(0, rows)],
            sem.at[slot]).start()

    slot = t % 2

    @pl.when(t == 0)
    def _prime():
        # Zero the scratch tail rows once per image; they are only ever read
        # into output columns >= W that the wrapper slices off.
        z = jnp.zeros((extra, Cp), xbuf.dtype)
        xbuf[0, pl.ds(rows, extra)] = z
        xbuf[1, pl.ds(rows, extra)] = z
        start_fetch(0, 0)

    # Wait for the current tile's halo window.
    pltpu.make_async_copy(
        x_hbm.at[n, pl.ds(t * (TH * Wp8), rows)],
        xbuf.at[slot, pl.ds(0, rows)],
        sem.at[slot]).wait()

    # Prefetch the next row tile of the same image while computing this one.
    @pl.when(t + 1 < num_tiles)
    def _prefetch():
        start_fetch(t + 1, 1 - slot)

    # K*K accumulating MXU matmuls.  Each tap operand is a *contiguous*
    # (M, Cp) slab of the flattened window at offset kh*Wp8 + kw, read
    # directly from the VMEM ref (no strided slice / reshape copies, no
    # whole-window value).
    acc = jnp.zeros((M, Coutp), jnp.float32)
    for kh in range(K):
        for kw in range(K):
            xs = xbuf[slot, pl.ds(kh * Wp8 + kw, M)]
            acc = acc + jnp.dot(xs, w_ref[kh * K + kw],
                                preferred_element_type=jnp.float32)

    acc = acc + b_ref[...].astype(jnp.float32)
    o_ref[...] = acc.reshape(1, TH, Wp8, Coutp).astype(o_ref.dtype)


def separable_conv2d(x_nchw, w_dw, bn_gamma, bn_beta, bn_mean, bn_var, w_pw,
                     *, eps=1e-5, target_tile_pixels=256):
    """SeparableConv2d forward (eval-mode BN, stride=1, dilation=1, odd K).

    x_nchw : (N, Cin, H, W)     input, PyTorch NCHW layout
    w_dw   : (Cin, 1, K, K)     depthwise conv weight (groups=Cin, no bias)
    bn_*   : (Cin,)             BatchNorm2d parameters / running stats
    w_pw   : (Cout, Cin, 1, 1)  pointwise conv weight (no bias)
    returns: (N, Cout, H, W)
    """
    N, Cin, H, W = x_nchw.shape
    Cout = w_pw.shape[0]
    K = w_dw.shape[-1]
    assert K % 2 == 1, "only odd kernel sizes ('same' padding) are supported"
    pad = (K - 1) // 2

    Cp = _round_up(Cin, 128)                 # lane-dense channel padding
    Coutp = _round_up(Cout, 128)
    Wp8 = _round_up(W + 2 * pad, 8)          # padded width, sublane aligned

    # Row tile: aim for M = TH*Wp8 around target_tile_pixels (keeps MXU / DMA
    # fed without blowing the f32 accumulator past the vreg file).
    TH = max(8, (target_tile_pixels // Wp8) // 8 * 8)
    TH = min(TH, max(1, H))
    num_tiles = -(-H // TH)                  # ceil
    Ht = num_tiles * TH
    THp = TH + 2 * pad
    Hpad = Ht + 2 * pad
    extra = _round_up(K - 1, 8)              # scratch tail pad rows

    # ---- host-side parameter folding (runs once, outside the kernel) ----
    f32 = jnp.float32
    scale = bn_gamma.astype(f32) / jnp.sqrt(bn_var.astype(f32) + eps)     # (Cin,)
    bias_bn = bn_beta.astype(f32) - bn_mean.astype(f32) * scale           # (Cin,)
    wdw_s = w_dw[:, 0, :, :].astype(f32) * scale[:, None, None]           # (Cin,K,K)
    wpw = jnp.transpose(w_pw[:, :, 0, 0], (1, 0)).astype(f32)             # (Cin,Cout)
    # W'[kh,kw] = diag(wdw_scaled[:,kh,kw]) @ Wpw  -> (K*K, Cin, Cout)
    w_fold = jnp.transpose(wdw_s, (1, 2, 0)).reshape(K * K, Cin, 1) * wpw[None]
    bias_out = bias_bn @ wpw                                              # (Cout,)

    # TODO(synk): on v6e/v7x cast activations + folded weights to bf16 here
    #             (f32 MXU accumulation kept) once callers accept the rounding.
    compute_dtype = x_nchw.dtype
    w_fold_p = jnp.zeros((K * K, Cp, Coutp), compute_dtype)
    w_fold_p = w_fold_p.at[:, :Cin, :Cout].set(w_fold.astype(compute_dtype))
    bias_p = jnp.zeros((1, Coutp), f32).at[0, :Cout].set(bias_out)

    # ---- input layout: NCHW -> NHWC, halo + channel zero pad, row-flatten ----
    # No overlapping window gather: the halo overlap is realized by the
    # in-kernel DMA reading rows [t*TH, t*TH+THp) straight from HBM.
    # TODO(synk): drop both transposes if the surrounding model runs NHWC.
    x_nhwc = jnp.transpose(x_nchw, (0, 2, 3, 1))                          # (N,H,W,Cin)
    x_pad = jnp.pad(
        x_nhwc,
        ((0, 0), (pad, pad + (Ht - H)), (pad, Wp8 - W - pad), (0, Cp - Cin)))
    x_flat = x_pad.reshape(N, Hpad * Wp8, Cp)                             # free reshape

    # ---- VMEM budget (explicit, capped by the chip's physical VMEM) ----
    itemsize = jnp.dtype(compute_dtype).itemsize
    vmem_est = (2 * (THp * Wp8 + extra) * Cp * itemsize          # manual dbl-buffer
                + 2 * TH * Wp8 * Coutp * itemsize                # pipelined out blk
                + 2 * (K * K * Cp * Coutp * itemsize + Coutp * 4)  # weights + bias
                + TH * Wp8 * Coutp * 4)                          # f32 accumulator
    try:
        phys_vmem = int(pltpu.get_tpu_info().vmem_capacity_bytes)
    except Exception:  # pragma: no cover - conservative fallback
        phys_vmem = 64 << 20                                     # v7x floor
    vmem_limit = int(min(max(2 * vmem_est, 32 << 20), int(phys_vmem * 0.9)))

    kernel = functools.partial(_sepconv_kernel, TH=TH, THp=THp, Wp8=Wp8, K=K,
                               num_tiles=num_tiles, extra=extra)

    out_pad = pl.pallas_call(
        kernel,
        out_shape=jax.ShapeDtypeStruct((N, Ht, Wp8, Coutp), compute_dtype),
        grid_spec=pltpu.PrefetchScalarGridSpec(
            num_scalar_prefetch=0,
            grid=(N, num_tiles),
            in_specs=[
                pl.BlockSpec(memory_space=pl.ANY),               # x stays in HBM
                # Grid-invariant weights/bias; for very large Cp*Coutp (v7x,
                # 64 MiB VMEM) add a Cout grid axis and single-buffer these.
                pl.BlockSpec((K * K, Cp, Coutp), lambda n, t: (0, 0, 0)),
                pl.BlockSpec((1, Coutp), lambda n, t: (0, 0)),
            ],
            out_specs=pl.BlockSpec((1, TH, Wp8, Coutp),
                                   lambda n, t: (n, t, 0, 0)),
            scratch_shapes=[
                pltpu.VMEM((2, THp * Wp8 + extra, Cp), compute_dtype),
                pltpu.SemaphoreType.DMA((2,)),
            ]),
        compiler_params=pltpu.CompilerParams(
            dimension_semantics=("parallel", "arbitrary"),
            vmem_limit_bytes=vmem_limit),
    )(x_flat, w_fold_p, bias_p)

    out = out_pad[:, :H, :W, :Cout]          # drop halo-width / row / chan pad
    return jnp.transpose(out, (0, 3, 1, 2))  # back to NCHW


def _reference(x_nchw, w_dw, bn_gamma, bn_beta, bn_mean, bn_var, w_pw, eps=1e-5):
    """Pure-JAX reference (lax conv) for correctness check."""
    Cin = x_nchw.shape[1]
    K = w_dw.shape[-1]
    p = (K - 1) // 2
    dn = jax.lax.conv_dimension_numbers(x_nchw.shape, w_dw.shape,
                                        ("NCHW", "OIHW", "NCHW"))
    y = jax.lax.conv_general_dilated(
        x_nchw, w_dw, window_strides=(1, 1), padding=((p, p), (p, p)),
        dimension_numbers=dn, feature_group_count=Cin)
    scale = bn_gamma / jnp.sqrt(bn_var + eps)
    y = y * scale[None, :, None, None] + (bn_beta - bn_mean * scale)[None, :, None, None]
    dn2 = jax.lax.conv_dimension_numbers(y.shape, w_pw.shape,
                                         ("NCHW", "OIHW", "NCHW"))
    return jax.lax.conv_general_dilated(
        y, w_pw, window_strides=(1, 1), padding="VALID", dimension_numbers=dn2)


if __name__ == "__main__":
    # SeparableConv2d(inplanes=4, planes=8, kernel_size=3, stride=1, padding=1)
    N, Cin, Cout, H, W, K = 2, 4, 8, 16, 16, 3

    key = jax.random.PRNGKey(0)
    k1, k2, k3, k4, k5, k6, k7 = jax.random.split(key, 7)
    x = jax.random.normal(k1, (N, Cin, H, W), dtype=jnp.float32)
    w_dw = jax.random.normal(k2, (Cin, 1, K, K), dtype=jnp.float32) * 0.2
    w_pw = jax.random.normal(k3, (Cout, Cin, 1, 1), dtype=jnp.float32) * 0.2
    bn_gamma = jax.random.uniform(k4, (Cin,), minval=0.5, maxval=1.5)
    bn_beta = jax.random.normal(k5, (Cin,)) * 0.1
    bn_mean = jax.random.normal(k6, (Cin,)) * 0.1
    bn_var = jax.random.uniform(k7, (Cin,), minval=0.5, maxval=1.5)

    out = separable_conv2d(x, w_dw, bn_gamma, bn_beta, bn_mean, bn_var, w_pw)
    out = jax.block_until_ready(out)

    ref = _reference(x, w_dw, bn_gamma, bn_beta, bn_mean, bn_var, w_pw)
    assert out.shape == (N, Cout, H, W), out.shape
    max_err = float(jnp.max(jnp.abs(out - ref)))
    assert jnp.allclose(out, ref, atol=1e-3, rtol=1e-3), max_err

    print("KERNEL_OK")
</pallas_src>

<mosaic_0001>
module attributes {stable_mosaic.version = 11 : i64} {
  func.func @_sepconv_kernel(%arg0: i32, %arg1: i32, %arg2: memref<2x432x128xf32, #tpu.memory_space<any>>, %arg3: memref<9x128x128xf32, #tpu.memory_space<vmem>>, %arg4: memref<1x128xf32, #tpu.memory_space<vmem>>, %arg5: memref<1x8x24x128xf32, #tpu.memory_space<vmem>>, %arg6: memref<2x248x128xf32, #tpu.memory_space<vmem>>, %arg7: memref<2x!tpu.dma_semaphore, #tpu.memory_space<semaphore_mem>>) attributes {dimension_semantics = [#tpu.dimension_semantics<parallel>, #tpu.dimension_semantics<arbitrary>], iteration_bounds = array<i64: 2, 2>, scalar_prefetch = 0 : i64, scratch_operands = 2 : i64, tpu.core_type = #tpu.core_type<tc>, window_params = [{}, {pipeline_mode = #tpu.pipeline_mode<synchronous>, transform_indices = @transform_1, window_bounds = array<i64: 9, 128, 128>}, {pipeline_mode = #tpu.pipeline_mode<synchronous>, transform_indices = @transform_2, window_bounds = array<i64: 1, 128>}, {transform_indices = @transform_3, window_bounds = array<i64: 1, 8, 24, 128>}]} {
    %c2_i32 = arith.constant 2 : i32
    %c0_i32 = arith.constant 0 : i32
    %0 = arith.cmpi eq, %c2_i32, %c0_i32 : i32
    %c1_i32 = arith.constant 1 : i32
    %1 = arith.select %0, %c1_i32, %c2_i32 : i32
    %2 = arith.remsi %arg1, %1 : i32
    %c0_i32_0 = arith.constant 0 : i32
    %3 = arith.cmpi ne, %2, %c0_i32_0 : i32
    %c0_i32_1 = arith.constant 0 : i32
    %4 = arith.cmpi slt, %2, %c0_i32_1 : i32
    %c0_i32_2 = arith.constant 0 : i32
    %5 = arith.cmpi slt, %1, %c0_i32_2 : i32
    %6 = arith.xori %4, %5 : i1
    %7 = arith.andi %6, %3 : i1
    %8 = arith.addi %2, %1 : i32
    %9 = arith.select %7, %8, %2 : i32
    %c0_i32_3 = arith.constant 0 : i32
    %10 = arith.cmpi eq, %arg1, %c0_i32_3 : i32
    %11 = arith.extui %10 : i1 to i32
    %c0_i32_4 = arith.constant 0 : i32
    %12 = arith.cmpi ne, %11, %c0_i32_4 : i32
    scf.if %12 {
      %cst_56 = arith.constant 0.000000e+00 : f32
      %93 = vector.broadcast %cst_56 : f32 to vector<8x128xf32>
      %c0_57 = arith.constant 0 : index
      %c240 = arith.constant 240 : index
      %c0_58 = arith.constant 0 : index
      %94 = vector.load %arg6[%c0_57, %c240, %c0_58] : memref<2x248x128xf32, #tpu.memory_space<vmem>>, vector<1x8x128xf32>
      %95 = vector.shape_cast %94 : vector<1x8x128xf32> to vector<8x128xf32>
      %96 = vector.shape_cast %93 : vector<8x128xf32> to vector<1x8x128xf32>
      tpu.vector_store %arg6[%c0_57, %c240, %c0_58], %96 {strides = array<i32>} : memref<2x248x128xf32, #tpu.memory_space<vmem>>, vector<1x8x128xf32>,
      %c1_59 = arith.constant 1 : index
      %c240_60 = arith.constant 240 : index
      %c0_61 = arith.constant 0 : index
      %97 = vector.load %arg6[%c1_59, %c240_60, %c0_61] : memref<2x248x128xf32, #tpu.memory_space<vmem>>, vector<1x8x128xf32>
      %98 = vector.shape_cast %97 : vector<1x8x128xf32> to vector<8x128xf32>
      %99 = vector.shape_cast %93 : vector<8x128xf32> to vector<1x8x128xf32>
      tpu.vector_store %arg6[%c1_59, %c240_60, %c0_61], %99 {strides = array<i32>} : memref<2x248x128xf32, #tpu.memory_space<vmem>>, vector<1x8x128xf32>,
      %c0_i32_62 = arith.constant 0 : i32
      %c0_i32_63 = arith.constant 0 : i32
      %c0_i32_64 = arith.constant 0 : i32
      %c0_i32_65 = arith.constant 0 : i32
      %100 = tpu.memref_slice %arg2[%arg0, %c0_i32_64, %c0_i32_65] : memref<2x432x128xf32, #tpu.memory_space<any>> -> memref<1x240x128xf32, #tpu.memory_space<any>>
      %101 = tpu.memref_squeeze %100 : memref<1x240x128xf32, #tpu.memory_space<any>> -> memref<240x128xf32, #tpu.memory_space<any>>
      %c0_i32_66 = arith.constant 0 : i32
      %c0_i32_67 = arith.constant 0 : i32
      %102 = tpu.memref_slice %arg6[%c0_i32_62, %c0_i32_66, %c0_i32_67] : memref<2x248x128xf32, #tpu.memory_space<vmem>> -> memref<1x240x128xf32, #tpu.memory_space<vmem>>
      %103 = tpu.memref_squeeze %102 : memref<1x240x128xf32, #tpu.memory_space<vmem>> -> memref<240x128xf32, #tpu.memory_space<vmem>>
      %104 = tpu.memref_slice %arg7[%c0_i32_63] : memref<2x!tpu.dma_semaphore, #tpu.memory_space<semaphore_mem>> -> memref<1x!tpu.dma_semaphore, #tpu.memory_space<semaphore_mem>>
      %105 = tpu.memref_squeeze %104 : memref<1x!tpu.dma_semaphore, #tpu.memory_space<semaphore_mem>> -> memref<!tpu.dma_semaphore, #tpu.memory_space<semaphore_mem>>
      tpu.enqueue_dma source(%101 : memref<240x128xf32, #tpu.memory_space<any>>) target(%103 : memref<240x128xf32, #tpu.memory_space<vmem>>) target_semaphore(%105 : memref<!tpu.dma_semaphore, #tpu.memory_space<semaphore_mem>>)
    } else {
    }
    %c192_i32 = arith.constant 192 : i32
    %13 = arith.muli %arg1, %c192_i32 : i32
    %c0_i32_5 = arith.constant 0 : i32
    %14 = tpu.memref_slice %arg2[%arg0, %13, %c0_i32_5] : memref<2x432x128xf32, #tpu.memory_space<any>> -> memref<1x240x128xf32, #tpu.memory_space<any>>
    %15 = tpu.memref_squeeze %14 : memref<1x240x128xf32, #tpu.memory_space<any>> -> memref<240x128xf32, #tpu.memory_space<any>>
    %c0_i32_6 = arith.constant 0 : i32
    %c0_i32_7 = arith.constant 0 : i32
    %16 = tpu.memref_slice %arg6[%9, %c0_i32_6, %c0_i32_7] : memref<2x248x128xf32, #tpu.memory_space<vmem>> -> memref<1x240x128xf32, #tpu.memory_space<vmem>>
    %17 = tpu.memref_squeeze %16 : memref<1x240x128xf32, #tpu.memory_space<vmem>> -> memref<240x128xf32, #tpu.memory_space<vmem>>
    %18 = tpu.memref_slice %arg7[%9] : memref<2x!tpu.dma_semaphore, #tpu.memory_space<semaphore_mem>> -> memref<1x!tpu.dma_semaphore, #tpu.memory_space<semaphore_mem>>
    %19 = tpu.memref_squeeze %18 : memref<1x!tpu.dma_semaphore, #tpu.memory_space<semaphore_mem>> -> memref<!tpu.dma_semaphore, #tpu.memory_space<semaphore_mem>>
    tpu.wait_dma2 semaphore(%19 : memref<!tpu.dma_semaphore, #tpu.memory_space<semaphore_mem>>) src(%15 : memref<240x128xf32, #tpu.memory_space<any>>) dst(%17 : memref<240x128xf32, #tpu.memory_space<vmem>>)
    %c1_i32_8 = arith.constant 1 : i32
    %20 = arith.addi %arg1, %c1_i32_8 : i32
    %c2_i32_9 = arith.constant 2 : i32
    %21 = arith.cmpi slt, %20, %c2_i32_9 : i32
    %22 = arith.extui %21 : i1 to i32
    %c0_i32_10 = arith.constant 0 : i32
    %23 = arith.cmpi ne, %22, %c0_i32_10 : i32
    scf.if %23 {
      %c1_i32_56 = arith.constant 1 : i32
      %93 = arith.addi %arg1, %c1_i32_56 : i32
      %c1_i32_57 = arith.constant 1 : i32
      %94 = arith.subi %c1_i32_57, %9 : i32
      %c192_i32_58 = arith.constant 192 : i32
      %95 = arith.muli %93, %c192_i32_58 : i32
      %c0_i32_59 = arith.constant 0 : i32
      %96 = tpu.memref_slice %arg2[%arg0, %95, %c0_i32_59] : memref<2x432x128xf32, #tpu.memory_space<any>> -> memref<1x240x128xf32, #tpu.memory_space<any>>
      %97 = tpu.memref_squeeze %96 : memref<1x240x128xf32, #tpu.memory_space<any>> -> memref<240x128xf32, #tpu.memory_space<any>>
      %c0_i32_60 = arith.constant 0 : i32
      %c0_i32_61 = arith.constant 0 : i32
      %98 = tpu.memref_slice %arg6[%94, %c0_i32_60, %c0_i32_61] : memref<2x248x128xf32, #tpu.memory_space<vmem>> -> memref<1x240x128xf32, #tpu.memory_space<vmem>>
      %99 = tpu.memref_squeeze %98 : memref<1x240x128xf32, #tpu.memory_space<vmem>> -> memref<240x128xf32, #tpu.memory_space<vmem>>
      %100 = tpu.memref_slice %arg7[%94] : memref<2x!tpu.dma_semaphore, #tpu.memory_space<semaphore_mem>> -> memref<1x!tpu.dma_semaphore, #tpu.memory_space<semaphore_mem>>
      %101 = tpu.memref_squeeze %100 : memref<1x!tpu.dma_semaphore, #tpu.memory_space<semaphore_mem>> -> memref<!tpu.dma_semaphore, #tpu.memory_space<semaphore_mem>>
      tpu.enqueue_dma source(%97 : memref<240x128xf32, #tpu.memory_space<any>>) target(%99 : memref<240x128xf32, #tpu.memory_space<vmem>>) target_semaphore(%101 : memref<!tpu.dma_semaphore, #tpu.memory_space<semaphore_mem>>)
    } else {
    }
    %cst = arith.constant 0.000000e+00 : f32
    %24 = vector.broadcast %cst : f32 to vector<192x128xf32>
    %25 = arith.index_cast %9 : i32 to index
    %c0 = arith.constant 0 : index
    %c0_11 = arith.constant 0 : index
    %26 = vector.load %arg6[%25, %c0, %c0_11] : memref<2x248x128xf32, #tpu.memory_space<vmem>>, vector<1x192x128xf32>
    %27 = vector.shape_cast %26 : vector<1x192x128xf32> to vector<192x128xf32>
    %c0_12 = arith.constant 0 : index
    %c0_13 = arith.constant 0 : index
    %c0_14 = arith.constant 0 : index
    %28 = vector.load %arg3[%c0_12, %c0_13, %c0_14] : memref<9x128x128xf32, #tpu.memory_space<vmem>>, vector<1x128x128xf32>
    %29 = vector.shape_cast %28 : vector<1x128x128xf32> to vector<128x128xf32>
    %cst_15 = arith.constant dense<0.000000e+00> : vector<192x128xf32>
    %30 = tpu.matmul %27, %29, %cst_15 {dimension_numbers = #tpu.dot_dimension_numbers<[1], [0], [0], [1], [0, 0, 1, 1], [], []>} : vector<192x128xf32>, vector<128x128xf32>, vector<192x128xf32> -> vector<192x128xf32>
    %31 = arith.addf %24, %30 : vector<192x128xf32>
    %32 = arith.index_cast %9 : i32 to index
    %c1 = arith.constant 1 : index
    %c0_16 = arith.constant 0 : index
    %33 = vector.load %arg6[%32, %c1, %c0_16] : memref<2x248x128xf32, #tpu.memory_space<vmem>>, vector<1x192x128xf32>
    %34 = vector.shape_cast %33 : vector<1x192x128xf32> to vector<192x128xf32>
    %c1_17 = arith.constant 1 : index
    %c0_18 = arith.constant 0 : index
    %c0_19 = arith.constant 0 : index
    %35 = vector.load %arg3[%c1_17, %c0_18, %c0_19] : memref<9x128x128xf32, #tpu.memory_space<vmem>>, vector<1x128x128xf32>
    %36 = vector.shape_cast %35 : vector<1x128x128xf32> to vector<128x128xf32>
    %cst_20 = arith.constant dense<0.000000e+00> : vector<192x128xf32>
    %37 = tpu.matmul %34, %36, %cst_20 {dimension_numbers = #tpu.dot_dimension_numbers<[1], [0], [0], [1], [0, 0, 1, 1], [], []>} : vector<192x128xf32>, vector<128x128xf32>, vector<192x128xf32> -> vector<192x128xf32>
    %38 = arith.addf %31, %37 : vector<192x128xf32>
    %39 = arith.index_cast %9 : i32 to index
    %c2 = arith.constant 2 : index
    %c0_21 = arith.constant 0 : index
    %40 = vector.load %arg6[%39, %c2, %c0_21] : memref<2x248x128xf32, #tpu.memory_space<vmem>>, vector<1x192x128xf32>
    %41 = vector.shape_cast %40 : vector<1x192x128xf32> to vector<192x128xf32>
    %c2_22 = arith.constant 2 : index
    %c0_23 = arith.constant 0 : index
    %c0_24 = arith.constant 0 : index
    %42 = vector.load %arg3[%c2_22, %c0_23, %c0_24] : memref<9x128x128xf32, #tpu.memory_space<vmem>>, vector<1x128x128xf32>
    %43 = vector.shape_cast %42 : vector<1x128x128xf32> to vector<128x128xf32>
    %cst_25 = arith.constant dense<0.000000e+00> : vector<192x128xf32>
    %44 = tpu.matmul %41, %43, %cst_25 {dimension_numbers = #tpu.dot_dimension_numbers<[1], [0], [0], [1], [0, 0, 1, 1], [], []>} : vector<192x128xf32>, vector<128x128xf32>, vector<192x128xf32> -> vector<192x128xf32>
    %45 = arith.addf %38, %44 : vector<192x128xf32>
    %46 = arith.index_cast %9 : i32 to index
    %c24 = arith.constant 24 : index
    %c0_26 = arith.constant 0 : index
    %47 = vector.load %arg6[%46, %c24, %c0_26] : memref<2x248x128xf32, #tpu.memory_space<vmem>>, vector<1x192x128xf32>
    %48 = vector.shape_cast %47 : vector<1x192x128xf32> to vector<192x128xf32>
    %c3 = arith.constant 3 : index
    %c0_27 = arith.constant 0 : index
    %c0_28 = arith.constant 0 : index
    %49 = vector.load %arg3[%c3, %c0_27, %c0_28] : memref<9x128x128xf32, #tpu.memory_space<vmem>>, vector<1x128x128xf32>
    %50 = vector.shape_cast %49 : vector<1x128x128xf32> to vector<128x128xf32>
    %cst_29 = arith.constant dense<0.000000e+00> : vector<192x128xf32>
    %51 = tpu.matmul %48, %50, %cst_29 {dimension_numbers = #tpu.dot_dimension_numbers<[1], [0], [0], [1], [0, 0, 1, 1], [], []>} : vector<192x128xf32>, vector<128x128xf32>, vector<192x128xf32> -> vector<192x128xf32>
    %52 = arith.addf %45, %51 : vector<192x128xf32>
    %53 = arith.index_cast %9 : i32 to index
    %c25 = arith.constant 25 : index
    %c0_30 = arith.constant 0 : index
    %54 = vector.load %arg6[%53, %c25, %c0_30] : memref<2x248x128xf32, #tpu.memory_space<vmem>>, vector<1x192x128xf32>
    %55 = vector.shape_cast %54 : vector<1x192x128xf32> to vector<192x128xf32>
    %c4 = arith.constant 4 : index
    %c0_31 = arith.constant 0 : index
    %c0_32 = arith.constant 0 : index
    %56 = vector.load %arg3[%c4, %c0_31, %c0_32] : memref<9x128x128xf32, #tpu.memory_space<vmem>>, vector<1x128x128xf32>
    %57 = vector.shape_cast %56 : vector<1x128x128xf32> to vector<128x128xf32>
    %cst_33 = arith.constant dense<0.000000e+00> : vector<192x128xf32>
    %58 = tpu.matmul %55, %57, %cst_33 {dimension_numbers = #tpu.dot_dimension_numbers<[1], [0], [0], [1], [0, 0, 1, 1], [], []>} : vector<192x128xf32>, vector<128x128xf32>, vector<192x128xf32> -> vector<192x128xf32>
    %59 = arith.addf %52, %58 : vector<192x128xf32>
    %60 = arith.index_cast %9 : i32 to index
    %c26 = arith.constant 26 : index
    %c0_34 = arith.constant 0 : index
    %61 = vector.load %arg6[%60, %c26, %c0_34] : memref<2x248x128xf32, #tpu.memory_space<vmem>>, vector<1x192x128xf32>
    %62 = vector.shape_cast %61 : vector<1x192x128xf32> to vector<192x128xf32>
    %c5 = arith.constant 5 : index
    %c0_35 = arith.constant 0 : index
    %c0_36 = arith.constant 0 : index
    %63 = vector.load %arg3[%c5, %c0_35, %c0_36] : memref<9x128x128xf32, #tpu.memory_space<vmem>>, vector<1x128x128xf32>
    %64 = vector.shape_cast %63 : vector<1x128x128xf32> to vector<128x128xf32>
    %cst_37 = arith.constant dense<0.000000e+00> : vector<192x128xf32>
    %65 = tpu.matmul %62, %64, %cst_37 {dimension_numbers = #tpu.dot_dimension_numbers<[1], [0], [0], [1], [0, 0, 1, 1], [], []>} : vector<192x128xf32>, vector<128x128xf32>, vector<192x128xf32> -> vector<192x128xf32>
    %66 = arith.addf %59, %65 : vector<192x128xf32>
    %67 = arith.index_cast %9 : i32 to index
    %c48 = arith.constant 48 : index
    %c0_38 = arith.constant 0 : index
    %68 = vector.load %arg6[%67, %c48, %c0_38] : memref<2x248x128xf32, #tpu.memory_space<vmem>>, vector<1x192x128xf32>
    %69 = vector.shape_cast %68 : vector<1x192x128xf32> to vector<192x128xf32>
    %c6 = arith.constant 6 : index
    %c0_39 = arith.constant 0 : index
    %c0_40 = arith.constant 0 : index
    %70 = vector.load %arg3[%c6, %c0_39, %c0_40] : memref<9x128x128xf32, #tpu.memory_space<vmem>>, vector<1x128x128xf32>
    %71 = vector.shape_cast %70 : vector<1x128x128xf32> to vector<128x128xf32>
    %cst_41 = arith.constant dense<0.000000e+00> : vector<192x128xf32>
    %72 = tpu.matmul %69, %71, %cst_41 {dimension_numbers = #tpu.dot_dimension_numbers<[1], [0], [0], [1], [0, 0, 1, 1], [], []>} : vector<192x128xf32>, vector<128x128xf32>, vector<192x128xf32> -> vector<192x128xf32>
    %73 = arith.addf %66, %72 : vector<192x128xf32>
    %74 = arith.index_cast %9 : i32 to index
    %c49 = arith.constant 49 : index
    %c0_42 = arith.constant 0 : index
    %75 = vector.load %arg6[%74, %c49, %c0_42] : memref<2x248x128xf32, #tpu.memory_space<vmem>>, vector<1x192x128xf32>
    %76 = vector.shape_cast %75 : vector<1x192x128xf32> to vector<192x128xf32>
    %c7 = arith.constant 7 : index
    %c0_43 = arith.constant 0 : index
    %c0_44 = arith.constant 0 : index
    %77 = vector.load %arg3[%c7, %c0_43, %c0_44] : memref<9x128x128xf32, #tpu.memory_space<vmem>>, vector<1x128x128xf32>
    %78 = vector.shape_cast %77 : vector<1x128x128xf32> to vector<128x128xf32>
    %cst_45 = arith.constant dense<0.000000e+00> : vector<192x128xf32>
    %79 = tpu.matmul %76, %78, %cst_45 {dimension_numbers = #tpu.dot_dimension_numbers<[1], [0], [0], [1], [0, 0, 1, 1], [], []>} : vector<192x128xf32>, vector<128x128xf32>, vector<192x128xf32> -> vector<192x128xf32>
    %80 = arith.addf %73, %79 : vector<192x128xf32>
    %81 = arith.index_cast %9 : i32 to index
    %c50 = arith.constant 50 : index
    %c0_46 = arith.constant 0 : index
    %82 = vector.load %arg6[%81, %c50, %c0_46] : memref<2x248x128xf32, #tpu.memory_space<vmem>>, vector<1x192x128xf32>
    %83 = vector.shape_cast %82 : vector<1x192x128xf32> to vector<192x128xf32>
    %c8 = arith.constant 8 : index
    %c0_47 = arith.constant 0 : index
    %c0_48 = arith.constant 0 : index
    %84 = vector.load %arg3[%c8, %c0_47, %c0_48] : memref<9x128x128xf32, #tpu.memory_space<vmem>>, vector<1x128x128xf32>
    %85 = vector.shape_cast %84 : vector<1x128x128xf32> to vector<128x128xf32>
    %cst_49 = arith.constant dense<0.000000e+00> : vector<192x128xf32>
    %86 = tpu.matmul %83, %85, %cst_49 {dimension_numbers = #tpu.dot_dimension_numbers<[1], [0], [0], [1], [0, 0, 1, 1], [], []>} : vector<192x128xf32>, vector<128x128xf32>, vector<192x128xf32> -> vector<192x128xf32>
    %87 = arith.addf %80, %86 : vector<192x128xf32>
    %c0_50 = arith.constant 0 : index
    %c0_51 = arith.constant 0 : index
    %88 = vector.load %arg4[%c0_50, %c0_51] : memref<1x128xf32, #tpu.memory_space<vmem>>, vector<1x128xf32>
    %89 = vector.broadcast %88 : vector<1x128xf32> to vector<192x128xf32>
    %90 = arith.addf %87, %89 : vector<192x128xf32>
    %91 = vector.shape_cast %90 : vector<192x128xf32> to vector<1x8x24x128xf32>
    %c0_52 = arith.constant 0 : index
    %c0_53 = arith.constant 0 : index
    %c0_54 = arith.constant 0 : index
    %c0_55 = arith.constant 0 : index
    %92 = vector.load %arg5[%c0_52, %c0_53, %c0_54, %c0_55] : memref<1x8x24x128xf32, #tpu.memory_space<vmem>>, vector<1x8x24x128xf32>
    tpu.vector_store %arg5[%c0_52, %c0_53, %c0_54, %c0_55], %91 {strides = array<i32>} : memref<1x8x24x128xf32, #tpu.memory_space<vmem>>, vector<1x8x24x128xf32>,
    return
  }
  func.func @transform_1(%arg0: i32, %arg1: i32) -> (i32, i32, i32) {
    %c0_i32 = arith.constant 0 : i32
    %c0_i32_0 = arith.constant 0 : i32
    %c0_i32_1 = arith.constant 0 : i32
    %c0_i32_2 = arith.constant 0 : i32
    return %c0_i32, %c0_i32_0, %c0_i32_1 : i32, i32, i32
  }
  func.func @transform_2(%arg0: i32, %arg1: i32) -> (i32, i32) {
    %c0_i32 = arith.constant 0 : i32
    %c0_i32_0 = arith.constant 0 : i32
    %c0_i32_1 = arith.constant 0 : i32
    return %c0_i32, %c0_i32_0 : i32, i32
  }
  func.func @transform_3(%arg0: i32, %arg1: i32) -> (i32, i32, i32, i32) {
    %c0_i32 = arith.constant 0 : i32
    %c0_i32_0 = arith.constant 0 : i32
    %c0_i32_1 = arith.constant 0 : i32
    return %arg0, %arg1, %c0_i32, %c0_i32_0 : i32, i32, i32, i32
  }
}

</mosaic_0001>

<llo_original>
// kernel: tpu_custom_call.1
$region0: #{tpu_custom_call.1}
  #allocation0 [shape = 'u32[]', space=smem, size = 0x4, offset = 0x4, fixed_abs, tag = 'smem constant byte address 0x4 - core index']
  #allocation1 [shape = 'u32[144,128]{1,0:T(1,128)}', space=vmem, size = 0x12000, scoped, tag = 'internal scratch']
  #allocation2 [shape = 'f32[2,248,128]{2,1,0:T(8,128)}', space=vmem, size = 0x3e000, scoped, tag = 'scratch operand']
  #allocation3 [shape = 's32[2]{0}', space=sflag, size = 0x8, scoped, tag = 'scratch operand']
  #allocation8 [shape = 's32[]', space=sflag, size = 0x4, offset = 0, fixed_abs, tag = 'sflag constant byte address 0x0 - dummy sync flag']
  #allocation9 [shape = 's32[]', space=sflag, size = 0x4, offset = 0, fixed_abs, tag = 'sflag constant byte address 0x0 - dummy sync flag']
  #allocation10 [shape = 'u32[]', space=smem, size = 0x4, offset = 0x44, fixed_abs, tag = 'smem constant byte address 0x44 - assertion arg 0']
  #allocation11 [shape = 'u32[]', space=smem, size = 0x4, offset = 0x48, fixed_abs, tag = 'smem constant byte address 0x48 - assertion arg 1']
  #allocation12 [shape = 's32[]', space=sflag, size = 0x4, offset = 0, fixed_abs, tag = 'sflag constant byte address 0x0 - dummy sync flag']
  #allocation13 [shape = 's32[]', space=sflag, size = 0x4, offset = 0, fixed_abs, tag = 'sflag constant byte address 0x0 - dummy sync flag']
  %s0 = inlined_call_operand.hbm [shape: f32[2,432,128], index: 0, kind: input, shape index: {}]
  %s1 = inlined_call_operand.hbm [shape: f32[9,128,128], index: 1, kind: input, shape index: {}]
  %s2 = inlined_call_operand.vmem [shape: f32[1,128], index: 2, kind: input, shape index: {}]
  %s3 = inlined_call_operand.hbm [shape: f32[2,16,24,128], index: 3, kind: output, shape index: {}]
  %s4 = sld [smem:[#allocation0]]
  $region61: #{tpu_custom_call.1} parent=0
    _
  %s6 = ssub.s32 1, %s4
  %s7 = scalar_select 0, %s6, %s4
  $region1: #{tpu_custom_call.1} parent=0
    #allocation4 [shape = 'u8[589824]{0}', space=vmem, size = 0x90000, scoped, tag = 'input window, operand 1, single buffered']
    #allocation5 [shape = 's32[2]{0}', space=sflag, size = 0x8, scoped, tag = 'scoped memory for tpu_custom_call.1']
    #allocation6 [shape = 's32[2]{0}', space=sflag, size = 0x8, scoped, tag = 'scoped memory for tpu_custom_call.1']
    #allocation7 [shape = 'u8[196608]{0}', space=vmem, size = 0x30000, scoped, tag = 'output window, operand 0']
    %8 = vsyncpa [#allocation5], 0
    %9 = vsyncpa [#allocation6], 0
    %s10 = scalar_lea.sflag [#allocation6], 1
    %11 = vsyncpa %s10, 0
    loop: start=0, step=1, limit=6
    $region2: #{tpu_custom_call.1} parent=1 // loop_pre_header
      _
    $region3: #{tpu_custom_call.1} parent=1 // loop_header
      %s13 = sphi 0, %s17
      %p14 = scmp.ge.s32.totalorder %s13, 6
      %s20 = sphi 0, %s32
      %s21 = sphi 0, %s28
      %s22 = sphi 0, %s20
      %s23 = sphi 0, %s21
      %s24 = sphi 0, %s22
      %s25 = sphi 0, %s23
      %s33 = sphi 0, %s33
      %s35 = sphi 0, %s33
      %s36 = sphi 0, %s35
      %s50 = sphi 0, %s36
      %s54 = sphi 0, %s54
      %s56 = sphi 0, %s54
      %s57 = sphi 0, %s56
      %s71 = sphi 0, %s57
      %s79 = sphi 0, %s81
      %s82 = sphi 0, %s79
      %s83 = sphi 0, %s82
      %s99 = sphi 0, %s83
    $region4: #{tpu_custom_call.1} parent=1 // loop_header_branch
      %16 = sbr.rel (%p14) target = $region8
    $region5: #{tpu_custom_call.1} parent=1 // loop_body
      %s18 = ssub.s32 %s13, 1
      %s19 = ssub.s32 %s13, 2
      %s26 = sadd.s32 1, %s21
      %p27 = scmp.ge.s32.totalorder %s26, 2
      %s28 = scalar_select %p27, 0, %s26
      %s29 = sadd.s32 1, %s20
      %s30 = scalar_select %p27, %s29, %s20
      %p31 = scmp.ge.s32.totalorder %s30, 2
      %s32 = scalar_select %p31, 0, %s30
      %s34 = sadd.s32 %s33, 1
      %p37 = scmp.eq.s32.totalorder %s13, 3
      %p38 = scmp.ne.s32.totalorder %s33, %s35
      %p39 = scmp.eq.s32.totalorder %s13, 0
      %p40 = por %p38, %p39
      %p41 = scmp.ne.s32.totalorder %s33, %s35
      %p42 = scmp.eq.s32.totalorder %s18, 3
      %p43 = por %p41, %p42
      %p44 = scmp.ne.s32.totalorder %s35, %s36
      %p45 = scmp.eq.s32.totalorder %s18, 0
      %p46 = por %p44, %p45
      %p47 = scmp.ne.s32.totalorder %s35, %s36
      %p48 = scmp.eq.s32.totalorder %s19, 3
      %p49 = por %p47, %p48
      %p51 = scmp.ne.s32.totalorder %s36, %s50
      %p52 = scmp.eq.s32.totalorder %s19, 0
      %p53 = por %p51, %p52
      %s55 = sadd.s32 %s54, 1
      %p58 = scmp.eq.s32.totalorder %s13, 3
      %p59 = scmp.ne.s32.totalorder %s54, %s56
      %p60 = scmp.eq.s32.totalorder %s13, 0
      %p61 = por %p59, %p60
      %p62 = scmp.ne.s32.totalorder %s54, %s56
      %p63 = scmp.eq.s32.totalorder %s18, 3
      %p64 = por %p62, %p63
      %p65 = scmp.ne.s32.totalorder %s56, %s57
      %p66 = scmp.eq.s32.totalorder %s18, 0
      %p67 = por %p65, %p66
      %p68 = scmp.ne.s32.totalorder %s56, %s57
      %p69 = scmp.eq.s32.totalorder %s19, 3
      %p70 = por %p68, %p69
      %p72 = scmp.ne.s32.totalorder %s57, %s71
      %p73 = scmp.eq.s32.totalorder %s19, 0
      %p74 = por %p72, %p73
      %s75 = ssub.s32 %s20, %s32
      %s76 = ssub.s32 %s21, %s28
      %s77 = sor.u32 %s75, %s76
      %p78 = scmp.eq.s32.totalorder %s77, 0
      %s80 = sadd.s32 %s79, 1
      %s81 = scalar_select %p78, %s79, %s80
      %p84 = pneg %p78
      %p85 = scmp.eq.s32.totalorder %s13, 3
      %p86 = por %p84, %p85
      %p87 = scmp.ne.s32.totalorder %s79, %s82
      %p88 = scmp.eq.s32.totalorder %s13, 0
      %p89 = por %p87, %p88
      %p90 = scmp.ne.s32.totalorder %s79, %s82
      %p91 = scmp.eq.s32.totalorder %s18, 3
      %p92 = por %p90, %p91
      %p93 = scmp.ne.s32.totalorder %s82, %s83
      %p94 = scmp.eq.s32.totalorder %s18, 0
      %p95 = por %p93, %p94
      %p96 = scmp.ne.s32.totalorder %s82, %s83
      %p97 = scmp.eq.s32.totalorder %s19, 3
      %p98 = por %p96, %p97
      %p100 = scmp.ne.s32.totalorder %s83, %s99
      %p101 = scmp.eq.s32.totalorder %s19, 0
      %p102 = por %p100, %p101
      %p103 = scmp.le.s32.totalorder 1, %s13
      %p104 = scmp.lt.s32.totalorder %s13, 5
      %p105 = pnand %p103, %p104
      %p106 = pneg %p105
      // Predicated region
      $region9: #{tpu_custom_call.1} parent=5 // pred_check
        _
      $region10: #{tpu_custom_call.1} parent=5 // pred_check_branch
        %108 = sbr.rel (%p105) target = $region12
      $region11: #{tpu_custom_call.1} parent=5 // pred_region
        %s109 = ssub.s32 %s13, 1
        // Predicated region
        $region13: #{tpu_custom_call.1} parent=11 // pred_check
          %p110 = pneg %p46
        $region14: #{tpu_custom_call.1} parent=11 // pred_check_branch
          %112 = sbr.rel (%p110) target = $region16
        $region15: #{tpu_custom_call.1} parent=11 // pred_region
          %s114 = ssub.s32 18432, 18432
          %115 = vsyncadd [#allocation5], %s114
          %s116 = sshll.u32 [#allocation4], 4
          %s117 = int_to_ptr.vmem [resolvable:$true] %s116
          %122 = dma.hbm_to_vmem [thread:$0]  %s1, 18432, %s117, [#allocation5], 128, 128, 8
        $region16: #{tpu_custom_call.1} parent=11 // pred_fallthru
          _
        // Predicated region
        $region17: #{tpu_custom_call.1} parent=11 // pred_check
          %p123 = pneg %p67
        $region18: #{tpu_custom_call.1} parent=11 // pred_check_branch
          %125 = sbr.rel (%p123) target = $region20
        $region19: #{tpu_custom_call.1} parent=11 // pred_region
          _
        $region20: #{tpu_custom_call.1} parent=11 // pred_fallthru
          _
      $region12: #{tpu_custom_call.1} parent=5 // pred_fallthru
        _
      %p126 = scmp.lt.s32.totalorder %s13, 4
      // Predicated region
      $region21: #{tpu_custom_call.1} parent=5 // pred_check
        %p127 = pneg %p126
      $region22: #{tpu_custom_call.1} parent=5 // pred_check_branch
        %129 = sbr.rel (%p127) target = $region24
      $region23: #{tpu_custom_call.1} parent=5 // pred_region
        _
      $region24: #{tpu_custom_call.1} parent=5 // pred_fallthru
        _
      %p130 = scmp.le.s32.totalorder 1, %s13
      %p131 = scmp.lt.s32.totalorder %s13, 5
      %p132 = pnand %p130, %p131
      %p133 = pneg %p132
      // Predicated region
      $region25: #{tpu_custom_call.1} parent=5 // pred_check
        _
      $region26: #{tpu_custom_call.1} parent=5 // pred_check_branch
        %135 = sbr.rel (%p132) target = $region28
      $region27: #{tpu_custom_call.1} parent=5 // pred_region
        %s136 = ssub.s32 %s13, 1
        // Predicated region
        $region29: #{tpu_custom_call.1} parent=27 // pred_check
          %p137 = pneg %p46
        $region30: #{tpu_custom_call.1} parent=27 // pred_check_branch
          %139 = sbr.rel (%p137) target = $region32
        $region31: #{tpu_custom_call.1} parent=27 // pred_region
          %140 = dma.done [#allocation5], 18432
        $region32: #{tpu_custom_call.1} parent=27 // pred_fallthru
          _
        %p141 = pneg %p46
        %p142 = pneg %p43
        %p143 = pneg %p67
        %p144 = pneg %p64
        %p145 = pneg %p95
        %p146 = pneg %p92
        %s147 = sand.u32 %s82, 1
        %s148 = scalar_lea.sflag [#allocation6], %s147
        %s149 = sand.u32 %s82, 1
        %s150 = smul.addr %s149, 192
        %s151 = scalar_lea.vmem [#allocation7], %s150
        %s152 = smul.u32 8, %s23
        %p153 = scmp.lt.s32.totalorder %s23, 0
        %s154 = ssub.s32 0, %s23
        %s155 = scalar_select %p153, %s154, %s23
        %s156 = sand.u32 %s155, 1
        %s157 = ssub.s32 0, %s156
        %s158 = scalar_select %p153, %s157, %s156
        %p159 = scmp.ne.s32.totalorder %s158, 0
        %p160 = scmp.lt.s32.totalorder %s158, 0
        %p161 = pnand %p160, %p159
        %p162 = pneg %p161
        %s163 = sadd.s32 %s158, 2
        %s164 = scalar_select %p162, %s163, %s158
        %p165 = scmp.eq.s32.totalorder %s23, 0
        // Predicated region
        $region33: #{tpu_custom_call.1} parent=27 // pred_check
          %p166 = pneg %p165
        $region34: #{tpu_custom_call.1} parent=27 // pred_check_branch
          %168 = sbr.rel (%p166) target = $region36
        $region35: #{tpu_custom_call.1} parent=27 // pred_region
          %169 = vst [vmem:[#allocation2 + $0xf0] sm:$0xff] 0.0
          %s170 = scalar_lea.vmem [#allocation2], 248
          %171 = vst [vmem:[%s170 + $0xf0] sm:$0xff] 0.0
          %s172 = smul.u32 %s22, 432
          %s173 = smul.addr %s172, 16
          %s174 = scalar_lea.hbm %s0, %s173
          // Predicated region
          $region37: #{tpu_custom_call.1} parent=35 // pred_check
            _
          $region38: #{tpu_custom_call.1} parent=35 // pred_check_branch
            %176 = sbr.rel target = $region40
          $region39: #{tpu_custom_call.1} parent=35 // pred_region
            %177 = sst [smem:[#allocation10]] [#allocation9]
            %178 = sst [smem:[#allocation11]] [#allocation8]
          $region40: #{tpu_custom_call.1} parent=35 // pred_fallthru
            _
          %180 = shalt.err (0)
          %s182 = sshll.u32 [#allocation2], 4
          %s183 = int_to_ptr.vmem [resolvable:$true] %s182
          %185 = dma.hbm_to_vmem [thread:$0]  %s174, 3840, %s183, [#allocation3]
        $region36: #{tpu_custom_call.1} parent=27 // pred_fallthru
          _
        %s186 = smul.u32 %s164, 248
        %s187 = scalar_lea.vmem [#allocation2], %s186
        %s188 = scalar_lea.sflag [#allocation3], %s164
        %s189 = smul.u32 240, 1
        %s190 = sshll.u32 %s189, 4
        %191 = dma.done %s188, %s190
        %s192 = sadd.s32 %s23, 1
        %p193 = scmp.lt.s32.totalorder %s192, 2
        // Predicated region
        $region41: #{tpu_custom_call.1} parent=27 // pred_check
          %p194 = pneg %p193
        $region42: #{tpu_custom_call.1} parent=27 // pred_check_branch
          %196 = sbr.rel (%p194) target = $region44
        $region43: #{tpu_custom_call.1} parent=27 // pred_region
          %s197 = ssub.s32 1, %s164
          %s198 = smul.u32 %s192, 192
          %s199 = smul.u32 %s22, 432
          %s200 = sadd.s32 %s198, %s199
          %s201 = smul.addr %s200, 16
          %s202 = scalar_lea.hbm %s0, %s201
          %s203 = smul.u32 %s197, 248
          %s204 = scalar_lea.vmem [#allocation2], %s203
          %s205 = scalar_lea.sflag [#allocation3], %s197
          // Predicated region
          $region45: #{tpu_custom_call.1} parent=43 // pred_check
            _
          $region46: #{tpu_custom_call.1} parent=43 // pred_check_branch
            %207 = sbr.rel target = $region48
          $region47: #{tpu_custom_call.1} parent=43 // pred_region
            %208 = sst [smem:[#allocation10]] [#allocation13]
            %209 = sst [smem:[#allocation11]] [#allocation12]
          $region48: #{tpu_custom_call.1} parent=43 // pred_fallthru
            _
          %211 = shalt.err (0)
          %s213 = sshll.u32 %s204, 4
          %s214 = int_to_ptr.vmem [resolvable:$true] %s213
          %216 = dma.hbm_to_vmem [thread:$0]  %s202, 3840, %s214, %s205
        $region44: #{tpu_custom_call.1} parent=27 // pred_fallthru
          _
        %v217 = vld [vmem:[%s187] sm:$0xff]
        %v218 = vld [vmem:[%s187 + $0x8] sm:$0xff]
        %v219 = vld [vmem:[%s187 + $0x10] sm:$0xff]
        %v220 = vld [vmem:[%s187 + $0x18] sm:$0xff]
        %v221 = vld [vmem:[%s187 + $0x20] sm:$0xff]
        %v222 = vld [vmem:[%s187 + $0x28] sm:$0xff]
        %v223 = vld [vmem:[%s187 + $0x30] sm:$0xff]
        %v224 = vld [vmem:[%s187 + $0x38] sm:$0xff]
        %v225 = vld [vmem:[%s187 + $0x40] sm:$0xff]
        %v226 = vld [vmem:[%s187 + $0x48] sm:$0xff]
        %v227 = vld [vmem:[%s187 + $0x50] sm:$0xff]
        %v228 = vld [vmem:[%s187 + $0x58] sm:$0xff]
        %v229 = vld [vmem:[%s187 + $0x60] sm:$0xff]
        %v230 = vld [vmem:[%s187 + $0x68] sm:$0xff]
        %v231 = vld [vmem:[%s187 + $0x70] sm:$0xff]
        %v232 = vld [vmem:[%s187 + $0x78] sm:$0xff]
        %v233 = vld [vmem:[%s187 + $0x80] sm:$0xff]
        %v234 = vld [vmem:[%s187 + $0x88] sm:$0xff]
        %v235 = vld [vmem:[%s187 + $0x90] sm:$0xff]
        %v236 = vld [vmem:[%s187 + $0x98] sm:$0xff]
        %v237 = vld [vmem:[%s187 + $0xa0] sm:$0xff]
        %v238 = vld [vmem:[%s187 + $0xa8] sm:$0xff]
        %v239 = vld [vmem:[%s187 + $0xb0] sm:$0xff]
        %v240 = vld [vmem:[%s187 + $0xb8] sm:$0xff]
        %v241 = vld [vmem:[#allocation4] sm:$0xff]
        %v242 = vld [vmem:[#allocation4 + $0x8] sm:$0xff]
        %v243 = vld [vmem:[#allocation4 + $0x10] sm:$0xff]
        %v244 = vld [vmem:[#allocation4 + $0x18] sm:$0xff]
        %v245 = vld [vmem:[#allocation4 + $0x20] sm:$0xff]
        %v246 = vld [vmem:[#allocation4 + $0x28] sm:$0xff]
        %v247 = vld [vmem:[#allocation4 + $0x30] sm:$0xff]
        %v248 = vld [vmem:[#allocation4 + $0x38] sm:$0xff]
        %v249 = vld [vmem:[#allocation4 + $0x40] sm:$0xff]
        %v250 = vld [vmem:[#allocation4 + $0x48] sm:$0xff]
        %v251 = vld [vmem:[#allocation4 + $0x50] sm:$0xff]
        %v252 = vld [vmem:[#allocation4 + $0x58] sm:$0xff]
        %v253 = vld [vmem:[#allocation4 + $0x60] sm:$0xff]
        %v254 = vld [vmem:[#allocation4 + $0x68] sm:$0xff]
        %v255 = vld [vmem:[#allocation4 + $0x70] sm:$0xff]
        %v256 = vld [vmem:[#allocation4 + $0x78] sm:$0xff]
        %v257 = vld [vmem:[%s187 + $0x1] sm:$0xff]
        %v258 = vld [vmem:[%s187 + $0x9] sm:$0xff]
        %v259 = vld [vmem:[%s187 + $0x11] sm:$0xff]
        %v260 = vld [vmem:[%s187 + $0x19] sm:$0xff]
        %v261 = vld [vmem:[%s187 + $0x21] sm:$0xff]
        %v262 = vld [vmem:[%s187 + $0x29] sm:$0xff]
        %v263 = vld [vmem:[%s187 + $0x31] sm:$0xff]
        %v264 = vld [vmem:[%s187 + $0x39] sm:$0xff]
        %v265 = vld [vmem:[%s187 + $0x41] sm:$0xff]
        %v266 = vld [vmem:[%s187 + $0x49] sm:$0xff]
        %v267 = vld [vmem:[%s187 + $0x51] sm:$0xff]
        %v268 = vld [vmem:[%s187 + $0x59] sm:$0xff]
        %v269 = vld [vmem:[%s187 + $0x61] sm:$0xff]
        %v270 = vld [vmem:[%s187 + $0x69] sm:$0xff]
        %v271 = vld [vmem:[%s187 + $0x71] sm:$0xff]
        %v272 = vld [vmem:[%s187 + $0x79] sm:$0xff]
        %v273 = vld [vmem:[%s187 + $0x81] sm:$0xff]
        %v274 = vld [vmem:[%s187 + $0x89] sm:$0xff]
        %v275 = vld [vmem:[%s187 + $0x91] sm:$0xff]
        %v276 = vld [vmem:[%s187 + $0x99] sm:$0xff]
        %v277 = vld [vmem:[%s187 + $0xa1] sm:$0xff]
        %v278 = vld [vmem:[%s187 + $0xa9] sm:$0xff]
        %v279 = vld [vmem:[%s187 + $0xb1] sm:$0xff]
        %v280 = vld [vmem:[%s187 + $0xb9] sm:$0xff]
        %s281 = scalar_lea.vmem [#allocation4], 128
        %v282 = vld [vmem:[%s281] sm:$0xff]
        %v283 = vld [vmem:[%s281 + $0x8] sm:$0xff]
        %v284 = vld [vmem:[%s281 + $0x10] sm:$0xff]
        %v285 = vld [vmem:[%s281 + $0x18] sm:$0xff]
        %v286 = vld [vmem:[%s281 + $0x20] sm:$0xff]
        %v287 = vld [vmem:[%s281 + $0x28] sm:$0xff]
        %v288 = vld [vmem:[%s281 + $0x30] sm:$0xff]
        %v289 = vld [vmem:[%s281 + $0x38] sm:$0xff]
        %v290 = vld [vmem:[%s281 + $0x40] sm:$0xff]
        %v291 = vld [vmem:[%s281 + $0x48] sm:$0xff]
        %v292 = vld [vmem:[%s281 + $0x50] sm:$0xff]
        %v293 = vld [vmem:[%s281 + $0x58] sm:$0xff]
        %v294 = vld [vmem:[%s281 + $0x60] sm:$0xff]
        %v295 = vld [vmem:[%s281 + $0x68] sm:$0xff]
        %v296 = vld [vmem:[%s281 + $0x70] sm:$0xff]
        %v297 = vld [vmem:[%s281 + $0x78] sm:$0xff]
        %298 = vmatprep.subr.mxu0 0.0
        %299 = vmatpush1.msra.mxu0 %v282
        %300 = vmatprep.subr.mxu0 0.0
        %301 = vmatpush1.msra.mxu0 %v283
        %302 = vmatprep.subr.mxu0 0.0
        %303 = vmatpush1.msra.mxu0 %v284
        %304 = vmatprep.subr.mxu0 0.0
        %305 = vmatpush1.msra.mxu0 %v285
        %306 = vmatprep.subr.mxu0 0.0
        %307 = vmatpush1.msra.mxu0 %v286
        %308 = vmatprep.subr.mxu0 0.0
        %309 = vmatpush1.msra.mxu0 %v287
        %310 = vmatprep.subr.mxu0 0.0
        %311 = vmatpush1.msra.mxu0 %v288
        %312 = vmatprep.subr.mxu0 0.0
        %313 = vmatpush1.msra.mxu0 %v289
        %314 = vmatprep.subr.mxu0 0.0
        %315 = vmatpush1.msra.mxu0 %v290
        %316 = vmatprep.subr.mxu0 0.0
        %317 = vmatpush1.msra.mxu0 %v291
        %318 = vmatprep.subr.mxu0 0.0
        %319 = vmatpush1.msra.mxu0 %v292
        %320 = vmatprep.subr.mxu0 0.0
        %321 = vmatpush1.msra.mxu0 %v293
        %322 = vmatprep.subr.mxu0 0.0
        %323 = vmatpush1.msra.mxu0 %v294
        %324 = vmatprep.subr.mxu0 0.0
        %325 = vmatpush1.msra.mxu0 %v295
        %326 = vmatprep.subr.mxu0 0.0
        %327 = vmatpush1.msra.mxu0 %v296
        %328 = vmatprep.subr.mxu0 0.0
        %329 = vmatpush1.msra.mxu0 %v297
        %330 = vmatprep.subr.mxu0 0.0
        %331 = vmatpush1.msra.mxu0 0.0
        %332 = vmatprep.subr.mxu0 0.0
        %333 = vmatpush1.msra.mxu0 0.0
        %334 = vmatprep.subr.mxu0 0.0
        %335 = vmatpush1.msra.mxu0 0.0
        %336 = vmatprep.subr.mxu0 0.0
        %337 = vmatpush1.msra.mxu0 0.0
        %338 = vmatprep.subr.mxu0 0.0
        %339 = vmatpush1.msra.mxu0 0.0
        %340 = vmatprep.subr.mxu0 0.0
        %341 = vmatpush1.msra.mxu0 0.0
        %342 = vmatprep.subr.mxu0 0.0
        %343 = vmatpush1.msra.mxu0 0.0
        %344 = vmatprep.subr.mxu0 0.0
        %345 = vmatpush1.msra.mxu0 0.0
        %346 = vmatprep.subr.mxu0 0.0
        %347 = vmatpush1.msra.mxu0 0.0
        %348 = vmatprep.subr.mxu0 0.0
        %349 = vmatpush1.msra.mxu0 0.0
        %350 = vmatprep.subr.mxu0 0.0
        %351 = vmatpush1.msra.mxu0 0.0
        %352 = vmatprep.subr.mxu0 0.0
        %353 = vmatpush1.msra.mxu0 0.0
        %354 = vmatprep.subr.mxu0 0.0
        %355 = vmatpush1.msra.mxu0 0.0
        %356 = vmatprep.subr.mxu0 0.0
        %357 = vmatpush1.msra.mxu0 0.0
        %358 = vmatprep.subr.mxu0 0.0
        %359 = vmatpush1.msra.mxu0 0.0
        %360 = vmatprep.subr.mxu0 0.0
        %361 = vmatpush1.msra.mxu0 0.0
        %362 = vmatprep.mubr.f32.mxu0 0.0
        %363 = vmatmul.mubr.f32.gmra.mrb[0].mxu0 %v257
        %v364 = vpop.f32.mrb[0].mxu0
        %v365 = vadd.f32 0.0, %v364
        %v366 = vpop.f32.mrb[0].mxu0
        %367 = vmatprep.mubr.f32.mxu0 0.0
        %368 = vmatmul.mubr.f32.gmra.mrb[0].mxu0 %v258
        %v369 = vpop.f32.mrb[0].mxu0
        %v370 = vadd.f32 0.0, %v369
        %v371 = vpop.f32.mrb[0].mxu0
        %372 = vmatprep.mubr.f32.mxu0 0.0
        %373 = vmatmul.mubr.f32.gmra.mrb[0].mxu0 %v259
        %v374 = vpop.f32.mrb[0].mxu0
        %v375 = vadd.f32 0.0, %v374
        %v376 = vpop.f32.mrb[0].mxu0
        %377 = vmatprep.mubr.f32.mxu0 0.0
        %378 = vmatmul.mubr.f32.gmra.mrb[0].mxu0 %v260
        %v379 = vpop.f32.mrb[0].mxu0
        %v380 = vadd.f32 0.0, %v379
        %v381 = vpop.f32.mrb[0].mxu0
        %382 = vmatprep.mubr.f32.mxu0 0.0
        %383 = vmatmul.mubr.f32.gmra.mrb[0].mxu0 %v261
        %v384 = vpop.f32.mrb[0].mxu0
        %v385 = vadd.f32 0.0, %v384
        %v386 = vpop.f32.mrb[0].mxu0
        %387 = vmatprep.mubr.f32.mxu0 0.0
        %388 = vmatmul.mubr.f32.gmra.mrb[0].mxu0 %v262
        %v389 = vpop.f32.mrb[0].mxu0
        %v390 = vadd.f32 0.0, %v389
        %v391 = vpop.f32.mrb[0].mxu0
        %392 = vmatprep.mubr.f32.mxu0 0.0
        %393 = vmatmul.mubr.f32.gmra.mrb[0].mxu0 %v263
        %v394 = vpop.f32.mrb[0].mxu0
        %v395 = vadd.f32 0.0, %v394
        %v396 = vpop.f32.mrb[0].mxu0
        %397 = vmatprep.mubr.f32.mxu0 0.0
        %398 = vmatmul.mubr.f32.gmra.mrb[0].mxu0 %v264
        %v399 = vpop.f32.mrb[0].mxu0
        %v400 = vadd.f32 0.0, %v399
        %v401 = vpop.f32.mrb[0].mxu0
        %402 = vmatprep.mubr.f32.mxu0 0.0
        %403 = vmatmul.mubr.f32.gmra.mrb[0].mxu0 %v265
        %v404 = vpop.f32.mrb[0].mxu0
        %v405 = vadd.f32 0.0, %v404
        %v406 = vpop.f32.mrb[0].mxu0
        %407 = vmatprep.mubr.f32.mxu0 0.0
        %408 = vmatmul.mubr.f32.gmra.mrb[0].mxu0 %v266
        %v409 = vpop.f32.mrb[0].mxu0
        %v410 = vadd.f32 0.0, %v409
        %v411 = vpop.f32.mrb[0].mxu0
        %412 = vmatprep.mubr.f32.mxu0 0.0
        %413 = vmatmul.mubr.f32.gmra.mrb[0].mxu0 %v267
        %v414 = vpop.f32.mrb[0].mxu0
        %v415 = vadd.f32 0.0, %v414
        %v416 = vpop.f32.mrb[0].mxu0
        %417 = vmatprep.mubr.f32.mxu0 0.0
        %418 = vmatmul.mubr.f32.gmra.mrb[0].mxu0 %v268
        %v419 = vpop.f32.mrb[0].mxu0
        %v420 = vadd.f32 0.0, %v419
        %v421 = vpop.f32.mrb[0].mxu0
        %422 = vmatprep.mubr.f32.mxu0 0.0
        %423 = vmatmul.mubr.f32.gmra.mrb[0].mxu0 %v269
        %v424 = vpop.f32.mrb[0].mxu0
        %v425 = vadd.f32 0.0, %v424
        %v426 = vpop.f32.mrb[0].mxu0
        %427 = vmatprep.mubr.f32.mxu0 0.0
        %428 = vmatmul.mubr.f32.gmra.mrb[0].mxu0 %v270
        %v429 = vpop.f32.mrb[0].mxu0
        %v430 = vadd.f32 0.0, %v429
        %v431 = vpop.f32.mrb[0].mxu0
        %432 = vmatprep.mubr.f32.mxu0 0.0
        %433 = vmatmul.mubr.f32.gmra.mrb[0].mxu0 %v271
        %v434 = vpop.f32.mrb[0].mxu0
        %v435 = vadd.f32 0.0, %v434
        %v436 = vpop.f32.mrb[0].mxu0
        %437 = vmatprep.mubr.f32.mxu0 0.0
        %438 = vmatmul.mubr.f32.gmra.mrb[0].mxu0 %v272
        %v439 = vpop.f32.mrb[0].mxu0
        %v440 = vadd.f32 0.0, %v439
        %v441 = vpop.f32.mrb[0].mxu0
        %442 = vmatprep.mubr.f32.mxu0 0.0
        %443 = vmatmul.mubr.f32.gmra.mrb[0].mxu0 %v273
        %v444 = vpop.f32.mrb[0].mxu0
        %v445 = vadd.f32 0.0, %v444
        %v446 = vpop.f32.mrb[0].mxu0
        %447 = vmatprep.mubr.f32.mxu0 0.0
        %448 = vmatmul.mubr.f32.gmra.mrb[0].mxu0 %v274
        %v449 = vpop.f32.mrb[0].mxu0
        %v450 = vadd.f32 0.0, %v449
        %v451 = vpop.f32.mrb[0].mxu0
        %452 = vmatprep.mubr.f32.mxu0 0.0
        %453 = vmatmul.mubr.f32.gmra.mrb[0].mxu0 %v275
        %v454 = vpop.f32.mrb[0].mxu0
        %v455 = vadd.f32 0.0, %v454
        %v456 = vpop.f32.mrb[0].mxu0
        %457 = vmatprep.mubr.f32.mxu0 0.0
        %458 = vmatmul.mubr.f32.gmra.mrb[0].mxu0 %v276
        %v459 = vpop.f32.mrb[0].mxu0
        %v460 = vadd.f32 0.0, %v459
        %v461 = vpop.f32.mrb[0].mxu0
        %462 = vmatprep.mubr.f32.mxu0 0.0
        %463 = vmatmul.mubr.f32.gmra.mrb[0].mxu0 %v277
        %v464 = vpop.f32.mrb[0].mxu0
        %v465 = vadd.f32 0.0, %v464
        %v466 = vpop.f32.mrb[0].mxu0
        %467 = vmatprep.mubr.f32.mxu0 0.0
        %468 = vmatmul.mubr.f32.gmra.mrb[0].mxu0 %v278
        %v469 = vpop.f32.mrb[0].mxu0
        %v470 = vadd.f32 0.0, %v469
        %v471 = vpop.f32.mrb[0].mxu0
        %472 = vmatprep.mubr.f32.mxu0 0.0
        %473 = vmatmul.mubr.f32.gmra.mrb[0].mxu0 %v279
        %v474 = vpop.f32.mrb[0].mxu0
        %v475 = vadd.f32 0.0, %v474
        %v476 = vpop.f32.mrb[0].mxu0
        %477 = vmatprep.mubr.f32.mxu0 0.0
        %478 = vmatmul.mubr.f32.gmra.mrb[0].mxu0 %v280
        %v479 = vpop.f32.mrb[0].mxu0
        %v480 = vadd.f32 0.0, %v479
        %v481 = vpop.f32.mrb[0].mxu0
        %482 = vdwg.mxu0
        %483 = vmatprep.subr.mxu0 0.0
        %484 = vmatpush1.msra.mxu0 %v241
        %485 = vmatprep.subr.mxu0 0.0
        %486 = vmatpush1.msra.mxu0 %v242
        %487 = vmatprep.subr.mxu0 0.0
        %488 = vmatpush1.msra.mxu0 %v243
        %489 = vmatprep.subr.mxu0 0.0
        %490 = vmatpush1.msra.mxu0 %v244
        %491 = vmatprep.subr.mxu0 0.0
        %492 = vmatpush1.msra.mxu0 %v245
        %493 = vmatprep.subr.mxu0 0.0
        %494 = vmatpush1.msra.mxu0 %v246
        %495 = vmatprep.subr.mxu0 0.0
        %496 = vmatpush1.msra.mxu0 %v247
        %497 = vmatprep.subr.mxu0 0.0
        %498 = vmatpush1.msra.mxu0 %v248
        %499 = vmatprep.subr.mxu0 0.0
        %500 = vmatpush1.msra.mxu0 %v249
        %501 = vmatprep.subr.mxu0 0.0
        %502 = vmatpush1.msra.mxu0 %v250
        %503 = vmatprep.subr.mxu0 0.0
        %504 = vmatpush1.msra.mxu0 %v251
        %505 = vmatprep.subr.mxu0 0.0
        %506 = vmatpush1.msra.mxu0 %v252
        %507 = vmatprep.subr.mxu0 0.0
        %508 = vmatpush1.msra.mxu0 %v253
        %509 = vmatprep.subr.mxu0 0.0
        %510 = vmatpush1.msra.mxu0 %v254
        %511 = vmatprep.subr.mxu0 0.0
        %512 = vmatpush1.msra.mxu0 %v255
        %513 = vmatprep.subr.mxu0 0.0
        %514 = vmatpush1.msra.mxu0 %v256
        %515 = vmatprep.subr.mxu0 0.0
        %516 = vmatpush1.msra.mxu0 0.0
        %517 = vmatprep.subr.mxu0 0.0
        %518 = vmatpush1.msra.mxu0 0.0
        %519 = vmatprep.subr.mxu0 0.0
        %520 = vmatpush1.msra.mxu0 0.0
        %521 = vmatprep.subr.mxu0 0.0
        %522 = vmatpush1.msra.mxu0 0.0
        %523 = vmatprep.subr.mxu0 0.0
        %524 = vmatpush1.msra.mxu0 0.0
        %525 = vmatprep.subr.mxu0 0.0
        %526 = vmatpush1.msra.mxu0 0.0
        %527 = vmatprep.subr.mxu0 0.0
        %528 = vmatpush1.msra.mxu0 0.0
        %529 = vmatprep.subr.mxu0 0.0
        %530 = vmatpush1.msra.mxu0 0.0
        %531 = vmatprep.subr.mxu0 0.0
        %532 = vmatpush1.msra.mxu0 0.0
        %533 = vmatprep.subr.mxu0 0.0
        %534 = vmatpush1.msra.mxu0 0.0
        %535 = vmatprep.subr.mxu0 0.0
        %536 = vmatpush1.msra.mxu0 0.0
        %537 = vmatprep.subr.mxu0 0.0
        %538 = vmatpush1.msra.mxu0 0.0
        %539 = vmatprep.subr.mxu0 0.0
        %540 = vmatpush1.msra.mxu0 0.0
        %541 = vmatprep.subr.mxu0 0.0
        %542 = vmatpush1.msra.mxu0 0.0
        %543 = vmatprep.subr.mxu0 0.0
        %544 = vmatpush1.msra.mxu0 0.0
        %545 = vmatprep.subr.mxu0 0.0
        %546 = vmatpush1.msra.mxu0 0.0
        %547 = vmatprep.mubr.f32.mxu0 0.0
        %548 = vmatmul.mubr.f32.gmra.mrb[0].mxu0 %v217
        %v549 = vpop.f32.mrb[0].mxu0
        %v550 = vadd.f32 %v365, %v549
        %v551 = vpop.f32.mrb[0].mxu0
        %552 = vmatprep.mubr.f32.mxu0 0.0
        %553 = vmatmul.mubr.f32.gmra.mrb[0].mxu0 %v218
        %v554 = vpop.f32.mrb[0].mxu0
        %v555 = vadd.f32 %v370, %v554
        %v556 = vpop.f32.mrb[0].mxu0
        %557 = vmatprep.mubr.f32.mxu0 0.0
        %558 = vmatmul.mubr.f32.gmra.mrb[0].mxu0 %v219
        %v559 = vpop.f32.mrb[0].mxu0
        %v560 = vadd.f32 %v375, %v559
        %v561 = vpop.f32.mrb[0].mxu0
        %562 = vmatprep.mubr.f32.mxu0 0.0
        %563 = vmatmul.mubr.f32.gmra.mrb[0].mxu0 %v220
        %v564 = vpop.f32.mrb[0].mxu0
        %v565 = vadd.f32 %v380, %v564
        %v566 = vpop.f32.mrb[0].mxu0
        %567 = vmatprep.mubr.f32.mxu0 0.0
        %568 = vmatmul.mubr.f32.gmra.mrb[0].mxu0 %v221
        %v569 = vpop.f32.mrb[0].mxu0
        %v570 = vadd.f32 %v385, %v569
        %v571 = vpop.f32.mrb[0].mxu0
        %572 = vmatprep.mubr.f32.mxu0 0.0
        %573 = vmatmul.mubr.f32.gmra.mrb[0].mxu0 %v222
        %v574 = vpop.f32.mrb[0].mxu0
        %v575 = vadd.f32 %v390, %v574
        %v576 = vpop.f32.mrb[0].mxu0
        %577 = vmatprep.mubr.f32.mxu0 0.0
        %578 = vmatmul.mubr.f32.gmra.mrb[0].mxu0 %v223
        %v579 = vpop.f32.mrb[0].mxu0
        %v580 = vadd.f32 %v395, %v579
        %v581 = vpop.f32.mrb[0].mxu0
        %582 = vmatprep.mubr.f32.mxu0 0.0
        %583 = vmatmul.mubr.f32.gmra.mrb[0].mxu0 %v224
        %v584 = vpop.f32.mrb[0].mxu0
        %v585 = vadd.f32 %v400, %v584
        %v586 = vpop.f32.mrb[0].mxu0
        %587 = vmatprep.mubr.f32.mxu0 0.0
        %588 = vmatmul.mubr.f32.gmra.mrb[0].mxu0 %v225
        %v589 = vpop.f32.mrb[0].mxu0
        %v590 = vadd.f32 %v405, %v589
        %v591 = vpop.f32.mrb[0].mxu0
        %592 = vmatprep.mubr.f32.mxu0 0.0
        %593 = vmatmul.mubr.f32.gmra.mrb[0].mxu0 %v226
        %v594 = vpop.f32.mrb[0].mxu0
        %v595 = vadd.f32 %v410, %v594
        %v596 = vpop.f32.mrb[0].mxu0
        %597 = vmatprep.mubr.f32.mxu0 0.0
        %598 = vmatmul.mubr.f32.gmra.mrb[0].mxu0 %v227
        %v599 = vpop.f32.mrb[0].mxu0
        %v600 = vadd.f32 %v415, %v599
        %v601 = vpop.f32.mrb[0].mxu0
        %602 = vmatprep.mubr.f32.mxu0 0.0
        %603 = vmatmul.mubr.f32.gmra.mrb[0].mxu0 %v228
        %v604 = vpop.f32.mrb[0].mxu0
        %v605 = vadd.f32 %v420, %v604
        %v606 = vpop.f32.mrb[0].mxu0
        %607 = vmatprep.mubr.f32.mxu0 0.0
        %608 = vmatmul.mubr.f32.gmra.mrb[0].mxu0 %v229
        %v609 = vpop.f32.mrb[0].mxu0
        %v610 = vadd.f32 %v425, %v609
        %v611 = vpop.f32.mrb[0].mxu0
        %612 = vmatprep.mubr.f32.mxu0 0.0
        %613 = vmatmul.mubr.f32.gmra.mrb[0].mxu0 %v230
        %v614 = vpop.f32.mrb[0].mxu0
        %v615 = vadd.f32 %v430, %v614
        %v616 = vpop.f32.mrb[0].mxu0
        %617 = vmatprep.mubr.f32.mxu0 0.0
        %618 = vmatmul.mubr.f32.gmra.mrb[0].mxu0 %v231
        %v619 = vpop.f32.mrb[0].mxu0
        %v620 = vadd.f32 %v435, %v619
        %v621 = vpop.f32.mrb[0].mxu0
        %622 = vmatprep.mubr.f32.mxu0 0.0
        %623 = vmatmul.mubr.f32.gmra.mrb[0].mxu0 %v232
        %v624 = vpop.f32.mrb[0].mxu0
        %v625 = vadd.f32 %v440, %v624
        %v626 = vpop.f32.mrb[0].mxu0
        %627 = vmatprep.mubr.f32.mxu0 0.0
        %628 = vmatmul.mubr.f32.gmra.mrb[0].mxu0 %v233
        %v629 = vpop.f32.mrb[0].mxu0
        %v630 = vadd.f32 %v445, %v629
        %v631 = vpop.f32.mrb[0].mxu0
        %632 = vmatprep.mubr.f32.mxu0 0.0
        %633 = vmatmul.mubr.f32.gmra.mrb[0].mxu0 %v234
        %v634 = vpop.f32.mrb[0].mxu0
        %v635 = vadd.f32 %v450, %v634
        %v636 = vpop.f32.mrb[0].mxu0
        %637 = vmatprep.mubr.f32.mxu0 0.0
        %638 = vmatmul.mubr.f32.gmra.mrb[0].mxu0 %v235
        %v639 = vpop.f32.mrb[0].mxu0
        %v640 = vadd.f32 %v455, %v639
        %v641 = vpop.f32.mrb[0].mxu0
        %642 = vmatprep.mubr.f32.mxu0 0.0
        %643 = vmatmul.mubr.f32.gmra.mrb[0].mxu0 %v236
        %v644 = vpop.f32.mrb[0].mxu0
        %v645 = vadd.f32 %v460, %v644
        %v646 = vpop.f32.mrb[0].mxu0
        %647 = vmatprep.mubr.f32.mxu0 0.0
        %648 = vmatmul.mubr.f32.gmra.mrb[0].mxu0 %v237
        %v649 = vpop.f32.mrb[0].mxu0
        %v650 = vadd.f32 %v465, %v649
        %v651 = vpop.f32.mrb[0].mxu0
        %652 = vmatprep.mubr.f32.mxu0 0.0
        %653 = vmatmul.mubr.f32.gmra.mrb[0].mxu0 %v238
        %v654 = vpop.f32.mrb[0].mxu0
        %v655 = vadd.f32 %v470, %v654
        %v656 = vpop.f32.mrb[0].mxu0
        %657 = vmatprep.mubr.f32.mxu0 0.0
        %658 = vmatmul.mubr.f32.gmra.mrb[0].mxu0 %v239
        %v659 = vpop.f32.mrb[0].mxu0
        %v660 = vadd.f32 %v475, %v659
        %v661 = vpop.f32.mrb[0].mxu0
        %662 = vmatprep.mubr.f32.mxu0 0.0
        %663 = vmatmul.mubr.f32.gmra.mrb[0].mxu0 %v240
        %v664 = vpop.f32.mrb[0].mxu0
        %v665 = vadd.f32 %v480, %v664
        %v666 = vpop.f32.mrb[0].mxu0
        %667 = vdwg.mxu0
        %v668 = vld [vmem:[%s187 + $0x2] sm:$0xff]
        %v669 = vld [vmem:[%s187 + $0xa] sm:$0xff]
        %v670 = vld [vmem:[%s187 + $0x12] sm:$0xff]
        %v671 = vld [vmem:[%s187 + $0x1a] sm:$0xff]
        %v672 = vld [vmem:[%s187 + $0x22] sm:$0xff]
        %v673 = vld [vmem:[%s187 + $0x2a] sm:$0xff]
        %v674 = vld [vmem:[%s187 + $0x32] sm:$0xff]
        %v675 = vld [vmem:[%s187 + $0x3a] sm:$0xff]
        %v676 = vld [vmem:[%s187 + $0x42] sm:$0xff]
        %v677 = vld [vmem:[%s187 + $0x4a] sm:$0xff]
        %v678 = vld [vmem:[%s187 + $0x52] sm:$0xff]
        %v679 = vld [vmem:[%s187 + $0x5a] sm:$0xff]
        %v680 = vld [vmem:[%s187 + $0x62] sm:$0xff]
        %v681 = vld [vmem:[%s187 + $0x6a] sm:$0xff]
        %v682 = vld [vmem:[%s187 + $0x72] sm:$0xff]
        %v683 = vld [vmem:[%s187 + $0x7a] sm:$0xff]
        %v684 = vld [vmem:[%s187 + $0x82] sm:$0xff]
        %v685 = vld [vmem:[%s187 + $0x8a] sm:$0xff]
        %v686 = vld [vmem:[%s187 + $0x92] sm:$0xff]
        %v687 = vld [vmem:[%s187 + $0x9a] sm:$0xff]
        %v688 = vld [vmem:[%s187 + $0xa2] sm:$0xff]
        %v689 = vld [vmem:[%s187 + $0xaa] sm:$0xff]
        %v690 = vld [vmem:[%s187 + $0xb2] sm:$0xff]
        %v691 = vld [vmem:[%s187 + $0xba] sm:$0xff]
        %s692 = scalar_lea.vmem [#allocation4], 256
        %v693 = vld [vmem:[%s692] sm:$0xff]
        %v694 = vld [vmem:[%s692 + $0x8] sm:$0xff]
        %v695 = vld [vmem:[%s692 + $0x10] sm:$0xff]
        %v696 = vld [vmem:[%s692 + $0x18] sm:$0xff]
        %v697 = vld [vmem:[%s692 + $0x20] sm:$0xff]
        %v698 = vld [vmem:[%s692 + $0x28] sm:$0xff]
        %v699 = vld [vmem:[%s692 + $0x30] sm:$0xff]
        %v700 = vld [vmem:[%s692 + $0x38] sm:$0xff]
        %v701 = vld [vmem:[%s692 + $0x40] sm:$0xff]
        %v702 = vld [vmem:[%s692 + $0x48] sm:$0xff]
        %v703 = vld [vmem:[%s692 + $0x50] sm:$0xff]
        %v704 = vld [vmem:[%s692 + $0x58] sm:$0xff]
        %v705 = vld [vmem:[%s692 + $0x60] sm:$0xff]
        %v706 = vld [vmem:[%s692 + $0x68] sm:$0xff]
        %v707 = vld [vmem:[%s692 + $0x70] sm:$0xff]
        %v708 = vld [vmem:[%s692 + $0x78] sm:$0xff]
        %709 = vmatprep.subr.mxu0 0.0
        %710 = vmatpush1.msra.mxu0 %v693
        %711 = vmatprep.subr.mxu0 0.0
        %712 = vmatpush1.msra.mxu0 %v694
        %713 = vmatprep.subr.mxu0 0.0
        %714 = vmatpush1.msra.mxu0 %v695
        %715 = vmatprep.subr.mxu0 0.0
        %716 = vmatpush1.msra.mxu0 %v696
        %717 = vmatprep.subr.mxu0 0.0
        %718 = vmatpush1.msra.mxu0 %v697
        %719 = vmatprep.subr.mxu0 0.0
        %720 = vmatpush1.msra.mxu0 %v698
        %721 = vmatprep.subr.mxu0 0.0
        %722 = vmatpush1.msra.mxu0 %v699
        %723 = vmatprep.subr.mxu0 0.0
        %724 = vmatpush1.msra.mxu0 %v700
        %725 = vmatprep.subr.mxu0 0.0
        %726 = vmatpush1.msra.mxu0 %v701
        %727 = vmatprep.subr.mxu0 0.0
        %728 = vmatpush1.msra.mxu0 %v702
        %729 = vmatprep.subr.mxu0 0.0
        %730 = vmatpush1.msra.mxu0 %v703
        %731 = vmatprep.subr.mxu0 0.0
        %732 = vmatpush1.msra.mxu0 %v704
        %733 = vmatprep.subr.mxu0 0.0
        %734 = vmatpush1.msra.mxu0 %v705
        %735 = vmatprep.subr.mxu0 0.0
        %736 = vmatpush1.msra.mxu0 %v706
        %737 = vmatprep.subr.mxu0 0.0
        %738 = vmatpush1.msra.mxu0 %v707
        %739 = vmatprep.subr.mxu0 0.0
        %740 = vmatpush1.msra.mxu0 %v708
        %741 = vmatprep.subr.mxu0 0.0
        %742 = vmatpush1.msra.mxu0 0.0
        %743 = vmatprep.subr.mxu0 0.0
        %744 = vmatpush1.msra.mxu0 0.0
        %745 = vmatprep.subr.mxu0 0.0
        %746 = vmatpush1.msra.mxu0 0.0
        %747 = vmatprep.subr.mxu0 0.0
        %748 = vmatpush1.msra.mxu0 0.0
        %749 = vmatprep.subr.mxu0 0.0
        %750 = vmatpush1.msra.mxu0 0.0
        %751 = vmatprep.subr.mxu0 0.0
        %752 = vmatpush1.msra.mxu0 0.0
        %753 = vmatprep.subr.mxu0 0.0
        %754 = vmatpush1.msra.mxu0 0.0
        %755 = vmatprep.subr.mxu0 0.0
        %756 = vmatpush1.msra.mxu0 0.0
        %757 = vmatprep.subr.mxu0 0.0
        %758 = vmatpush1.msra.mxu0 0.0
        %759 = vmatprep.subr.mxu0 0.0
        %760 = vmatpush1.msra.mxu0 0.0
        %761 = vmatprep.subr.mxu0 0.0
        %762 = vmatpush1.msra.mxu0 0.0
        %763 = vmatprep.subr.mxu0 0.0
        %764 = vmatpush1.msra.mxu0 0.0
        %765 = vmatprep.subr.mxu0 0.0
        %766 = vmatpush1.msra.mxu0 0.0
        %767 = vmatprep.subr.mxu0 0.0
        %768 = vmatpush1.msra.mxu0 0.0
        %769 = vmatprep.subr.mxu0 0.0
        %770 = vmatpush1.msra.mxu0 0.0
        %771 = vmatprep.subr.mxu0 0.0
        %772 = vmatpush1.msra.mxu0 0.0
        %773 = vmatprep.mubr.f32.mxu0 0.0
        %774 = vmatmul.mubr.f32.gmra.mrb[0].mxu0 %v668
        %v775 = vpop.f32.mrb[0].mxu0
        %v776 = vadd.f32 0.0, %v775
        %v777 = vpop.f32.mrb[0].mxu0
        %778 = vmatprep.mubr.f32.mxu0 0.0
        %779 = vmatmul.mubr.f32.gmra.mrb[0].mxu0 %v669
        %v780 = vpop.f32.mrb[0].mxu0
        %v781 = vadd.f32 0.0, %v780
        %v782 = vpop.f32.mrb[0].mxu0
        %783 = vmatprep.mubr.f32.mxu0 0.0
        %784 = vmatmul.mubr.f32.gmra.mrb[0].mxu0 %v670
        %v785 = vpop.f32.mrb[0].mxu0
        %v786 = vadd.f32 0.0, %v785
        %v787 = vpop.f32.mrb[0].mxu0
        %788 = vmatprep.mubr.f32.mxu0 0.0
        %789 = vmatmul.mubr.f32.gmra.mrb[0].mxu0 %v671
        %v790 = vpop.f32.mrb[0].mxu0
        %v791 = vadd.f32 0.0, %v790
        %v792 = vpop.f32.mrb[0].mxu0
        %793 = vmatprep.mubr.f32.mxu0 0.0
        %794 = vmatmul.mubr.f32.gmra.mrb[0].mxu0 %v672
        %v795 = vpop.f32.mrb[0].mxu0
        %v796 = vadd.f32 0.0, %v795
        %v797 = vpop.f32.mrb[0].mxu0
        %798 = vmatprep.mubr.f32.mxu0 0.0
        %799 = vmatmul.mubr.f32.gmra.mrb[0].mxu0 %v673
        %v800 = vpop.f32.mrb[0].mxu0
        %v801 = vadd.f32 0.0, %v800
        %v802 = vpop.f32.mrb[0].mxu0
        %803 = vmatprep.mubr.f32.mxu0 0.0
        %804 = vmatmul.mubr.f32.gmra.mrb[0].mxu0 %v674
        %v805 = vpop.f32.mrb[0].mxu0
        %v806 = vadd.f32 0.0, %v805
        %v807 = vpop.f32.mrb[0].mxu0
        %808 = vmatprep.mubr.f32.mxu0 0.0
        %809 = vmatmul.mubr.f32.gmra.mrb[0].mxu0 %v675
        %v810 = vpop.f32.mrb[0].mxu0
        %v811 = vadd.f32 0.0, %v810
        %v812 = vpop.f32.mrb[0].mxu0
        %813 = vmatprep.mubr.f32.mxu0 0.0
        %814 = vmatmul.mubr.f32.gmra.mrb[0].mxu0 %v676
        %v815 = vpop.f32.mrb[0].mxu0
        %v816 = vadd.f32 0.0, %v815
        %v817 = vpop.f32.mrb[0].mxu0
        %818 = vmatprep.mubr.f32.mxu0 0.0
        %819 = vmatmul.mubr.f32.gmra.mrb[0].mxu0 %v677
        %v820 = vpop.f32.mrb[0].mxu0
        %v821 = vadd.f32 0.0, %v820
        %v822 = vpop.f32.mrb[0].mxu0
        %823 = vmatprep.mubr.f32.mxu0 0.0
        %824 = vmatmul.mubr.f32.gmra.mrb[0].mxu0 %v678
        %v825 = vpop.f32.mrb[0].mxu0
        %v826 = vadd.f32 0.0, %v825
        %v827 = vpop.f32.mrb[0].mxu0
        %828 = vmatprep.mubr.f32.mxu0 0.0
        %829 = vmatmul.mubr.f32.gmra.mrb[0].mxu0 %v679
        %v830 = vpop.f32.mrb[0].mxu0
        %v831 = vadd.f32 0.0, %v830
        %v832 = vpop.f32.mrb[0].mxu0
        %833 = vmatprep.mubr.f32.mxu0 0.0
        %834 = vmatmul.mubr.f32.gmra.mrb[0].mxu0 %v680
        %v835 = vpop.f32.mrb[0].mxu0
        %v836 = vadd.f32 0.0, %v835
        %v837 = vpop.f32.mrb[0].mxu0
        %838 = vmatprep.mubr.f32.mxu0 0.0
        %839 = vmatmul.mubr.f32.gmra.mrb[0].mxu0 %v681
        %v840 = vpop.f32.mrb[0].mxu0
        %v841 = vadd.f32 0.0, %v840
        %v842 = vpop.f32.mrb[0].mxu0
        %843 = vmatprep.mubr.f32.mxu0 0.0
        %844 = vmatmul.mubr.f32.gmra.mrb[0].mxu0 %v682
        %v845 = vpop.f32.mrb[0].mxu0
        %v846 = vadd.f32 0.0, %v845
        %v847 = vpop.f32.mrb[0].mxu0
        %848 = vmatprep.mubr.f32.mxu0 0.0
        %849 = vmatmul.mubr.f32.gmra.mrb[0].mxu0 %v683
        %v850 = vpop.f32.mrb[0].mxu0
        %v851 = vadd.f32 0.0, %v850
        %v852 = vpop.f32.mrb[0].mxu0
        %853 = vmatprep.mubr.f32.mxu0 0.0
        %854 = vmatmul.mubr.f32.gmra.mrb[0].mxu0 %v684
        %v855 = vpop.f32.mrb[0].mxu0
        %v856 = vadd.f32 0.0, %v855
        %v857 = vpop.f32.mrb[0].mxu0
        %858 = vmatprep.mubr.f32.mxu0 0.0
        %859 = vmatmul.mubr.f32.gmra.mrb[0].mxu0 %v685
        %v860 = vpop.f32.mrb[0].mxu0
        %v861 = vadd.f32 0.0, %v860
        %v862 = vpop.f32.mrb[0].mxu0
        %863 = vmatprep.mubr.f32.mxu0 0.0
        %864 = vmatmul.mubr.f32.gmra.mrb[0].mxu0 %v686
        %v865 = vpop.f32.mrb[0].mxu0
        %v866 = vadd.f32 0.0, %v865
        %v867 = vpop.f32.mrb[0].mxu0
        %868 = vmatprep.mubr.f32.mxu0 0.0
        %869 = vmatmul.mubr.f32.gmra.mrb[0].mxu0 %v687
        %v870 = vpop.f32.mrb[0].mxu0
        %v871 = vadd.f32 0.0, %v870
        %v872 = vpop.f32.mrb[0].mxu0
        %873 = vmatprep.mubr.f32.mxu0 0.0
        %874 = vmatmul.mubr.f32.gmra.mrb[0].mxu0 %v688
        %v875 = vpop.f32.mrb[0].mxu0
        %v876 = vadd.f32 0.0, %v875
        %v877 = vpop.f32.mrb[0].mxu0
        %878 = vmatprep.mubr.f32.mxu0 0.0
        %879 = vmatmul.mubr.f32.gmra.mrb[0].mxu0 %v689
        %v880 = vpop.f32.mrb[0].mxu0
        %v881 = vadd.f32 0.0, %v880
        %v882 = vpop.f32.mrb[0].mxu0
        %883 = vmatprep.mubr.f32.mxu0 0.0
        %884 = vmatmul.mubr.f32.gmra.mrb[0].mxu0 %v690
        %v885 = vpop.f32.mrb[0].mxu0
        %v886 = vadd.f32 0.0, %v885
        %v887 = vpop.f32.mrb[0].mxu0
        %888 = vmatprep.mubr.f32.mxu0 0.0
        %889 = vmatmul.mubr.f32.gmra.mrb[0].mxu0 %v691
        %v890 = vpop.f32.mrb[0].mxu0
        %v891 = vadd.f32 0.0, %v890
        %v892 = vpop.f32.mrb[0].mxu0
        %893 = vdwg.mxu0
        %v894 = vadd.f32 %v550, %v776
        %v895 = vadd.f32 %v555, %v781
        %v896 = vadd.f32 %v560, %v786
        %v897 = vadd.f32 %v565, %v791
        %v898 = vadd.f32 %v570, %v796
        %v899 = vadd.f32 %v575, %v801
        %v900 = vadd.f32 %v580, %v806
        %v901 = vadd.f32 %v585, %v811
        %v902 = vadd.f32 %v590, %v816
        %v903 = vadd.f32 %v595, %v821
        %v904 = vadd.f32 %v600, %v826
        %v905 = vadd.f32 %v605, %v831
        %v906 = vadd.f32 %v610, %v836
        %v907 = vadd.f32 %v615, %v841
        %v908 = vadd.f32 %v620, %v846
        %v909 = vadd.f32 %v625, %v851
        %v910 = vadd.f32 %v630, %v856
        %v911 = vadd.f32 %v635, %v861
        %v912 = vadd.f32 %v640, %v866
        %v913 = vadd.f32 %v645, %v871
        %v914 = vadd.f32 %v650, %v876
        %v915 = vadd.f32 %v655, %v881
        %v916 = vadd.f32 %v660, %v886
        %v917 = vadd.f32 %v665, %v891
        %v918 = vld [vmem:[%s187 + $0x18] sm:$0xff]
        %v919 = vld [vmem:[%s187 + $0x20] sm:$0xff]
        %v920 = vld [vmem:[%s187 + $0x28] sm:$0xff]
        %v921 = vld [vmem:[%s187 + $0x30] sm:$0xff]
        %v922 = vld [vmem:[%s187 + $0x38] sm:$0xff]
        %v923 = vld [vmem:[%s187 + $0x40] sm:$0xff]
        %v924 = vld [vmem:[%s187 + $0x48] sm:$0xff]
        %v925 = vld [vmem:[%s187 + $0x50] sm:$0xff]
        %v926 = vld [vmem:[%s187 + $0x58] sm:$0xff]
        %v927 = vld [vmem:[%s187 + $0x60] sm:$0xff]
        %v928 = vld [vmem:[%s187 + $0x68] sm:$0xff]
        %v929 = vld [vmem:[%s187 + $0x70] sm:$0xff]
        %v930 = vld [vmem:[%s187 + $0x78] sm:$0xff]
        %v931 = vld [vmem:[%s187 + $0x80] sm:$0xff]
        %v932 = vld [vmem:[%s187 + $0x88] sm:$0xff]
        %v933 = vld [vmem:[%s187 + $0x90] sm:$0xff]
        %v934 = vld [vmem:[%s187 + $0x98] sm:$0xff]
        %v935 = vld [vmem:[%s187 + $0xa0] sm:$0xff]
        %v936 = vld [vmem:[%s187 + $0xa8] sm:$0xff]
        %v937 = vld [vmem:[%s187 + $0xb0] sm:$0xff]
        %v938 = vld [vmem:[%s187 + $0xb8] sm:$0xff]
        %v939 = vld [vmem:[%s187 + $0xc0] sm:$0xff]
        %v940 = vld [vmem:[%s187 + $0xc8] sm:$0xff]
        %v941 = vld [vmem:[%s187 + $0xd0] sm:$0xff]
        %s942 = scalar_lea.vmem [#allocation4], 384
        %v943 = vld [vmem:[%s942] sm:$0xff]
        %v944 = vld [vmem:[%s942 + $0x8] sm:$0xff]
        %v945 = vld [vmem:[%s942 + $0x10] sm:$0xff]
        %v946 = vld [vmem:[%s942 + $0x18] sm:$0xff]
        %v947 = vld [vmem:[%s942 + $0x20] sm:$0xff]
        %v948 = vld [vmem:[%s942 + $0x28] sm:$0xff]
        %v949 = vld [vmem:[%s942 + $0x30] sm:$0xff]
        %v950 = vld [vmem:[%s942 + $0x38] sm:$0xff]
        %v951 = vld [vmem:[%s942 + $0x40] sm:$0xff]
        %v952 = vld [vmem:[%s942 + $0x48] sm:$0xff]
        %v953 = vld [vmem:[%s942 + $0x50] sm:$0xff]
        %v954 = vld [vmem:[%s942 + $0x58] sm:$0xff]
        %v955 = vld [vmem:[%s942 + $0x60] sm:$0xff]
        %v956 = vld [vmem:[%s942 + $0x68] sm:$0xff]
        %v957 = vld [vmem:[%s942 + $0x70] sm:$0xff]
        %v958 = vld [vmem:[%s942 + $0x78] sm:$0xff]
        %959 = vmatprep.subr.mxu0 0.0
        %960 = vmatpush1.msra.mxu0 %v943
        %961 = vmatprep.subr.mxu0 0.0
        %962 = vmatpush1.msra.mxu0 %v944
        %963 = vmatprep.subr.mxu0 0.0
        %964 = vmatpush1.msra.mxu0 %v945
        %965 = vmatprep.subr.mxu0 0.0
        %966 = vmatpush1.msra.mxu0 %v946
        %967 = vmatprep.subr.mxu0 0.0
        %968 = vmatpush1.msra.mxu0 %v947
        %969 = vmatprep.subr.mxu0 0.0
        %970 = vmatpush1.msra.mxu0 %v948
        %971 = vmatprep.subr.mxu0 0.0
        %972 = vmatpush1.msra.mxu0 %v949
        %973 = vmatprep.subr.mxu0 0.0
        %974 = vmatpush1.msra.mxu0 %v950
        %975 = vmatprep.subr.mxu0 0.0
        %976 = vmatpush1.msra.mxu0 %v951
        %977 = vmatprep.subr.mxu0 0.0
        %978 = vmatpush1.msra.mxu0 %v952
        %979 = vmatprep.subr.mxu0 0.0
        %980 = vmatpush1.msra.mxu0 %v953
        %981 = vmatprep.subr.mxu0 0.0
        %982 = vmatpush1.msra.mxu0 %v954
        %983 = vmatprep.subr.mxu0 0.0
        %984 = vmatpush1.msra.mxu0 %v955
        %985 = vmatprep.subr.mxu0 0.0
        %986 = vmatpush1.msra.mxu0 %v956
        %987 = vmatprep.subr.mxu0 0.0
        %988 = vmatpush1.msra.mxu0 %v957
        %989 = vmatprep.subr.mxu0 0.0
        %990 = vmatpush1.msra.mxu0 %v958
        %991 = vmatprep.subr.mxu0 0.0
        %992 = vmatpush1.msra.mxu0 0.0
        %993 = vmatprep.subr.mxu0 0.0
        %994 = vmatpush1.msra.mxu0 0.0
        %995 = vmatprep.subr.mxu0 0.0
        %996 = vmatpush1.msra.mxu0 0.0
        %997 = vmatprep.subr.mxu0 0.0
        %998 = vmatpush1.msra.mxu0 0.0
        %999 = vmatprep.subr.mxu0 0.0
        %1000 = vmatpush1.msra.mxu0 0.0
        %1001 = vmatprep.subr.mxu0 0.0
        %1002 = vmatpush1.msra.mxu0 0.0
        %1003 = vmatprep.subr.mxu0 0.0
        %1004 = vmatpush1.msra.mxu0 0.0
        %1005 = vmatprep.subr.mxu0 0.0
        %1006 = vmatpush1.msra.mxu0 0.0
        %1007 = vmatprep.subr.mxu0 0.0
        %1008 = vmatpush1.msra.mxu0 0.0
        %1009 = vmatprep.subr.mxu0 0.0
        %1010 = vmatpush1.msra.mxu0 0.0
        %1011 = vmatprep.subr.mxu0 0.0
        %1012 = vmatpush1.msra.mxu0 0.0
        %1013 = vmatprep.subr.mxu0 0.0
        %1014 = vmatpush1.msra.mxu0 0.0
        %1015 = vmatprep.subr.mxu0 0.0
        %1016 = vmatpush1.msra.mxu0 0.0
        %1017 = vmatprep.subr.mxu0 0.0
        %1018 = vmatpush1.msra.mxu0 0.0
        %1019 = vmatprep.subr.mxu0 0.0
        %1020 = vmatpush1.msra.mxu0 0.0
        %1021 = vmatprep.subr.mxu0 0.0
        %1022 = vmatpush1.msra.mxu0 0.0
        %1023 = vmatprep.mubr.f32.mxu0 0.0
        %1024 = vmatmul.mubr.f32.gmra.mrb[0].mxu0 %v918
        %v1025 = vpop.f32.mrb[0].mxu0
        %v1026 = vadd.f32 0.0, %v1025
        %v1027 = vpop.f32.mrb[0].mxu0
        %1028 = vmatprep.mubr.f32.mxu0 0.0
        %1029 = vmatmul.mubr.f32.gmra.mrb[0].mxu0 %v919
        %v1030 = vpop.f32.mrb[0].mxu0
        %v1031 = vadd.f32 0.0, %v1030
        %v1032 = vpop.f32.mrb[0].mxu0
        %1033 = vmatprep.mubr.f32.mxu0 0.0
        %1034 = vmatmul.mubr.f32.gmra.mrb[0].mxu0 %v920
        %v1035 = vpop.f32.mrb[0].mxu0
        %v1036 = vadd.f32 0.0, %v1035
        %v1037 = vpop.f32.mrb[0].mxu0
        %1038 = vmatprep.mubr.f32.mxu0 0.0
        %1039 = vmatmul.mubr.f32.gmra.mrb[0].mxu0 %v921
        %v1040 = vpop.f32.mrb[0].mxu0
        %v1041 = vadd.f32 0.0, %v1040
        %v1042 = vpop.f32.mrb[0].mxu0
        %1043 = vmatprep.mubr.f32.mxu0 0.0
        %1044 = vmatmul.mubr.f32.gmra.mrb[0].mxu0 %v922
        %v1045 = vpop.f32.mrb[0].mxu0
        %v1046 = vadd.f32 0.0, %v1045
        %v1047 = vpop.f32.mrb[0].mxu0
        %1048 = vmatprep.mubr.f32.mxu0 0.0
        %1049 = vmatmul.mubr.f32.gmra.mrb[0].mxu0 %v923
        %v1050 = vpop.f32.mrb[0].mxu0
        %v1051 = vadd.f32 0.0, %v1050
        %v1052 = vpop.f32.mrb[0].mxu0
        %1053 = vmatprep.mubr.f32.mxu0 0.0
        %1054 = vmatmul.mubr.f32.gmra.mrb[0].mxu0 %v924
        %v1055 = vpop.f32.mrb[0].mxu0
        %v1056 = vadd.f32 0.0, %v1055
        %v1057 = vpop.f32.mrb[0].mxu0
        %1058 = vmatprep.mubr.f32.mxu0 0.0
        %1059 = vmatmul.mubr.f32.gmra.mrb[0].mxu0 %v925
        %v1060 = vpop.f32.mrb[0].mxu0
        %v1061 = vadd.f32 0.0, %v1060
        %v1062 = vpop.f32.mrb[0].mxu0
        %1063 = vmatprep.mubr.f32.mxu0 0.0
        %1064 = vmatmul.mubr.f32.gmra.mrb[0].mxu0 %v926
        %v1065 = vpop.f32.mrb[0].mxu0
        %v1066 = vadd.f32 0.0, %v1065
        %v1067 = vpop.f32.mrb[0].mxu0
        %1068 = vmatprep.mubr.f32.mxu0 0.0
        %1069 = vmatmul.mubr.f32.gmra.mrb[0].mxu0 %v927
        %v1070 = vpop.f32.mrb[0].mxu0
        %v1071 = vadd.f32 0.0, %v1070
        %v1072 = vpop.f32.mrb[0].mxu0
        %1073 = vmatprep.mubr.f32.mxu0 0.0
        %1074 = vmatmul.mubr.f32.gmra.mrb[0].mxu0 %v928
        %v1075 = vpop.f32.mrb[0].mxu0
        %v1076 = vadd.f32 0.0, %v1075
        %v1077 = vpop.f32.mrb[0].mxu0
        %1078 = vmatprep.mubr.f32.mxu0 0.0
        %1079 = vmatmul.mubr.f32.gmra.mrb[0].mxu0 %v929
        %v1080 = vpop.f32.mrb[0].mxu0
        %v1081 = vadd.f32 0.0, %v1080
        %v1082 = vpop.f32.mrb[0].mxu0
        %1083 = vmatprep.mubr.f32.mxu0 0.0
        %1084 = vmatmul.mubr.f32.gmra.mrb[0].mxu0 %v930
        %v1085 = vpop.f32.mrb[0].mxu0
        %v1086 = vadd.f32 0.0, %v1085
        %v1087 = vpop.f32.mrb[0].mxu0
        %1088 = vmatprep.mubr.f32.mxu0 0.0
        %1089 = vmatmul.mubr.f32.gmra.mrb[0].mxu0 %v931
        %v1090 = vpop.f32.mrb[0].mxu0
        %v1091 = vadd.f32 0.0, %v1090
        %v1092 = vpop.f32.mrb[0].mxu0
        %1093 = vmatprep.mubr.f32.mxu0 0.0
        %1094 = vmatmul.mubr.f32.gmra.mrb[0].mxu0 %v932
        %v1095 = vpop.f32.mrb[0].mxu0
        %v1096 = vadd.f32 0.0, %v1095
        %v1097 = vpop.f32.mrb[0].mxu0
        %1098 = vmatprep.mubr.f32.mxu0 0.0
        %1099 = vmatmul.mubr.f32.gmra.mrb[0].mxu0 %v933
        %v1100 = vpop.f32.mrb[0].mxu0
        %v1101 = vadd.f32 0.0, %v1100
        %v1102 = vpop.f32.mrb[0].mxu0
        %1103 = vmatprep.mubr.f32.mxu0 0.0
        %1104 = vmatmul.mubr.f32.gmra.mrb[0].mxu0 %v934
        %v1105 = vpop.f32.mrb[0].mxu0
        %v1106 = vadd.f32 0.0, %v1105
        %v1107 = vpop.f32.mrb[0].mxu0
        %1108 = vmatprep.mubr.f32.mxu0 0.0
        %1109 = vmatmul.mubr.f32.gmra.mrb[0].mxu0 %v935
        %v1110 = vpop.f32.mrb[0].mxu0
        %v1111 = vadd.f32 0.0, %v1110
        %v1112 = vpop.f32.mrb[0].mxu0
        %1113 = vmatprep.mubr.f32.mxu0 0.0
        %1114 = vmatmul.mubr.f32.gmra.mrb[0].mxu0 %v936
        %v1115 = vpop.f32.mrb[0].mxu0
        %v1116 = vadd.f32 0.0, %v1115
        %v1117 = vpop.f32.mrb[0].mxu0
        %1118 = vmatprep.mubr.f32.mxu0 0.0
        %1119 = vmatmul.mubr.f32.gmra.mrb[0].mxu0 %v937
        %v1120 = vpop.f32.mrb[0].mxu0
        %v1121 = vadd.f32 0.0, %v1120
        %v1122 = vpop.f32.mrb[0].mxu0
        %1123 = vmatprep.mubr.f32.mxu0 0.0
        %1124 = vmatmul.mubr.f32.gmra.mrb[0].mxu0 %v938
        %v1125 = vpop.f32.mrb[0].mxu0
        %v1126 = vadd.f32 0.0, %v1125
        %v1127 = vpop.f32.mrb[0].mxu0
        %1128 = vmatprep.mubr.f32.mxu0 0.0
        %1129 = vmatmul.mubr.f32.gmra.mrb[0].mxu0 %v939
        %v1130 = vpop.f32.mrb[0].mxu0
        %v1131 = vadd.f32 0.0, %v1130
        %v1132 = vpop.f32.mrb[0].mxu0
        %1133 = vmatprep.mubr.f32.mxu0 0.0
        %1134 = vmatmul.mubr.f32.gmra.mrb[0].mxu0 %v940
        %v1135 = vpop.f32.mrb[0].mxu0
        %v1136 = vadd.f32 0.0, %v1135
        %v1137 = vpop.f32.mrb[0].mxu0
        %1138 = vmatprep.mubr.f32.mxu0 0.0
        %1139 = vmatmul.mubr.f32.gmra.mrb[0].mxu0 %v941
        %v1140 = vpop.f32.mrb[0].mxu0
        %v1141 = vadd.f32 0.0, %v1140
        %v1142 = vpop.f32.mrb[0].mxu0
        %1143 = vdwg.mxu0
        %v1144 = vadd.f32 %v894, %v1026
        %v1145 = vadd.f32 %v895, %v1031
        %v1146 = vadd.f32 %v896, %v1036
        %v1147 = vadd.f32 %v897, %v1041
        %v1148 = vadd.f32 %v898, %v1046
        %v1149 = vadd.f32 %v899, %v1051
        %v1150 = vadd.f32 %v900, %v1056
        %v1151 = vadd.f32 %v901, %v1061
        %v1152 = vadd.f32 %v902, %v1066
        %v1153 = vadd.f32 %v903, %v1071
        %v1154 = vadd.f32 %v904, %v1076
        %v1155 = vadd.f32 %v905, %v1081
        %v1156 = vadd.f32 %v906, %v1086
        %v1157 = vadd.f32 %v907, %v1091
        %v1158 = vadd.f32 %v908, %v1096
        %v1159 = vadd.f32 %v909, %v1101
        %v1160 = vadd.f32 %v910, %v1106
        %v1161 = vadd.f32 %v911, %v1111
        %v1162 = vadd.f32 %v912, %v1116
        %v1163 = vadd.f32 %v913, %v1121
        %v1164 = vadd.f32 %v914, %v1126
        %v1165 = vadd.f32 %v915, %v1131
        %v1166 = vadd.f32 %v916, %v1136
        %v1167 = vadd.f32 %v917, %v1141
        %v1168 = vld [vmem:[%s187 + $0x19] sm:$0xff]
        %v1169 = vld [vmem:[%s187 + $0x21] sm:$0xff]
        %v1170 = vld [vmem:[%s187 + $0x29] sm:$0xff]
        %v1171 = vld [vmem:[%s187 + $0x31] sm:$0xff]
        %v1172 = vld [vmem:[%s187 + $0x39] sm:$0xff]
        %v1173 = vld [vmem:[%s187 + $0x41] sm:$0xff]
        %v1174 = vld [vmem:[%s187 + $0x49] sm:$0xff]
        %v1175 = vld [vmem:[%s187 + $0x51] sm:$0xff]
        %v1176 = vld [vmem:[%s187 + $0x59] sm:$0xff]
        %v1177 = vld [vmem:[%s187 + $0x61] sm:$0xff]
        %v1178 = vld [vmem:[%s187 + $0x69] sm:$0xff]
        %v1179 = vld [vmem:[%s187 + $0x71] sm:$0xff]
        %v1180 = vld [vmem:[%s187 + $0x79] sm:$0xff]
        %v1181 = vld [vmem:[%s187 + $0x81] sm:$0xff]
        %v1182 = vld [vmem:[%s187 + $0x89] sm:$0xff]
        %v1183 = vld [vmem:[%s187 + $0x91] sm:$0xff]
        %v1184 = vld [vmem:[%s187 + $0x99] sm:$0xff]
        %v1185 = vld [vmem:[%s187 + $0xa1] sm:$0xff]
        %v1186 = vld [vmem:[%s187 + $0xa9] sm:$0xff]
        %v1187 = vld [vmem:[%s187 + $0xb1] sm:$0xff]
        %v1188 = vld [vmem:[%s187 + $0xb9] sm:$0xff]
        %v1189 = vld [vmem:[%s187 + $0xc1] sm:$0xff]
        %v1190 = vld [vmem:[%s187 + $0xc9] sm:$0xff]
        %v1191 = vld [vmem:[%s187 + $0xd1] sm:$0xff]
        %s1192 = scalar_lea.vmem [#allocation4], 512
        %v1193 = vld [vmem:[%s1192] sm:$0xff]
        %v1194 = vld [vmem:[%s1192 + $0x8] sm:$0xff]
        %v1195 = vld [vmem:[%s1192 + $0x10] sm:$0xff]
        %v1196 = vld [vmem:[%s1192 + $0x18] sm:$0xff]
        %v1197 = vld [vmem:[%s1192 + $0x20] sm:$0xff]
        %v1198 = vld [vmem:[%s1192 + $0x28] sm:$0xff]
        %v1199 = vld [vmem:[%s1192 + $0x30] sm:$0xff]
        %v1200 = vld [vmem:[%s1192 + $0x38] sm:$0xff]
        %v1201 = vld [vmem:[%s1192 + $0x40] sm:$0xff]
        %v1202 = vld [vmem:[%s1192 + $0x48] sm:$0xff]
        %v1203 = vld [vmem:[%s1192 + $0x50] sm:$0xff]
        %v1204 = vld [vmem:[%s1192 + $0x58] sm:$0xff]
        %v1205 = vld [vmem:[%s1192 + $0x60] sm:$0xff]
        %v1206 = vld [vmem:[%s1192 + $0x68] sm:$0xff]
        %v1207 = vld [vmem:[%s1192 + $0x70] sm:$0xff]
        %v1208 = vld [vmem:[%s1192 + $0x78] sm:$0xff]
        %1209 = vmatprep.subr.mxu0 0.0
        %1210 = vmatpush1.msra.mxu0 %v1193
        %1211 = vmatprep.subr.mxu0 0.0
        %1212 = vmatpush1.msra.mxu0 %v1194
        %1213 = vmatprep.subr.mxu0 0.0
        %1214 = vmatpush1.msra.mxu0 %v1195
        %1215 = vmatprep.subr.mxu0 0.0
        %1216 = vmatpush1.msra.mxu0 %v1196
        %1217 = vmatprep.subr.mxu0 0.0
        %1218 = vmatpush1.msra.mxu0 %v1197
        %1219 = vmatprep.subr.mxu0 0.0
        %1220 = vmatpush1.msra.mxu0 %v1198
        %1221 = vmatprep.subr.mxu0 0.0
        %1222 = vmatpush1.msra.mxu0 %v1199
        %1223 = vmatprep.subr.mxu0 0.0
        %1224 = vmatpush1.msra.mxu0 %v1200
        %1225 = vmatprep.subr.mxu0 0.0
        %1226 = vmatpush1.msra.mxu0 %v1201
        %1227 = vmatprep.subr.mxu0 0.0
        %1228 = vmatpush1.msra.mxu0 %v1202
        %1229 = vmatprep.subr.mxu0 0.0
        %1230 = vmatpush1.msra.mxu0 %v1203
        %1231 = vmatprep.subr.mxu0 0.0
        %1232 = vmatpush1.msra.mxu0 %v1204
        %1233 = vmatprep.subr.mxu0 0.0
        %1234 = vmatpush1.msra.mxu0 %v1205
        %1235 = vmatprep.subr.mxu0 0.0
        %1236 = vmatpush1.msra.mxu0 %v1206
        %1237 = vmatprep.subr.mxu0 0.0
        %1238 = vmatpush1.msra.mxu0 %v1207
        %1239 = vmatprep.subr.mxu0 0.0
        %1240 = vmatpush1.msra.mxu0 %v1208
        %1241 = vmatprep.subr.mxu0 0.0
        %1242 = vmatpush1.msra.mxu0 0.0
        %1243 = vmatprep.subr.mxu0 0.0
        %1244 = vmatpush1.msra.mxu0 0.0
        %1245 = vmatprep.subr.mxu0 0.0
        %1246 = vmatpush1.msra.mxu0 0.0
        %1247 = vmatprep.subr.mxu0 0.0
        %1248 = vmatpush1.msra.mxu0 0.0
        %1249 = vmatprep.subr.mxu0 0.0
        %1250 = vmatpush1.msra.mxu0 0.0
        %1251 = vmatprep.subr.mxu0 0.0
        %1252 = vmatpush1.msra.mxu0 0.0
        %1253 = vmatprep.subr.mxu0 0.0
        %1254 = vmatpush1.msra.mxu0 0.0
        %1255 = vmatprep.subr.mxu0 0.0
        %1256 = vmatpush1.msra.mxu0 0.0
        %1257 = vmatprep.subr.mxu0 0.0
        %1258 = vmatpush1.msra.mxu0 0.0
        %1259 = vmatprep.subr.mxu0 0.0
        %1260 = vmatpush1.msra.mxu0 0.0
        %1261 = vmatprep.subr.mxu0 0.0
        %1262 = vmatpush1.msra.mxu0 0.0
        %1263 = vmatprep.subr.mxu0 0.0
        %1264 = vmatpush1.msra.mxu0 0.0
        %1265 = vmatprep.subr.mxu0 0.0
        %1266 = vmatpush1.msra.mxu0 0.0
        %1267 = vmatprep.subr.mxu0 0.0
        %1268 = vmatpush1.msra.mxu0 0.0
        %1269 = vmatprep.subr.mxu0 0.0
        %1270 = vmatpush1.msra.mxu0 0.0
        %1271 = vmatprep.subr.mxu0 0.0
        %1272 = vmatpush1.msra.mxu0 0.0
        %1273 = vmatprep.mubr.f32.mxu0 0.0
        %1274 = vmatmul.mubr.f32.gmra.mrb[0].mxu0 %v1168
        %v1275 = vpop.f32.mrb[0].mxu0
        %v1276 = vadd.f32 0.0, %v1275
        %v1277 = vpop.f32.mrb[0].mxu0
        %1278 = vmatprep.mubr.f32.mxu0 0.0
        %1279 = vmatmul.mubr.f32.gmra.mrb[0].mxu0 %v1169
        %v1280 = vpop.f32.mrb[0].mxu0
        %v1281 = vadd.f32 0.0, %v1280
        %v1282 = vpop.f32.mrb[0].mxu0
        %1283 = vmatprep.mubr.f32.mxu0 0.0
        %1284 = vmatmul.mubr.f32.gmra.mrb[0].mxu0 %v1170
        %v1285 = vpop.f32.mrb[0].mxu0
        %v1286 = vadd.f32 0.0, %v1285
        %v1287 = vpop.f32.mrb[0].mxu0
        %1288 = vmatprep.mubr.f32.mxu0 0.0
        %1289 = vmatmul.mubr.f32.gmra.mrb[0].mxu0 %v1171
        %v1290 = vpop.f32.mrb[0].mxu0
        %v1291 = vadd.f32 0.0, %v1290
        %v1292 = vpop.f32.mrb[0].mxu0
        %1293 = vmatprep.mubr.f32.mxu0 0.0
        %1294 = vmatmul.mubr.f32.gmra.mrb[0].mxu0 %v1172
        %v1295 = vpop.f32.mrb[0].mxu0
        %v1296 = vadd.f32 0.0, %v1295
        %v1297 = vpop.f32.mrb[0].mxu0
        %1298 = vmatprep.mubr.f32.mxu0 0.0
        %1299 = vmatmul.mubr.f32.gmra.mrb[0].mxu0 %v1173
        %v1300 = vpop.f32.mrb[0].mxu0
        %v1301 = vadd.f32 0.0, %v1300
        %v1302 = vpop.f32.mrb[0].mxu0
        %1303 = vmatprep.mubr.f32.mxu0 0.0
        %1304 = vmatmul.mubr.f32.gmra.mrb[0].mxu0 %v1174
        %v1305 = vpop.f32.mrb[0].mxu0
        %v1306 = vadd.f32 0.0, %v1305
        %v1307 = vpop.f32.mrb[0].mxu0
        %1308 = vmatprep.mubr.f32.mxu0 0.0
        %1309 = vmatmul.mubr.f32.gmra.mrb[0].mxu0 %v1175
        %v1310 = vpop.f32.mrb[0].mxu0
        %v1311 = vadd.f32 0.0, %v1310
        %v1312 = vpop.f32.mrb[0].mxu0
        %1313 = vmatprep.mubr.f32.mxu0 0.0
        %1314 = vmatmul.mubr.f32.gmra.mrb[0].mxu0 %v1176
        %v1315 = vpop.f32.mrb[0].mxu0
        %v1316 = vadd.f32 0.0, %v1315
        %v1317 = vpop.f32.mrb[0].mxu0
        %1318 = vmatprep.mubr.f32.mxu0 0.0
        %1319 = vmatmul.mubr.f32.gmra.mrb[0].mxu0 %v1177
        %v1320 = vpop.f32.mrb[0].mxu0
        %v1321 = vadd.f32 0.0, %v1320
        %v1322 = vpop.f32.mrb[0].mxu0
        %1323 = vmatprep.mubr.f32.mxu0 0.0
        %1324 = vmatmul.mubr.f32.gmra.mrb[0].mxu0 %v1178
        %v1325 = vpop.f32.mrb[0].mxu0
        %v1326 = vadd.f32 0.0, %v1325
        %v1327 = vpop.f32.mrb[0].mxu0
        %1328 = vmatprep.mubr.f32.mxu0 0.0
        %1329 = vmatmul.mubr.f32.gmra.mrb[0].mxu0 %v1179
        %v1330 = vpop.f32.mrb[0].mxu0
        %v1331 = vadd.f32 0.0, %v1330
        %v1332 = vpop.f32.mrb[0].mxu0
        %1333 = vmatprep.mubr.f32.mxu0 0.0
        %1334 = vmatmul.mubr.f32.gmra.mrb[0].mxu0 %v1180
        %v1335 = vpop.f32.mrb[0].mxu0
        %v1336 = vadd.f32 0.0, %v1335
        %v1337 = vpop.f32.mrb[0].mxu0
        %1338 = vmatprep.mubr.f32.mxu0 0.0
        %1339 = vmatmul.mubr.f32.gmra.mrb[0].mxu0 %v1181
        %v1340 = vpop.f32.mrb[0].mxu0
        %v1341 = vadd.f32 0.0, %v1340
        %v1342 = vpop.f32.mrb[0].mxu0
        %1343 = vmatprep.mubr.f32.mxu0 0.0
        %1344 = vmatmul.mubr.f32.gmra.mrb[0].mxu0 %v1182
        %v1345 = vpop.f32.mrb[0].mxu0
        %v1346 = vadd.f32 0.0, %v1345
        %v1347 = vpop.f32.mrb[0].mxu0
        %1348 = vmatprep.mubr.f32.mxu0 0.0
        %1349 = vmatmul.mubr.f32.gmra.mrb[0].mxu0 %v1183
        %v1350 = vpop.f32.mrb[0].mxu0
        %v1351 = vadd.f32 0.0, %v1350
        %v1352 = vpop.f32.mrb[0].mxu0
        %1353 = vmatprep.mubr.f32.mxu0 0.0
        %1354 = vmatmul.mubr.f32.gmra.mrb[0].mxu0 %v1184
        %v1355 = vpop.f32.mrb[0].mxu0
        %v1356 = vadd.f32 0.0, %v1355
        %v1357 = vpop.f32.mrb[0].mxu0
        %1358 = vmatprep.mubr.f32.mxu0 0.0
        %1359 = vmatmul.mubr.f32.gmra.mrb[0].mxu0 %v1185
        %v1360 = vpop.f32.mrb[0].mxu0
        %v1361 = vadd.f32 0.0, %v1360
        %v1362 = vpop.f32.mrb[0].mxu0
        %1363 = vmatprep.mubr.f32.mxu0 0.0
        %1364 = vmatmul.mubr.f32.gmra.mrb[0].mxu0 %v1186
        %v1365 = vpop.f32.mrb[0].mxu0
        %v1366 = vadd.f32 0.0, %v1365
        %v1367 = vpop.f32.mrb[0].mxu0
        %1368 = vmatprep.mubr.f32.mxu0 0.0
        %1369 = vmatmul.mubr.f32.gmra.mrb[0].mxu0 %v1187
        %v1370 = vpop.f32.mrb[0].mxu0
        %v1371 = vadd.f32 0.0, %v1370
        %v1372 = vpop.f32.mrb[0].mxu0
        %1373 = vmatprep.mubr.f32.mxu0 0.0
        %1374 = vmatmul.mubr.f32.gmra.mrb[0].mxu0 %v1188
        %v1375 = vpop.f32.mrb[0].mxu0
        %v1376 = vadd.f32 0.0, %v1375
        %v1377 = vpop.f32.mrb[0].mxu0
        %1378 = vmatprep.mubr.f32.mxu0 0.0
        %1379 = vmatmul.mubr.f32.gmra.mrb[0].mxu0 %v1189
        %v1380 = vpop.f32.mrb[0].mxu0
        %v1381 = vadd.f32 0.0, %v1380
        %v1382 = vpop.f32.mrb[0].mxu0
        %1383 = vmatprep.mubr.f32.mxu0 0.0
        %1384 = vmatmul.mubr.f32.gmra.mrb[0].mxu0 %v1190
        %v1385 = vpop.f32.mrb[0].mxu0
        %v1386 = vadd.f32 0.0, %v1385
        %v1387 = vpop.f32.mrb[0].mxu0
        %1388 = vmatprep.mubr.f32.mxu0 0.0
        %1389 = vmatmul.mubr.f32.gmra.mrb[0].mxu0 %v1191
        %v1390 = vpop.f32.mrb[0].mxu0
        %v1391 = vadd.f32 0.0, %v1390
        %v1392 = vpop.f32.mrb[0].mxu0
        %1393 = vdwg.mxu0
        %v1394 = vadd.f32 %v1144, %v1276
        %v1395 = vadd.f32 %v1145, %v1281
        %v1396 = vadd.f32 %v1146, %v1286
        %v1397 = vadd.f32 %v1147, %v1291
        %v1398 = vadd.f32 %v1148, %v1296
        %v1399 = vadd.f32 %v1149, %v1301
        %v1400 = vadd.f32 %v1150, %v1306
        %v1401 = vadd.f32 %v1151, %v1311
        %v1402 = vadd.f32 %v1152, %v1316
        %v1403 = vadd.f32 %v1153, %v1321
        %v1404 = vadd.f32 %v1154, %v1326
        %v1405 = vadd.f32 %v1155, %v1331
        %v1406 = vadd.f32 %v1156, %v1336
        %v1407 = vadd.f32 %v1157, %v1341
        %v1408 = vadd.f32 %v1158, %v1346
        %v1409 = vadd.f32 %v1159, %v1351
        %v1410 = vadd.f32 %v1160, %v1356
        %v1411 = vadd.f32 %v1161, %v1361
        %v1412 = vadd.f32 %v1162, %v1366
        %v1413 = vadd.f32 %v1163, %v1371
        %v1414 = vadd.f32 %v1164, %v1376
        %v1415 = vadd.f32 %v1165, %v1381
        %v1416 = vadd.f32 %v1166, %v1386
        %v1417 = vadd.f32 %v1167, %v1391
        %v1418 = vld [vmem:[%s187 + $0x1a] sm:$0xff]
        %v1419 = vld [vmem:[%s187 + $0x22] sm:$0xff]
        %v1420 = vld [vmem:[%s187 + $0x2a] sm:$0xff]
        %v1421 = vld [vmem:[%s187 + $0x32] sm:$0xff]
        %v1422 = vld [vmem:[%s187 + $0x3a] sm:$0xff]
        %v1423 = vld [vmem:[%s187 + $0x42] sm:$0xff]
        %v1424 = vld [vmem:[%s187 + $0x4a] sm:$0xff]
        %v1425 = vld [vmem:[%s187 + $0x52] sm:$0xff]
        %v1426 = vld [vmem:[%s187 + $0x5a] sm:$0xff]
        %v1427 = vld [vmem:[%s187 + $0x62] sm:$0xff]
        %v1428 = vld [vmem:[%s187 + $0x6a] sm:$0xff]
        %v1429 = vld [vmem:[%s187 + $0x72] sm:$0xff]
        %v1430 = vld [vmem:[%s187 + $0x7a] sm:$0xff]
        %v1431 = vld [vmem:[%s187 + $0x82] sm:$0xff]
        %v1432 = vld [vmem:[%s187 + $0x8a] sm:$0xff]
        %v1433 = vld [vmem:[%s187 + $0x92] sm:$0xff]
        %v1434 = vld [vmem:[%s187 + $0x9a] sm:$0xff]
        %v1435 = vld [vmem:[%s187 + $0xa2] sm:$0xff]
        %v1436 = vld [vmem:[%s187 + $0xaa] sm:$0xff]
        %v1437 = vld [vmem:[%s187 + $0xb2] sm:$0xff]
        %v1438 = vld [vmem:[%s187 + $0xba] sm:$0xff]
        %v1439 = vld [vmem:[%s187 + $0xc2] sm:$0xff]
        %v1440 = vld [vmem:[%s187 + $0xca] sm:$0xff]
        %v1441 = vld [vmem:[%s187 + $0xd2] sm:$0xff]
        %s1442 = scalar_lea.vmem [#allocation4], 640
        %v1443 = vld [vmem:[%s1442] sm:$0xff]
        %v1444 = vld [vmem:[%s1442 + $0x8] sm:$0xff]
        %v1445 = vld [vmem:[%s1442 + $0x10] sm:$0xff]
        %v1446 = vld [vmem:[%s1442 + $0x18] sm:$0xff]
        %v1447 = vld [vmem:[%s1442 + $0x20] sm:$0xff]
        %v1448 = vld [vmem:[%s1442 + $0x28] sm:$0xff]
        %v1449 = vld [vmem:[%s1442 + $0x30] sm:$0xff]
        %v1450 = vld [vmem:[%s1442 + $0x38] sm:$0xff]
        %v1451 = vld [vmem:[%s1442 + $0x40] sm:$0xff]
        %v1452 = vld [vmem:[%s1442 + $0x48] sm:$0xff]
        %v1453 = vld [vmem:[%s1442 + $0x50] sm:$0xff]
        %v1454 = vld [vmem:[%s1442 + $0x58] sm:$0xff]
        %v1455 = vld [vmem:[%s1442 + $0x60] sm:$0xff]
        %v1456 = vld [vmem:[%s1442 + $0x68] sm:$0xff]
        %v1457 = vld [vmem:[%s1442 + $0x70] sm:$0xff]
        %v1458 = vld [vmem:[%s1442 + $0x78] sm:$0xff]
        %1459 = vmatprep.subr.mxu0 0.0
        %1460 = vmatpush1.msra.mxu0 %v1443
        %1461 = vmatprep.subr.mxu0 0.0
        %1462 = vmatpush1.msra.mxu0 %v1444
        %1463 = vmatprep.subr.mxu0 0.0
        %1464 = vmatpush1.msra.mxu0 %v1445
        %1465 = vmatprep.subr.mxu0 0.0
        %1466 = vmatpush1.msra.mxu0 %v1446
        %1467 = vmatprep.subr.mxu0 0.0
        %1468 = vmatpush1.msra.mxu0 %v1447
        %1469 = vmatprep.subr.mxu0 0.0
        %1470 = vmatpush1.msra.mxu0 %v1448
        %1471 = vmatprep.subr.mxu0 0.0
        %1472 = vmatpush1.msra.mxu0 %v1449
        %1473 = vmatprep.subr.mxu0 0.0
        %1474 = vmatpush1.msra.mxu0 %v1450
        %1475 = vmatprep.subr.mxu0 0.0
        %1476 = vmatpush1.msra.mxu0 %v1451
        %1477 = vmatprep.subr.mxu0 0.0
        %1478 = vmatpush1.msra.mxu0 %v1452
        %1479 = vmatprep.subr.mxu0 0.0
        %1480 = vmatpush1.msra.mxu0 %v1453
        %1481 = vmatprep.subr.mxu0 0.0
        %1482 = vmatpush1.msra.mxu0 %v1454
        %1483 = vmatprep.subr.mxu0 0.0
        %1484 = vmatpush1.msra.mxu0 %v1455
        %1485 = vmatprep.subr.mxu0 0.0
        %1486 = vmatpush1.msra.mxu0 %v1456
        %1487 = vmatprep.subr.mxu0 0.0
        %1488 = vmatpush1.msra.mxu0 %v1457
        %1489 = vmatprep.subr.mxu0 0.0
        %1490 = vmatpush1.msra.mxu0 %v1458
        %1491 = vmatprep.subr.mxu0 0.0
        %1492 = vmatpush1.msra.mxu0 0.0
        %1493 = vmatprep.subr.mxu0 0.0
        %1494 = vmatpush1.msra.mxu0 0.0
        %1495 = vmatprep.subr.mxu0 0.0
        %1496 = vmatpush1.msra.mxu0 0.0
        %1497 = vmatprep.subr.mxu0 0.0
        %1498 = vmatpush1.msra.mxu0 0.0
        %1499 = vmatprep.subr.mxu0 0.0
        %1500 = vmatpush1.msra.mxu0 0.0
        %1501 = vmatprep.subr.mxu0 0.0
        %1502 = vmatpush1.msra.mxu0 0.0
        %1503 = vmatprep.subr.mxu0 0.0
        %1504 = vmatpush1.msra.mxu0 0.0
        %1505 = vmatprep.subr.mxu0 0.0
        %1506 = vmatpush1.msra.mxu0 0.0
        %1507 = vmatprep.subr.mxu0 0.0
        %1508 = vmatpush1.msra.mxu0 0.0
        %1509 = vmatprep.subr.mxu0 0.0
        %1510 = vmatpush1.msra.mxu0 0.0
        %1511 = vmatprep.subr.mxu0 0.0
        %1512 = vmatpush1.msra.mxu0 0.0
        %1513 = vmatprep.subr.mxu0 0.0
        %1514 = vmatpush1.msra.mxu0 0.0
        %1515 = vmatprep.subr.mxu0 0.0
        %1516 = vmatpush1.msra.mxu0 0.0
        %1517 = vmatprep.subr.mxu0 0.0
        %1518 = vmatpush1.msra.mxu0 0.0
        %1519 = vmatprep.subr.mxu0 0.0
        %1520 = vmatpush1.msra.mxu0 0.0
        %1521 = vmatprep.subr.mxu0 0.0
        %1522 = vmatpush1.msra.mxu0 0.0
        %1523 = vmatprep.mubr.f32.mxu0 0.0
        %1524 = vmatmul.mubr.f32.gmra.mrb[0].mxu0 %v1418
        %v1525 = vpop.f32.mrb[0].mxu0
        %v1526 = vadd.f32 0.0, %v1525
        %v1527 = vpop.f32.mrb[0].mxu0
        %1528 = vmatprep.mubr.f32.mxu0 0.0
        %1529 = vmatmul.mubr.f32.gmra.mrb[0].mxu0 %v1419
        %v1530 = vpop.f32.mrb[0].mxu0
        %v1531 = vadd.f32 0.0, %v1530
        %v1532 = vpop.f32.mrb[0].mxu0
        %1533 = vmatprep.mubr.f32.mxu0 0.0
        %1534 = vmatmul.mubr.f32.gmra.mrb[0].mxu0 %v1420
        %v1535 = vpop.f32.mrb[0].mxu0
        %v1536 = vadd.f32 0.0, %v1535
        %v1537 = vpop.f32.mrb[0].mxu0
        %1538 = vmatprep.mubr.f32.mxu0 0.0
        %1539 = vmatmul.mubr.f32.gmra.mrb[0].mxu0 %v1421
        %v1540 = vpop.f32.mrb[0].mxu0
        %v1541 = vadd.f32 0.0, %v1540
        %v1542 = vpop.f32.mrb[0].mxu0
        %1543 = vmatprep.mubr.f32.mxu0 0.0
        %1544 = vmatmul.mubr.f32.gmra.mrb[0].mxu0 %v1422
        %v1545 = vpop.f32.mrb[0].mxu0
        %v1546 = vadd.f32 0.0, %v1545
        %v1547 = vpop.f32.mrb[0].mxu0
        %1548 = vmatprep.mubr.f32.mxu0 0.0
        %1549 = vmatmul.mubr.f32.gmra.mrb[0].mxu0 %v1423
        %v1550 = vpop.f32.mrb[0].mxu0
        %v1551 = vadd.f32 0.0, %v1550
        %v1552 = vpop.f32.mrb[0].mxu0
        %1553 = vmatprep.mubr.f32.mxu0 0.0
        %1554 = vmatmul.mubr.f32.gmra.mrb[0].mxu0 %v1424
        %v1555 = vpop.f32.mrb[0].mxu0
        %v1556 = vadd.f32 0.0, %v1555
        %v1557 = vpop.f32.mrb[0].mxu0
        %1558 = vmatprep.mubr.f32.mxu0 0.0
        %1559 = vmatmul.mubr.f32.gmra.mrb[0].mxu0 %v1425
        %v1560 = vpop.f32.mrb[0].mxu0
        %v1561 = vadd.f32 0.0, %v1560
        %v1562 = vpop.f32.mrb[0].mxu0
        %1563 = vmatprep.mubr.f32.mxu0 0.0
        %1564 = vmatmul.mubr.f32.gmra.mrb[0].mxu0 %v1426
        %v1565 = vpop.f32.mrb[0].mxu0
        %v1566 = vadd.f32 0.0, %v1565
        %v1567 = vpop.f32.mrb[0].mxu0
        %1568 = vmatprep.mubr.f32.mxu0 0.0
        %1569 = vmatmul.mubr.f32.gmra.mrb[0].mxu0 %v1427
        %v1570 = vpop.f32.mrb[0].mxu0
        %v1571 = vadd.f32 0.0, %v1570
        %v1572 = vpop.f32.mrb[0].mxu0
        %1573 = vmatprep.mubr.f32.mxu0 0.0
        %1574 = vmatmul.mubr.f32.gmra.mrb[0].mxu0 %v1428
        %v1575 = vpop.f32.mrb[0].mxu0
        %v1576 = vadd.f32 0.0, %v1575
        %v1577 = vpop.f32.mrb[0].mxu0
        %1578 = vmatprep.mubr.f32.mxu0 0.0
        %1579 = vmatmul.mubr.f32.gmra.mrb[0].mxu0 %v1429
        %v1580 = vpop.f32.mrb[0].mxu0
        %v1581 = vadd.f32 0.0, %v1580
        %v1582 = vpop.f32.mrb[0].mxu0
        %1583 = vmatprep.mubr.f32.mxu0 0.0
        %1584 = vmatmul.mubr.f32.gmra.mrb[0].mxu0 %v1430
        %v1585 = vpop.f32.mrb[0].mxu0
        %v1586 = vadd.f32 0.0, %v1585
        %v1587 = vpop.f32.mrb[0].mxu0
        %1588 = vmatprep.mubr.f32.mxu0 0.0
        %1589 = vmatmul.mubr.f32.gmra.mrb[0].mxu0 %v1431
        %v1590 = vpop.f32.mrb[0].mxu0
        %v1591 = vadd.f32 0.0, %v1590
        %v1592 = vpop.f32.mrb[0].mxu0
        %1593 = vmatprep.mubr.f32.mxu0 0.0
        %1594 = vmatmul.mubr.f32.gmra.mrb[0].mxu0 %v1432
        %v1595 = vpop.f32.mrb[0].mxu0
        %v1596 = vadd.f32 0.0, %v1595
        %v1597 = vpop.f32.mrb[0].mxu0
        %1598 = vmatprep.mubr.f32.mxu0 0.0
        %1599 = vmatmul.mubr.f32.gmra.mrb[0].mxu0 %v1433
        %v1600 = vpop.f32.mrb[0].mxu0
        %v1601 = vadd.f32 0.0, %v1600
        %v1602 = vpop.f32.mrb[0].mxu0
        %1603 = vmatprep.mubr.f32.mxu0 0.0
        %1604 = vmatmul.mubr.f32.gmra.mrb[0].mxu0 %v1434
        %v1605 = vpop.f32.mrb[0].mxu0
        %v1606 = vadd.f32 0.0, %v1605
        %v1607 = vpop.f32.mrb[0].mxu0
        %1608 = vmatprep.mubr.f32.mxu0 0.0
        %1609 = vmatmul.mubr.f32.gmra.mrb[0].mxu0 %v1435
        %v1610 = vpop.f32.mrb[0].mxu0
        %v1611 = vadd.f32 0.0, %v1610
        %v1612 = vpop.f32.mrb[0].mxu0
        %1613 = vmatprep.mubr.f32.mxu0 0.0
        %1614 = vmatmul.mubr.f32.gmra.mrb[0].mxu0 %v1436
        %v1615 = vpop.f32.mrb[0].mxu0
        %v1616 = vadd.f32 0.0, %v1615
        %v1617 = vpop.f32.mrb[0].mxu0
        %1618 = vmatprep.mubr.f32.mxu0 0.0
        %1619 = vmatmul.mubr.f32.gmra.mrb[0].mxu0 %v1437
        %v1620 = vpop.f32.mrb[0].mxu0
        %v1621 = vadd.f32 0.0, %v1620
        %v1622 = vpop.f32.mrb[0].mxu0
        %1623 = vmatprep.mubr.f32.mxu0 0.0
        %1624 = vmatmul.mubr.f32.gmra.mrb[0].mxu0 %v1438
        %v1625 = vpop.f32.mrb[0].mxu0
        %v1626 = vadd.f32 0.0, %v1625
        %v1627 = vpop.f32.mrb[0].mxu0
        %1628 = vmatprep.mubr.f32.mxu0 0.0
        %1629 = vmatmul.mubr.f32.gmra.mrb[0].mxu0 %v1439
        %v1630 = vpop.f32.mrb[0].mxu0
        %v1631 = vadd.f32 0.0, %v1630
        %v1632 = vpop.f32.mrb[0].mxu0
        %1633 = vmatprep.mubr.f32.mxu0 0.0
        %1634 = vmatmul.mubr.f32.gmra.mrb[0].mxu0 %v1440
        %v1635 = vpop.f32.mrb[0].mxu0
        %v1636 = vadd.f32 0.0, %v1635
        %v1637 = vpop.f32.mrb[0].mxu0
        %1638 = vmatprep.mubr.f32.mxu0 0.0
        %1639 = vmatmul.mubr.f32.gmra.mrb[0].mxu0 %v1441
        %v1640 = vpop.f32.mrb[0].mxu0
        %v1641 = vadd.f32 0.0, %v1640
        %v1642 = vpop.f32.mrb[0].mxu0
        %1643 = vdwg.mxu0
        %v1644 = vadd.f32 %v1394, %v1526
        %v1645 = vadd.f32 %v1395, %v1531
        %v1646 = vadd.f32 %v1396, %v1536
        %v1647 = vadd.f32 %v1397, %v1541
        %v1648 = vadd.f32 %v1398, %v1546
        %v1649 = vadd.f32 %v1399, %v1551
        %v1650 = vadd.f32 %v1400, %v1556
        %v1651 = vadd.f32 %v1401, %v1561
        %v1652 = vadd.f32 %v1402, %v1566
        %v1653 = vadd.f32 %v1403, %v1571
        %v1654 = vadd.f32 %v1404, %v1576
        %v1655 = vadd.f32 %v1405, %v1581
        %v1656 = vadd.f32 %v1406, %v1586
        %v1657 = vadd.f32 %v1407, %v1591
        %v1658 = vadd.f32 %v1408, %v1596
        %v1659 = vadd.f32 %v1409, %v1601
        %v1660 = vadd.f32 %v1410, %v1606
        %v1661 = vadd.f32 %v1411, %v1611
        %v1662 = vadd.f32 %v1412, %v1616
        %v1663 = vadd.f32 %v1413, %v1621
        %v1664 = vadd.f32 %v1414, %v1626
        %v1665 = vadd.f32 %v1415, %v1631
        %v1666 = vadd.f32 %v1416, %v1636
        %v1667 = vadd.f32 %v1417, %v1641
        %v1668 = vld [vmem:[%s187 + $0x30] sm:$0xff]
        %v1669 = vld [vmem:[%s187 + $0x38] sm:$0xff]
        %v1670 = vld [vmem:[%s187 + $0x40] sm:$0xff]
        %v1671 = vld [vmem:[%s187 + $0x48] sm:$0xff]
        %v1672 = vld [vmem:[%s187 + $0x50] sm:$0xff]
        %v1673 = vld [vmem:[%s187 + $0x58] sm:$0xff]
        %v1674 = vld [vmem:[%s187 + $0x60] sm:$0xff]
        %v1675 = vld [vmem:[%s187 + $0x68] sm:$0xff]
        %v1676 = vld [vmem:[%s187 + $0x70] sm:$0xff]
        %v1677 = vld [vmem:[%s187 + $0x78] sm:$0xff]
        %v1678 = vld [vmem:[%s187 + $0x80] sm:$0xff]
        %v1679 = vld [vmem:[%s187 + $0x88] sm:$0xff]
        %v1680 = vld [vmem:[%s187 + $0x90] sm:$0xff]
        %v1681 = vld [vmem:[%s187 + $0x98] sm:$0xff]
        %v1682 = vld [vmem:[%s187 + $0xa0] sm:$0xff]
        %v1683 = vld [vmem:[%s187 + $0xa8] sm:$0xff]
        %v1684 = vld [vmem:[%s187 + $0xb0] sm:$0xff]
        %v1685 = vld [vmem:[%s187 + $0xb8] sm:$0xff]
        %v1686 = vld [vmem:[%s187 + $0xc0] sm:$0xff]
        %v1687 = vld [vmem:[%s187 + $0xc8] sm:$0xff]
        %v1688 = vld [vmem:[%s187 + $0xd0] sm:$0xff]
        %v1689 = vld [vmem:[%s187 + $0xd8] sm:$0xff]
        %v1690 = vld [vmem:[%s187 + $0xe0] sm:$0xff]
        %v1691 = vld [vmem:[%s187 + $0xe8] sm:$0xff]
        %s1692 = scalar_lea.vmem [#allocation4], 768
        %v1693 = vld [vmem:[%s1692] sm:$0xff]
        %v1694 = vld [vmem:[%s1692 + $0x8] sm:$0xff]
        %v1695 = vld [vmem:[%s1692 + $0x10] sm:$0xff]
        %v1696 = vld [vmem:[%s1692 + $0x18] sm:$0xff]
        %v1697 = vld [vmem:[%s1692 + $0x20] sm:$0xff]
        %v1698 = vld [vmem:[%s1692 + $0x28] sm:$0xff]
        %v1699 = vld [vmem:[%s1692 + $0x30] sm:$0xff]
        %v1700 = vld [vmem:[%s1692 + $0x38] sm:$0xff]
        %v1701 = vld [vmem:[%s1692 + $0x40] sm:$0xff]
        %v1702 = vld [vmem:[%s1692 + $0x48] sm:$0xff]
        %v1703 = vld [vmem:[%s1692 + $0x50] sm:$0xff]
        %v1704 = vld [vmem:[%s1692 + $0x58] sm:$0xff]
        %v1705 = vld [vmem:[%s1692 + $0x60] sm:$0xff]
        %v1706 = vld [vmem:[%s1692 + $0x68] sm:$0xff]
        %v1707 = vld [vmem:[%s1692 + $0x70] sm:$0xff]
        %v1708 = vld [vmem:[%s1692 + $0x78] sm:$0xff]
        %1709 = vmatprep.subr.mxu0 0.0
        %1710 = vmatpush1.msra.mxu0 %v1693
        %1711 = vmatprep.subr.mxu0 0.0
        %1712 = vmatpush1.msra.mxu0 %v1694
        %1713 = vmatprep.subr.mxu0 0.0
        %1714 = vmatpush1.msra.mxu0 %v1695
        %1715 = vmatprep.subr.mxu0 0.0
        %1716 = vmatpush1.msra.mxu0 %v1696
        %1717 = vmatprep.subr.mxu0 0.0
        %1718 = vmatpush1.msra.mxu0 %v1697
        %1719 = vmatprep.subr.mxu0 0.0
        %1720 = vmatpush1.msra.mxu0 %v1698
        %1721 = vmatprep.subr.mxu0 0.0
        %1722 = vmatpush1.msra.mxu0 %v1699
        %1723 = vmatprep.subr.mxu0 0.0
        %1724 = vmatpush1.msra.mxu0 %v1700
        %1725 = vmatprep.subr.mxu0 0.0
        %1726 = vmatpush1.msra.mxu0 %v1701
        %1727 = vmatprep.subr.mxu0 0.0
        %1728 = vmatpush1.msra.mxu0 %v1702
        %1729 = vmatprep.subr.mxu0 0.0
        %1730 = vmatpush1.msra.mxu0 %v1703
        %1731 = vmatprep.subr.mxu0 0.0
        %1732 = vmatpush1.msra.mxu0 %v1704
        %1733 = vmatprep.subr.mxu0 0.0
        %1734 = vmatpush1.msra.mxu0 %v1705
        %1735 = vmatprep.subr.mxu0 0.0
        %1736 = vmatpush1.msra.mxu0 %v1706
        %1737 = vmatprep.subr.mxu0 0.0
        %1738 = vmatpush1.msra.mxu0 %v1707
        %1739 = vmatprep.subr.mxu0 0.0
        %1740 = vmatpush1.msra.mxu0 %v1708
        %1741 = vmatprep.subr.mxu0 0.0
        %1742 = vmatpush1.msra.mxu0 0.0
        %1743 = vmatprep.subr.mxu0 0.0
        %1744 = vmatpush1.msra.mxu0 0.0
        %1745 = vmatprep.subr.mxu0 0.0
        %1746 = vmatpush1.msra.mxu0 0.0
        %1747 = vmatprep.subr.mxu0 0.0
        %1748 = vmatpush1.msra.mxu0 0.0
        %1749 = vmatprep.subr.mxu0 0.0
        %1750 = vmatpush1.msra.mxu0 0.0
        %1751 = vmatprep.subr.mxu0 0.0
        %1752 = vmatpush1.msra.mxu0 0.0
        %1753 = vmatprep.subr.mxu0 0.0
        %1754 = vmatpush1.msra.mxu0 0.0
        %1755 = vmatprep.subr.mxu0 0.0
        %1756 = vmatpush1.msra.mxu0 0.0
        %1757 = vmatprep.subr.mxu0 0.0
        %1758 = vmatpush1.msra.mxu0 0.0
        %1759 = vmatprep.subr.mxu0 0.0
        %1760 = vmatpush1.msra.mxu0 0.0
        %1761 = vmatprep.subr.mxu0 0.0
        %1762 = vmatpush1.msra.mxu0 0.0
        %1763 = vmatprep.subr.mxu0 0.0
        %1764 = vmatpush1.msra.mxu0 0.0
        %1765 = vmatprep.subr.mxu0 0.0
        %1766 = vmatpush1.msra.mxu0 0.0
        %1767 = vmatprep.subr.mxu0 0.0
        %1768 = vmatpush1.msra.mxu0 0.0
        %1769 = vmatprep.subr.mxu0 0.0
        %1770 = vmatpush1.msra.mxu0 0.0
        %1771 = vmatprep.subr.mxu0 0.0
        %1772 = vmatpush1.msra.mxu0 0.0
        %1773 = vmatprep.mubr.f32.mxu0 0.0
        %1774 = vmatmul.mubr.f32.gmra.mrb[0].mxu0 %v1668
        %v1775 = vpop.f32.mrb[0].mxu0
        %v1776 = vadd.f32 0.0, %v1775
        %v1777 = vpop.f32.mrb[0].mxu0
        %1778 = vmatprep.mubr.f32.mxu0 0.0
        %1779 = vmatmul.mubr.f32.gmra.mrb[0].mxu0 %v1669
        %v1780 = vpop.f32.mrb[0].mxu0
        %v1781 = vadd.f32 0.0, %v1780
        %v1782 = vpop.f32.mrb[0].mxu0
        %1783 = vmatprep.mubr.f32.mxu0 0.0
        %1784 = vmatmul.mubr.f32.gmra.mrb[0].mxu0 %v1670
        %v1785 = vpop.f32.mrb[0].mxu0
        %v1786 = vadd.f32 0.0, %v1785
        %v1787 = vpop.f32.mrb[0].mxu0
        %1788 = vmatprep.mubr.f32.mxu0 0.0
        %1789 = vmatmul.mubr.f32.gmra.mrb[0].mxu0 %v1671
        %v1790 = vpop.f32.mrb[0].mxu0
        %v1791 = vadd.f32 0.0, %v1790
        %v1792 = vpop.f32.mrb[0].mxu0
        %1793 = vmatprep.mubr.f32.mxu0 0.0
        %1794 = vmatmul.mubr.f32.gmra.mrb[0].mxu0 %v1672
        %v1795 = vpop.f32.mrb[0].mxu0
        %v1796 = vadd.f32 0.0, %v1795
        %v1797 = vpop.f32.mrb[0].mxu0
        %1798 = vmatprep.mubr.f32.mxu0 0.0
        %1799 = vmatmul.mubr.f32.gmra.mrb[0].mxu0 %v1673
        %v1800 = vpop.f32.mrb[0].mxu0
        %v1801 = vadd.f32 0.0, %v1800
        %v1802 = vpop.f32.mrb[0].mxu0
        %1803 = vmatprep.mubr.f32.mxu0 0.0
        %1804 = vmatmul.mubr.f32.gmra.mrb[0].mxu0 %v1674
        %v1805 = vpop.f32.mrb[0].mxu0
        %v1806 = vadd.f32 0.0, %v1805
        %v1807 = vpop.f32.mrb[0].mxu0
        %1808 = vmatprep.mubr.f32.mxu0 0.0
        %1809 = vmatmul.mubr.f32.gmra.mrb[0].mxu0 %v1675
        %v1810 = vpop.f32.mrb[0].mxu0
        %v1811 = vadd.f32 0.0, %v1810
        %v1812 = vpop.f32.mrb[0].mxu0
        %1813 = vmatprep.mubr.f32.mxu0 0.0
        %1814 = vmatmul.mubr.f32.gmra.mrb[0].mxu0 %v1676
        %v1815 = vpop.f32.mrb[0].mxu0
        %v1816 = vadd.f32 0.0, %v1815
        %v1817 = vpop.f32.mrb[0].mxu0
        %1818 = vmatprep.mubr.f32.mxu0 0.0
        %1819 = vmatmul.mubr.f32.gmra.mrb[0].mxu0 %v1677
        %v1820 = vpop.f32.mrb[0].mxu0
        %v1821 = vadd.f32 0.0, %v1820
        %v1822 = vpop.f32.mrb[0].mxu0
        %1823 = vmatprep.mubr.f32.mxu0 0.0
        %1824 = vmatmul.mubr.f32.gmra.mrb[0].mxu0 %v1678
        %v1825 = vpop.f32.mrb[0].mxu0
        %v1826 = vadd.f32 0.0, %v1825
        %v1827 = vpop.f32.mrb[0].mxu0
        %1828 = vmatprep.mubr.f32.mxu0 0.0
        %1829 = vmatmul.mubr.f32.gmra.mrb[0].mxu0 %v1679
        %v1830 = vpop.f32.mrb[0].mxu0
        %v1831 = vadd.f32 0.0, %v1830
        %v1832 = vpop.f32.mrb[0].mxu0
        %1833 = vmatprep.mubr.f32.mxu0 0.0
        %1834 = vmatmul.mubr.f32.gmra.mrb[0].mxu0 %v1680
        %v1835 = vpop.f32.mrb[0].mxu0
        %v1836 = vadd.f32 0.0, %v1835
        %v1837 = vpop.f32.mrb[0].mxu0
        %1838 = vmatprep.mubr.f32.mxu0 0.0
        %1839 = vmatmul.mubr.f32.gmra.mrb[0].mxu0 %v1681
        %v1840 = vpop.f32.mrb[0].mxu0
        %v1841 = vadd.f32 0.0, %v1840
        %v1842 = vpop.f32.mrb[0].mxu0
        %1843 = vmatprep.mubr.f32.mxu0 0.0
        %1844 = vmatmul.mubr.f32.gmra.mrb[0].mxu0 %v1682
        %v1845 = vpop.f32.mrb[0].mxu0
        %v1846 = vadd.f32 0.0, %v1845
        %v1847 = vpop.f32.mrb[0].mxu0
        %1848 = vmatprep.mubr.f32.mxu0 0.0
        %1849 = vmatmul.mubr.f32.gmra.mrb[0].mxu0 %v1683
        %v1850 = vpop.f32.mrb[0].mxu0
        %v1851 = vadd.f32 0.0, %v1850
        %v1852 = vpop.f32.mrb[0].mxu0
        %1853 = vmatprep.mubr.f32.mxu0 0.0
        %1854 = vmatmul.mubr.f32.gmra.mrb[0].mxu0 %v1684
        %v1855 = vpop.f32.mrb[0].mxu0
        %v1856 = vadd.f32 0.0, %v1855
        %v1857 = vpop.f32.mrb[0].mxu0
        %1858 = vmatprep.mubr.f32.mxu0 0.0
        %1859 = vmatmul.mubr.f32.gmra.mrb[0].mxu0 %v1685
        %v1860 = vpop.f32.mrb[0].mxu0
        %v1861 = vadd.f32 0.0, %v1860
        %v1862 = vpop.f32.mrb[0].mxu0
        %1863 = vmatprep.mubr.f32.mxu0 0.0
        %1864 = vmatmul.mubr.f32.gmra.mrb[0].mxu0 %v1686
        %v1865 = vpop.f32.mrb[0].mxu0
        %v1866 = vadd.f32 0.0, %v1865
        %v1867 = vpop.f32.mrb[0].mxu0
        %1868 = vmatprep.mubr.f32.mxu0 0.0
        %1869 = vmatmul.mubr.f32.gmra.mrb[0].mxu0 %v1687
        %v1870 = vpop.f32.mrb[0].mxu0
        %v1871 = vadd.f32 0.0, %v1870
        %v1872 = vpop.f32.mrb[0].mxu0
        %1873 = vmatprep.mubr.f32.mxu0 0.0
        %1874 = vmatmul.mubr.f32.gmra.mrb[0].mxu0 %v1688
        %v1875 = vpop.f32.mrb[0].mxu0
        %v1876 = vadd.f32 0.0, %v1875
        %v1877 = vpop.f32.mrb[0].mxu0
        %1878 = vmatprep.mubr.f32.mxu0 0.0
        %1879 = vmatmul.mubr.f32.gmra.mrb[0].mxu0 %v1689
        %v1880 = vpop.f32.mrb[0].mxu0
        %v1881 = vadd.f32 0.0, %v1880
        %v1882 = vpop.f32.mrb[0].mxu0
        %1883 = vmatprep.mubr.f32.mxu0 0.0
        %1884 = vmatmul.mubr.f32.gmra.mrb[0].mxu0 %v1690
        %v1885 = vpop.f32.mrb[0].mxu0
        %v1886 = vadd.f32 0.0, %v1885
        %v1887 = vpop.f32.mrb[0].mxu0
        %1888 = vmatprep.mubr.f32.mxu0 0.0
        %1889 = vmatmul.mubr.f32.gmra.mrb[0].mxu0 %v1691
        %v1890 = vpop.f32.mrb[0].mxu0
        %v1891 = vadd.f32 0.0, %v1890
        %v1892 = vpop.f32.mrb[0].mxu0
        %1893 = vdwg.mxu0
        %v1894 = vadd.f32 %v1644, %v1776
        %v1895 = vadd.f32 %v1645, %v1781
        %v1896 = vadd.f32 %v1646, %v1786
        %v1897 = vadd.f32 %v1647, %v1791
        %v1898 = vadd.f32 %v1648, %v1796
        %v1899 = vadd.f32 %v1649, %v1801
        %v1900 = vadd.f32 %v1650, %v1806
        %v1901 = vadd.f32 %v1651, %v1811
        %v1902 = vadd.f32 %v1652, %v1816
        %v1903 = vadd.f32 %v1653, %v1821
        %v1904 = vadd.f32 %v1654, %v1826
        %v1905 = vadd.f32 %v1655, %v1831
        %v1906 = vadd.f32 %v1656, %v1836
        %v1907 = vadd.f32 %v1657, %v1841
        %v1908 = vadd.f32 %v1658, %v1846
        %v1909 = vadd.f32 %v1659, %v1851
        %v1910 = vadd.f32 %v1660, %v1856
        %v1911 = vadd.f32 %v1661, %v1861
        %v1912 = vadd.f32 %v1662, %v1866
        %v1913 = vadd.f32 %v1663, %v1871
        %v1914 = vadd.f32 %v1664, %v1876
        %v1915 = vadd.f32 %v1665, %v1881
        %v1916 = vadd.f32 %v1666, %v1886
        %v1917 = vadd.f32 %v1667, %v1891
        %v1918 = vld [vmem:[%s187 + $0x31] sm:$0xff]
        %v1919 = vld [vmem:[%s187 + $0x39] sm:$0xff]
        %v1920 = vld [vmem:[%s187 + $0x41] sm:$0xff]
        %v1921 = vld [vmem:[%s187 + $0x49] sm:$0xff]
        %v1922 = vld [vmem:[%s187 + $0x51] sm:$0xff]
        %v1923 = vld [vmem:[%s187 + $0x59] sm:$0xff]
        %v1924 = vld [vmem:[%s187 + $0x61] sm:$0xff]
        %v1925 = vld [vmem:[%s187 + $0x69] sm:$0xff]
        %v1926 = vld [vmem:[%s187 + $0x71] sm:$0xff]
        %v1927 = vld [vmem:[%s187 + $0x79] sm:$0xff]
        %v1928 = vld [vmem:[%s187 + $0x81] sm:$0xff]
        %v1929 = vld [vmem:[%s187 + $0x89] sm:$0xff]
        %v1930 = vld [vmem:[%s187 + $0x91] sm:$0xff]
        %v1931 = vld [vmem:[%s187 + $0x99] sm:$0xff]
        %v1932 = vld [vmem:[%s187 + $0xa1] sm:$0xff]
        %v1933 = vld [vmem:[%s187 + $0xa9] sm:$0xff]
        %v1934 = vld [vmem:[%s187 + $0xb1] sm:$0xff]
        %v1935 = vld [vmem:[%s187 + $0xb9] sm:$0xff]
        %v1936 = vld [vmem:[%s187 + $0xc1] sm:$0xff]
        %v1937 = vld [vmem:[%s187 + $0xc9] sm:$0xff]
        %v1938 = vld [vmem:[%s187 + $0xd1] sm:$0xff]
        %v1939 = vld [vmem:[%s187 + $0xd9] sm:$0xff]
        %v1940 = vld [vmem:[%s187 + $0xe1] sm:$0xff]
        %v1941 = vld [vmem:[%s187 + $0xe9] sm:$0xff]
        %s1942 = scalar_lea.vmem [#allocation4], 896
        %v1943 = vld [vmem:[%s1942] sm:$0xff]
        %v1944 = vld [vmem:[%s1942 + $0x8] sm:$0xff]
        %v1945 = vld [vmem:[%s1942 + $0x10] sm:$0xff]
        %v1946 = vld [vmem:[%s1942 + $0x18] sm:$0xff]
        %v1947 = vld [vmem:[%s1942 + $0x20] sm:$0xff]
        %v1948 = vld [vmem:[%s1942 + $0x28] sm:$0xff]
        %v1949 = vld [vmem:[%s1942 + $0x30] sm:$0xff]
        %v1950 = vld [vmem:[%s1942 + $0x38] sm:$0xff]
        %v1951 = vld [vmem:[%s1942 + $0x40] sm:$0xff]
        %v1952 = vld [vmem:[%s1942 + $0x48] sm:$0xff]
        %v1953 = vld [vmem:[%s1942 + $0x50] sm:$0xff]
        %v1954 = vld [vmem:[%s1942 + $0x58] sm:$0xff]
        %v1955 = vld [vmem:[%s1942 + $0x60] sm:$0xff]
        %v1956 = vld [vmem:[%s1942 + $0x68] sm:$0xff]
        %v1957 = vld [vmem:[%s1942 + $0x70] sm:$0xff]
        %v1958 = vld [vmem:[%s1942 + $0x78] sm:$0xff]
        %1959 = vmatprep.subr.mxu0 0.0
        %1960 = vmatpush1.msra.mxu0 %v1943
        %1961 = vmatprep.subr.mxu0 0.0
        %1962 = vmatpush1.msra.mxu0 %v1944
        %1963 = vmatprep.subr.mxu0 0.0
        %1964 = vmatpush1.msra.mxu0 %v1945
        %1965 = vmatprep.subr.mxu0 0.0
        %1966 = vmatpush1.msra.mxu0 %v1946
        %1967 = vmatprep.subr.mxu0 0.0
        %1968 = vmatpush1.msra.mxu0 %v1947
        %1969 = vmatprep.subr.mxu0 0.0
        %1970 = vmatpush1.msra.mxu0 %v1948
        %1971 = vmatprep.subr.mxu0 0.0
        %1972 = vmatpush1.msra.mxu0 %v1949
        %1973 = vmatprep.subr.mxu0 0.0
        %1974 = vmatpush1.msra.mxu0 %v1950
        %1975 = vmatprep.subr.mxu0 0.0
        %1976 = vmatpush1.msra.mxu0 %v1951
        %1977 = vmatprep.subr.mxu0 0.0
        %1978 = vmatpush1.msra.mxu0 %v1952
        %1979 = vmatprep.subr.mxu0 0.0
        %1980 = vmatpush1.msra.mxu0 %v1953
        %1981 = vmatprep.subr.mxu0 0.0
        %1982 = vmatpush1.msra.mxu0 %v1954
        %1983 = vmatprep.subr.mxu0 0.0
        %1984 = vmatpush1.msra.mxu0 %v1955
        %1985 = vmatprep.subr.mxu0 0.0
        %1986 = vmatpush1.msra.mxu0 %v1956
        %1987 = vmatprep.subr.mxu0 0.0
        %1988 = vmatpush1.msra.mxu0 %v1957
        %1989 = vmatprep.subr.mxu0 0.0
        %1990 = vmatpush1.msra.mxu0 %v1958
        %1991 = vmatprep.subr.mxu0 0.0
        %1992 = vmatpush1.msra.mxu0 0.0
        %1993 = vmatprep.subr.mxu0 0.0
        %1994 = vmatpush1.msra.mxu0 0.0
        %1995 = vmatprep.subr.mxu0 0.0
        %1996 = vmatpush1.msra.mxu0 0.0
        %1997 = vmatprep.subr.mxu0 0.0
        %1998 = vmatpush1.msra.mxu0 0.0
        %1999 = vmatprep.subr.mxu0 0.0
        %2000 = vmatpush1.msra.mxu0 0.0
        %2001 = vmatprep.subr.mxu0 0.0
        %2002 = vmatpush1.msra.mxu0 0.0
        %2003 = vmatprep.subr.mxu0 0.0
        %2004 = vmatpush1.msra.mxu0 0.0
        %2005 = vmatprep.subr.mxu0 0.0
        %2006 = vmatpush1.msra.mxu0 0.0
        %2007 = vmatprep.subr.mxu0 0.0
        %2008 = vmatpush1.msra.mxu0 0.0
        %2009 = vmatprep.subr.mxu0 0.0
        %2010 = vmatpush1.msra.mxu0 0.0
        %2011 = vmatprep.subr.mxu0 0.0
        %2012 = vmatpush1.msra.mxu0 0.0
        %2013 = vmatprep.subr.mxu0 0.0
        %2014 = vmatpush1.msra.mxu0 0.0
        %2015 = vmatprep.subr.mxu0 0.0
        %2016 = vmatpush1.msra.mxu0 0.0
        %2017 = vmatprep.subr.mxu0 0.0
        %2018 = vmatpush1.msra.mxu0 0.0
        %2019 = vmatprep.subr.mxu0 0.0
        %2020 = vmatpush1.msra.mxu0 0.0
        %2021 = vmatprep.subr.mxu0 0.0
        %2022 = vmatpush1.msra.mxu0 0.0
        %2023 = vmatprep.mubr.f32.mxu0 0.0
        %2024 = vmatmul.mubr.f32.gmra.mrb[0].mxu0 %v1918
        %v2025 = vpop.f32.mrb[0].mxu0
        %v2026 = vadd.f32 0.0, %v2025
        %v2027 = vpop.f32.mrb[0].mxu0
        %2028 = vmatprep.mubr.f32.mxu0 0.0
        %2029 = vmatmul.mubr.f32.gmra.mrb[0].mxu0 %v1919
        %v2030 = vpop.f32.mrb[0].mxu0
        %v2031 = vadd.f32 0.0, %v2030
        %v2032 = vpop.f32.mrb[0].mxu0
        %2033 = vmatprep.mubr.f32.mxu0 0.0
        %2034 = vmatmul.mubr.f32.gmra.mrb[0].mxu0 %v1920
        %v2035 = vpop.f32.mrb[0].mxu0
        %v2036 = vadd.f32 0.0, %v2035
        %v2037 = vpop.f32.mrb[0].mxu0
        %2038 = vmatprep.mubr.f32.mxu0 0.0
        %2039 = vmatmul.mubr.f32.gmra.mrb[0].mxu0 %v1921
        %v2040 = vpop.f32.mrb[0].mxu0
        %v2041 = vadd.f32 0.0, %v2040
        %v2042 = vpop.f32.mrb[0].mxu0
        %2043 = vmatprep.mubr.f32.mxu0 0.0
        %2044 = vmatmul.mubr.f32.gmra.mrb[0].mxu0 %v1922
        %v2045 = vpop.f32.mrb[0].mxu0
        %v2046 = vadd.f32 0.0, %v2045
        %v2047 = vpop.f32.mrb[0].mxu0
        %2048 = vmatprep.mubr.f32.mxu0 0.0
        %2049 = vmatmul.mubr.f32.gmra.mrb[0].mxu0 %v1923
        %v2050 = vpop.f32.mrb[0].mxu0
        %v2051 = vadd.f32 0.0, %v2050
        %v2052 = vpop.f32.mrb[0].mxu0
        %2053 = vmatprep.mubr.f32.mxu0 0.0
        %2054 = vmatmul.mubr.f32.gmra.mrb[0].mxu0 %v1924
        %v2055 = vpop.f32.mrb[0].mxu0
        %v2056 = vadd.f32 0.0, %v2055
        %v2057 = vpop.f32.mrb[0].mxu0
        %2058 = vmatprep.mubr.f32.mxu0 0.0
        %2059 = vmatmul.mubr.f32.gmra.mrb[0].mxu0 %v1925
        %v2060 = vpop.f32.mrb[0].mxu0
        %v2061 = vadd.f32 0.0, %v2060
        %v2062 = vpop.f32.mrb[0].mxu0
        %2063 = vmatprep.mubr.f32.mxu0 0.0
        %2064 = vmatmul.mubr.f32.gmra.mrb[0].mxu0 %v1926
        %v2065 = vpop.f32.mrb[0].mxu0
        %v2066 = vadd.f32 0.0, %v2065
        %v2067 = vpop.f32.mrb[0].mxu0
        %2068 = vmatprep.mubr.f32.mxu0 0.0
        %2069 = vmatmul.mubr.f32.gmra.mrb[0].mxu0 %v1927
        %v2070 = vpop.f32.mrb[0].mxu0
        %v2071 = vadd.f32 0.0, %v2070
        %v2072 = vpop.f32.mrb[0].mxu0
        %2073 = vmatprep.mubr.f32.mxu0 0.0
        %2074 = vmatmul.mubr.f32.gmra.mrb[0].mxu0 %v1928
        %v2075 = vpop.f32.mrb[0].mxu0
        %v2076 = vadd.f32 0.0, %v2075
        %v2077 = vpop.f32.mrb[0].mxu0
        %2078 = vmatprep.mubr.f32.mxu0 0.0
        %2079 = vmatmul.mubr.f32.gmra.mrb[0].mxu0 %v1929
        %v2080 = vpop.f32.mrb[0].mxu0
        %v2081 = vadd.f32 0.0, %v2080
        %v2082 = vpop.f32.mrb[0].mxu0
        %2083 = vmatprep.mubr.f32.mxu0 0.0
        %2084 = vmatmul.mubr.f32.gmra.mrb[0].mxu0 %v1930
        %v2085 = vpop.f32.mrb[0].mxu0
        %v2086 = vadd.f32 0.0, %v2085
        %v2087 = vpop.f32.mrb[0].mxu0
        %2088 = vmatprep.mubr.f32.mxu0 0.0
        %2089 = vmatmul.mubr.f32.gmra.mrb[0].mxu0 %v1931
        %v2090 = vpop.f32.mrb[0].mxu0
        %v2091 = vadd.f32 0.0, %v2090
        %v2092 = vpop.f32.mrb[0].mxu0
        %2093 = vmatprep.mubr.f32.mxu0 0.0
        %2094 = vmatmul.mubr.f32.gmra.mrb[0].mxu0 %v1932
        %v2095 = vpop.f32.mrb[0].mxu0
        %v2096 = vadd.f32 0.0, %v2095
        %v2097 = vpop.f32.mrb[0].mxu0
        %2098 = vmatprep.mubr.f32.mxu0 0.0
        %2099 = vmatmul.mubr.f32.gmra.mrb[0].mxu0 %v1933
        %v2100 = vpop.f32.mrb[0].mxu0
        %v2101 = vadd.f32 0.0, %v2100
        %v2102 = vpop.f32.mrb[0].mxu0
        %2103 = vmatprep.mubr.f32.mxu0 0.0
        %2104 = vmatmul.mubr.f32.gmra.mrb[0].mxu0 %v1934
        %v2105 = vpop.f32.mrb[0].mxu0
        %v2106 = vadd.f32 0.0, %v2105
        %v2107 = vpop.f32.mrb[0].mxu0
        %2108 = vmatprep.mubr.f32.mxu0 0.0
        %2109 = vmatmul.mubr.f32.gmra.mrb[0].mxu0 %v1935
        %v2110 = vpop.f32.mrb[0].mxu0
        %v2111 = vadd.f32 0.0, %v2110
        %v2112 = vpop.f32.mrb[0].mxu0
        %2113 = vmatprep.mubr.f32.mxu0 0.0
        %2114 = vmatmul.mubr.f32.gmra.mrb[0].mxu0 %v1936
        %v2115 = vpop.f32.mrb[0].mxu0
        %v2116 = vadd.f32 0.0, %v2115
        %v2117 = vpop.f32.mrb[0].mxu0
        %2118 = vmatprep.mubr.f32.mxu0 0.0
        %2119 = vmatmul.mubr.f32.gmra.mrb[0].mxu0 %v1937
        %v2120 = vpop.f32.mrb[0].mxu0
        %v2121 = vadd.f32 0.0, %v2120
        %v2122 = vpop.f32.mrb[0].mxu0
        %2123 = vmatprep.mubr.f32.mxu0 0.0
        %2124 = vmatmul.mubr.f32.gmra.mrb[0].mxu0 %v1938
        %v2125 = vpop.f32.mrb[0].mxu0
        %v2126 = vadd.f32 0.0, %v2125
        %v2127 = vpop.f32.mrb[0].mxu0
        %2128 = vmatprep.mubr.f32.mxu0 0.0
        %2129 = vmatmul.mubr.f32.gmra.mrb[0].mxu0 %v1939
        %v2130 = vpop.f32.mrb[0].mxu0
        %v2131 = vadd.f32 0.0, %v2130
        %v2132 = vpop.f32.mrb[0].mxu0
        %2133 = vmatprep.mubr.f32.mxu0 0.0
        %2134 = vmatmul.mubr.f32.gmra.mrb[0].mxu0 %v1940
        %v2135 = vpop.f32.mrb[0].mxu0
        %v2136 = vadd.f32 0.0, %v2135
        %v2137 = vpop.f32.mrb[0].mxu0
        %2138 = vmatprep.mubr.f32.mxu0 0.0
        %2139 = vmatmul.mubr.f32.gmra.mrb[0].mxu0 %v1941
        %v2140 = vpop.f32.mrb[0].mxu0
        %v2141 = vadd.f32 0.0, %v2140
        %v2142 = vpop.f32.mrb[0].mxu0
        %2143 = vdwg.mxu0
        %v2144 = vadd.f32 %v1894, %v2026
        %v2145 = vadd.f32 %v1895, %v2031
        %v2146 = vadd.f32 %v1896, %v2036
        %v2147 = vadd.f32 %v1897, %v2041
        %v2148 = vadd.f32 %v1898, %v2046
        %v2149 = vadd.f32 %v1899, %v2051
        %v2150 = vadd.f32 %v1900, %v2056
        %v2151 = vadd.f32 %v1901, %v2061
        %v2152 = vadd.f32 %v1902, %v2066
        %v2153 = vadd.f32 %v1903, %v2071
        %v2154 = vadd.f32 %v1904, %v2076
        %v2155 = vadd.f32 %v1905, %v2081
        %v2156 = vadd.f32 %v1906, %v2086
        %v2157 = vadd.f32 %v1907, %v2091
        %v2158 = vadd.f32 %v1908, %v2096
        %v2159 = vadd.f32 %v1909, %v2101
        %v2160 = vadd.f32 %v1910, %v2106
        %v2161 = vadd.f32 %v1911, %v2111
        %v2162 = vadd.f32 %v1912, %v2116
        %v2163 = vadd.f32 %v1913, %v2121
        %v2164 = vadd.f32 %v1914, %v2126
        %v2165 = vadd.f32 %v1915, %v2131
        %v2166 = vadd.f32 %v1916, %v2136
        %v2167 = vadd.f32 %v1917, %v2141
        %v2168 = vld [vmem:[%s187 + $0x32] sm:$0xff]
        %v2169 = vld [vmem:[%s187 + $0x3a] sm:$0xff]
        %v2170 = vld [vmem:[%s187 + $0x42] sm:$0xff]
        %v2171 = vld [vmem:[%s187 + $0x4a] sm:$0xff]
        %v2172 = vld [vmem:[%s187 + $0x52] sm:$0xff]
        %v2173 = vld [vmem:[%s187 + $0x5a] sm:$0xff]
        %v2174 = vld [vmem:[%s187 + $0x62] sm:$0xff]
        %v2175 = vld [vmem:[%s187 + $0x6a] sm:$0xff]
        %v2176 = vld [vmem:[%s187 + $0x72] sm:$0xff]
        %v2177 = vld [vmem:[%s187 + $0x7a] sm:$0xff]
        %v2178 = vld [vmem:[%s187 + $0x82] sm:$0xff]
        %v2179 = vld [vmem:[%s187 + $0x8a] sm:$0xff]
        %v2180 = vld [vmem:[%s187 + $0x92] sm:$0xff]
        %v2181 = vld [vmem:[%s187 + $0x9a] sm:$0xff]
        %v2182 = vld [vmem:[%s187 + $0xa2] sm:$0xff]
        %v2183 = vld [vmem:[%s187 + $0xaa] sm:$0xff]
        %v2184 = vld [vmem:[%s187 + $0xb2] sm:$0xff]
        %v2185 = vld [vmem:[%s187 + $0xba] sm:$0xff]
        %v2186 = vld [vmem:[%s187 + $0xc2] sm:$0xff]
        %v2187 = vld [vmem:[%s187 + $0xca] sm:$0xff]
        %v2188 = vld [vmem:[%s187 + $0xd2] sm:$0xff]
        %v2189 = vld [vmem:[%s187 + $0xda] sm:$0xff]
        %v2190 = vld [vmem:[%s187 + $0xe2] sm:$0xff]
        %v2191 = vld [vmem:[%s187 + $0xea] sm:$0xff]
        %s2192 = scalar_lea.vmem [#allocation4], 1024
        %v2193 = vld [vmem:[%s2192] sm:$0xff]
        %v2194 = vld [vmem:[%s2192 + $0x8] sm:$0xff]
        %v2195 = vld [vmem:[%s2192 + $0x10] sm:$0xff]
        %v2196 = vld [vmem:[%s2192 + $0x18] sm:$0xff]
        %v2197 = vld [vmem:[%s2192 + $0x20] sm:$0xff]
        %v2198 = vld [vmem:[%s2192 + $0x28] sm:$0xff]
        %v2199 = vld [vmem:[%s2192 + $0x30] sm:$0xff]
        %v2200 = vld [vmem:[%s2192 + $0x38] sm:$0xff]
        %v2201 = vld [vmem:[%s2192 + $0x40] sm:$0xff]
        %v2202 = vld [vmem:[%s2192 + $0x48] sm:$0xff]
        %v2203 = vld [vmem:[%s2192 + $0x50] sm:$0xff]
        %v2204 = vld [vmem:[%s2192 + $0x58] sm:$0xff]
        %v2205 = vld [vmem:[%s2192 + $0x60] sm:$0xff]
        %v2206 = vld [vmem:[%s2192 + $0x68] sm:$0xff]
        %v2207 = vld [vmem:[%s2192 + $0x70] sm:$0xff]
        %v2208 = vld [vmem:[%s2192 + $0x78] sm:$0xff]
        %2209 = vmatprep.subr.mxu0 0.0
        %2210 = vmatpush1.msra.mxu0 %v2193
        %2211 = vmatprep.subr.mxu0 0.0
        %2212 = vmatpush1.msra.mxu0 %v2194
        %2213 = vmatprep.subr.mxu0 0.0
        %2214 = vmatpush1.msra.mxu0 %v2195
        %2215 = vmatprep.subr.mxu0 0.0
        %2216 = vmatpush1.msra.mxu0 %v2196
        %2217 = vmatprep.subr.mxu0 0.0
        %2218 = vmatpush1.msra.mxu0 %v2197
        %2219 = vmatprep.subr.mxu0 0.0
        %2220 = vmatpush1.msra.mxu0 %v2198
        %2221 = vmatprep.subr.mxu0 0.0
        %2222 = vmatpush1.msra.mxu0 %v2199
        %2223 = vmatprep.subr.mxu0 0.0
        %2224 = vmatpush1.msra.mxu0 %v2200
        %2225 = vmatprep.subr.mxu0 0.0
        %2226 = vmatpush1.msra.mxu0 %v2201
        %2227 = vmatprep.subr.mxu0 0.0
        %2228 = vmatpush1.msra.mxu0 %v2202
        %2229 = vmatprep.subr.mxu0 0.0
        %2230 = vmatpush1.msra.mxu0 %v2203
        %2231 = vmatprep.subr.mxu0 0.0
        %2232 = vmatpush1.msra.mxu0 %v2204
        %2233 = vmatprep.subr.mxu0 0.0
        %2234 = vmatpush1.msra.mxu0 %v2205
        %2235 = vmatprep.subr.mxu0 0.0
        %2236 = vmatpush1.msra.mxu0 %v2206
        %2237 = vmatprep.subr.mxu0 0.0
        %2238 = vmatpush1.msra.mxu0 %v2207
        %2239 = vmatprep.subr.mxu0 0.0
        %2240 = vmatpush1.msra.mxu0 %v2208
        %2241 = vmatprep.subr.mxu0 0.0
        %2242 = vmatpush1.msra.mxu0 0.0
        %2243 = vmatprep.subr.mxu0 0.0
        %2244 = vmatpush1.msra.mxu0 0.0
        %2245 = vmatprep.subr.mxu0 0.0
        %2246 = vmatpush1.msra.mxu0 0.0
        %2247 = vmatprep.subr.mxu0 0.0
        %2248 = vmatpush1.msra.mxu0 0.0
        %2249 = vmatprep.subr.mxu0 0.0
        %2250 = vmatpush1.msra.mxu0 0.0
        %2251 = vmatprep.subr.mxu0 0.0
        %2252 = vmatpush1.msra.mxu0 0.0
        %2253 = vmatprep.subr.mxu0 0.0
        %2254 = vmatpush1.msra.mxu0 0.0
        %2255 = vmatprep.subr.mxu0 0.0
        %2256 = vmatpush1.msra.mxu0 0.0
        %2257 = vmatprep.subr.mxu0 0.0
        %2258 = vmatpush1.msra.mxu0 0.0
        %2259 = vmatprep.subr.mxu0 0.0
        %2260 = vmatpush1.msra.mxu0 0.0
        %2261 = vmatprep.subr.mxu0 0.0
        %2262 = vmatpush1.msra.mxu0 0.0
        %2263 = vmatprep.subr.mxu0 0.0
        %2264 = vmatpush1.msra.mxu0 0.0
        %2265 = vmatprep.subr.mxu0 0.0
        %2266 = vmatpush1.msra.mxu0 0.0
        %2267 = vmatprep.subr.mxu0 0.0
        %2268 = vmatpush1.msra.mxu0 0.0
        %2269 = vmatprep.subr.mxu0 0.0
        %2270 = vmatpush1.msra.mxu0 0.0
        %2271 = vmatprep.subr.mxu0 0.0
        %2272 = vmatpush1.msra.mxu0 0.0
        %2273 = vmatprep.mubr.f32.mxu0 0.0
        %2274 = vmatmul.mubr.f32.gmra.mrb[0].mxu0 %v2168
        %v2275 = vpop.f32.mrb[0].mxu0
        %v2276 = vadd.f32 0.0, %v2275
        %v2277 = vpop.f32.mrb[0].mxu0
        %2278 = vmatprep.mubr.f32.mxu0 0.0
        %2279 = vmatmul.mubr.f32.gmra.mrb[0].mxu0 %v2169
        %v2280 = vpop.f32.mrb[0].mxu0
        %v2281 = vadd.f32 0.0, %v2280
        %v2282 = vpop.f32.mrb[0].mxu0
        %2283 = vmatprep.mubr.f32.mxu0 0.0
        %2284 = vmatmul.mubr.f32.gmra.mrb[0].mxu0 %v2170
        %v2285 = vpop.f32.mrb[0].mxu0
        %v2286 = vadd.f32 0.0, %v2285
        %v2287 = vpop.f32.mrb[0].mxu0
        %2288 = vmatprep.mubr.f32.mxu0 0.0
        %2289 = vmatmul.mubr.f32.gmra.mrb[0].mxu0 %v2171
        %v2290 = vpop.f32.mrb[0].mxu0
        %v2291 = vadd.f32 0.0, %v2290
        %v2292 = vpop.f32.mrb[0].mxu0
        %2293 = vmatprep.mubr.f32.mxu0 0.0
        %2294 = vmatmul.mubr.f32.gmra.mrb[0].mxu0 %v2172
        %v2295 = vpop.f32.mrb[0].mxu0
        %v2296 = vadd.f32 0.0, %v2295
        %v2297 = vpop.f32.mrb[0].mxu0
        %2298 = vmatprep.mubr.f32.mxu0 0.0
        %2299 = vmatmul.mubr.f32.gmra.mrb[0].mxu0 %v2173
        %v2300 = vpop.f32.mrb[0].mxu0
        %v2301 = vadd.f32 0.0, %v2300
        %v2302 = vpop.f32.mrb[0].mxu0
        %2303 = vmatprep.mubr.f32.mxu0 0.0
        %2304 = vmatmul.mubr.f32.gmra.mrb[0].mxu0 %v2174
        %v2305 = vpop.f32.mrb[0].mxu0
        %v2306 = vadd.f32 0.0, %v2305
        %v2307 = vpop.f32.mrb[0].mxu0
        %2308 = vmatprep.mubr.f32.mxu0 0.0
        %2309 = vmatmul.mubr.f32.gmra.mrb[0].mxu0 %v2175
        %v2310 = vpop.f32.mrb[0].mxu0
        %v2311 = vadd.f32 0.0, %v2310
        %v2312 = vpop.f32.mrb[0].mxu0
        %2313 = vmatprep.mubr.f32.mxu0 0.0
        %2314 = vmatmul.mubr.f32.gmra.mrb[0].mxu0 %v2176
        %v2315 = vpop.f32.mrb[0].mxu0
        %v2316 = vadd.f32 0.0, %v2315
        %v2317 = vpop.f32.mrb[0].mxu0
        %2318 = vmatprep.mubr.f32.mxu0 0.0
        %2319 = vmatmul.mubr.f32.gmra.mrb[0].mxu0 %v2177
        %v2320 = vpop.f32.mrb[0].mxu0
        %v2321 = vadd.f32 0.0, %v2320
        %v2322 = vpop.f32.mrb[0].mxu0
        %2323 = vmatprep.mubr.f32.mxu0 0.0
        %2324 = vmatmul.mubr.f32.gmra.mrb[0].mxu0 %v2178
        %v2325 = vpop.f32.mrb[0].mxu0
        %v2326 = vadd.f32 0.0, %v2325
        %v2327 = vpop.f32.mrb[0].mxu0
        %2328 = vmatprep.mubr.f32.mxu0 0.0
        %2329 = vmatmul.mubr.f32.gmra.mrb[0].mxu0 %v2179
        %v2330 = vpop.f32.mrb[0].mxu0
        %v2331 = vadd.f32 0.0, %v2330
        %v2332 = vpop.f32.mrb[0].mxu0
        %2333 = vmatprep.mubr.f32.mxu0 0.0
        %2334 = vmatmul.mubr.f32.gmra.mrb[0].mxu0 %v2180
        %v2335 = vpop.f32.mrb[0].mxu0
        %v2336 = vadd.f32 0.0, %v2335
        %v2337 = vpop.f32.mrb[0].mxu0
        %2338 = vmatprep.mubr.f32.mxu0 0.0
        %2339 = vmatmul.mubr.f32.gmra.mrb[0].mxu0 %v2181
        %v2340 = vpop.f32.mrb[0].mxu0
        %v2341 = vadd.f32 0.0, %v2340
        %v2342 = vpop.f32.mrb[0].mxu0
        %2343 = vmatprep.mubr.f32.mxu0 0.0
        %2344 = vmatmul.mubr.f32.gmra.mrb[0].mxu0 %v2182
        %v2345 = vpop.f32.mrb[0].mxu0
        %v2346 = vadd.f32 0.0, %v2345
        %v2347 = vpop.f32.mrb[0].mxu0
        %2348 = vmatprep.mubr.f32.mxu0 0.0
        %2349 = vmatmul.mubr.f32.gmra.mrb[0].mxu0 %v2183
        %v2350 = vpop.f32.mrb[0].mxu0
        %v2351 = vadd.f32 0.0, %v2350
        %v2352 = vpop.f32.mrb[0].mxu0
        %2353 = vmatprep.mubr.f32.mxu0 0.0
        %2354 = vmatmul.mubr.f32.gmra.mrb[0].mxu0 %v2184
        %v2355 = vpop.f32.mrb[0].mxu0
        %v2356 = vadd.f32 0.0, %v2355
        %v2357 = vpop.f32.mrb[0].mxu0
        %2358 = vmatprep.mubr.f32.mxu0 0.0
        %2359 = vmatmul.mubr.f32.gmra.mrb[0].mxu0 %v2185
        %v2360 = vpop.f32.mrb[0].mxu0
        %v2361 = vadd.f32 0.0, %v2360
        %v2362 = vpop.f32.mrb[0].mxu0
        %2363 = vmatprep.mubr.f32.mxu0 0.0
        %2364 = vmatmul.mubr.f32.gmra.mrb[0].mxu0 %v2186
        %v2365 = vpop.f32.mrb[0].mxu0
        %v2366 = vadd.f32 0.0, %v2365
        %v2367 = vpop.f32.mrb[0].mxu0
        %2368 = vmatprep.mubr.f32.mxu0 0.0
        %2369 = vmatmul.mubr.f32.gmra.mrb[0].mxu0 %v2187
        %v2370 = vpop.f32.mrb[0].mxu0
        %v2371 = vadd.f32 0.0, %v2370
        %v2372 = vpop.f32.mrb[0].mxu0
        %2373 = vmatprep.mubr.f32.mxu0 0.0
        %2374 = vmatmul.mubr.f32.gmra.mrb[0].mxu0 %v2188
        %v2375 = vpop.f32.mrb[0].mxu0
        %v2376 = vadd.f32 0.0, %v2375
        %v2377 = vpop.f32.mrb[0].mxu0
        %2378 = vmatprep.mubr.f32.mxu0 0.0
        %2379 = vmatmul.mubr.f32.gmra.mrb[0].mxu0 %v2189
        %v2380 = vpop.f32.mrb[0].mxu0
        %v2381 = vadd.f32 0.0, %v2380
        %v2382 = vpop.f32.mrb[0].mxu0
        %2383 = vmatprep.mubr.f32.mxu0 0.0
        %2384 = vmatmul.mubr.f32.gmra.mrb[0].mxu0 %v2190
        %v2385 = vpop.f32.mrb[0].mxu0
        %v2386 = vadd.f32 0.0, %v2385
        %v2387 = vpop.f32.mrb[0].mxu0
        %2388 = vmatprep.mubr.f32.mxu0 0.0
        %2389 = vmatmul.mubr.f32.gmra.mrb[0].mxu0 %v2191
        %v2390 = vpop.f32.mrb[0].mxu0
        %v2391 = vadd.f32 0.0, %v2390
        %v2392 = vpop.f32.mrb[0].mxu0
        %2393 = vdwg.mxu0
        %v2394 = vadd.f32 %v2144, %v2276
        %v2395 = vadd.f32 %v2145, %v2281
        %v2396 = vadd.f32 %v2146, %v2286
        %v2397 = vadd.f32 %v2147, %v2291
        %v2398 = vadd.f32 %v2148, %v2296
        %v2399 = vadd.f32 %v2149, %v2301
        %v2400 = vadd.f32 %v2150, %v2306
        %v2401 = vadd.f32 %v2151, %v2311
        %v2402 = vadd.f32 %v2152, %v2316
        %v2403 = vadd.f32 %v2153, %v2321
        %v2404 = vadd.f32 %v2154, %v2326
        %v2405 = vadd.f32 %v2155, %v2331
        %v2406 = vadd.f32 %v2156, %v2336
        %v2407 = vadd.f32 %v2157, %v2341
        %v2408 = vadd.f32 %v2158, %v2346
        %v2409 = vadd.f32 %v2159, %v2351
        %v2410 = vadd.f32 %v2160, %v2356
        %v2411 = vadd.f32 %v2161, %v2361
        %v2412 = vadd.f32 %v2162, %v2366
        %v2413 = vadd.f32 %v2163, %v2371
        %v2414 = vadd.f32 %v2164, %v2376
        %v2415 = vadd.f32 %v2165, %v2381
        %v2416 = vadd.f32 %v2166, %v2386
        %v2417 = vadd.f32 %v2167, %v2391
        %v2418 = vld [vmem:[%s2] sm:$0x1]
        %v2420 = vlaneseq
        %v2421 = vshrl.u32 %v2420, 7
        %v2422 = vsub.s32 0, %v2421
        %v2423 = vrot.slane %v2418, %v2422
        %v2425 = vadd.f32 %v2394, %v2423
        %v2426 = vadd.f32 %v2395, %v2423
        %v2427 = vadd.f32 %v2396, %v2423
        %v2428 = vadd.f32 %v2397, %v2423
        %v2429 = vadd.f32 %v2398, %v2423
        %v2430 = vadd.f32 %v2399, %v2423
        %v2431 = vadd.f32 %v2400, %v2423
        %v2432 = vadd.f32 %v2401, %v2423
        %v2433 = vadd.f32 %v2402, %v2423
        %v2434 = vadd.f32 %v2403, %v2423
        %v2435 = vadd.f32 %v2404, %v2423
        %v2436 = vadd.f32 %v2405, %v2423
        %v2437 = vadd.f32 %v2406, %v2423
        %v2438 = vadd.f32 %v2407, %v2423
        %v2439 = vadd.f32 %v2408, %v2423
        %v2440 = vadd.f32 %v2409, %v2423
        %v2441 = vadd.f32 %v2410, %v2423
        %v2442 = vadd.f32 %v2411, %v2423
        %v2443 = vadd.f32 %v2412, %v2423
        %v2444 = vadd.f32 %v2413, %v2423
        %v2445 = vadd.f32 %v2414, %v2423
        %v2446 = vadd.f32 %v2415, %v2423
        %v2447 = vadd.f32 %v2416, %v2423
        %v2448 = vadd.f32 %v2417, %v2423
        %2449 = vst [vmem:[%s151] sm:$0xff] %v2425
        %2450 = vst [vmem:[%s151 + $0x8] sm:$0xff] %v2426
        %2451 = vst [vmem:[%s151 + $0x10] sm:$0xff] %v2427
        %2452 = vst [vmem:[%s151 + $0x18] sm:$0xff] %v2428
        %2453 = vst [vmem:[%s151 + $0x20] sm:$0xff] %v2429
        %2454 = vst [vmem:[%s151 + $0x28] sm:$0xff] %v2430
        %2455 = vst [vmem:[%s151 + $0x30] sm:$0xff] %v2431
        %2456 = vst [vmem:[%s151 + $0x38] sm:$0xff] %v2432
        %2457 = vst [vmem:[%s151 + $0x40] sm:$0xff] %v2433
        %2458 = vst [vmem:[%s151 + $0x48] sm:$0xff] %v2434
        %2459 = vst [vmem:[%s151 + $0x50] sm:$0xff] %v2435
        %2460 = vst [vmem:[%s151 + $0x58] sm:$0xff] %v2436
        %2461 = vst [vmem:[%s151 + $0x60] sm:$0xff] %v2437
        %2462 = vst [vmem:[%s151 + $0x68] sm:$0xff] %v2438
        %2463 = vst [vmem:[%s151 + $0x70] sm:$0xff] %v2439
        %2464 = vst [vmem:[%s151 + $0x78] sm:$0xff] %v2440
        %2465 = vst [vmem:[%s151 + $0x80] sm:$0xff] %v2441
        %2466 = vst [vmem:[%s151 + $0x88] sm:$0xff] %v2442
        %2467 = vst [vmem:[%s151 + $0x90] sm:$0xff] %v2443
        %2468 = vst [vmem:[%s151 + $0x98] sm:$0xff] %v2444
        %2469 = vst [vmem:[%s151 + $0xa0] sm:$0xff] %v2445
        %2470 = vst [vmem:[%s151 + $0xa8] sm:$0xff] %v2446
        %2471 = vst [vmem:[%s151 + $0xb0] sm:$0xff] %v2447
        %2472 = vst [vmem:[%s151 + $0xb8] sm:$0xff] %v2448
        %s2473 = sand.u32 %s82, 1
        %s2474 = scalar_lea.sflag [#allocation6], %s2473
        %s2475 = sand.u32 %s82, 1
        %s2476 = smul.addr %s2475, 192
        %s2477 = scalar_lea.vmem [#allocation7], %s2476
        // Predicated region
        $region49: #{tpu_custom_call.1} parent=27 // pred_check
          %p2478 = pneg %p92
        $region50: #{tpu_custom_call.1} parent=27 // pred_check_branch
          %2480 = sbr.rel (%p2478) target = $region52
        $region51: #{tpu_custom_call.1} parent=27 // pred_region
          %s2481 = smul.u32 8, %s23
          %s2483 = ssub.s32 3072, 3072
          %2484 = vsyncadd %s2474, %s2483
          %s2485 = smul.addr %s2481, 3
          %s2486 = smul.addr %s22, 48
          %s2487 = sadd.s32 %s2485, %s2486
          %s2488 = smul.addr %s2487, 128
          %s2489 = scalar_lea.hbm %s3, %s2488
          %s2490 = sshll.u32 %s2477, 4
          %s2491 = int_to_ptr.vmem [resolvable:$true] %s2490
          %2496 = dma.vmem_to_hbm [thread:$0]  %s2491, 3072, %s2489, %s2474, 128, 128, 8
        $region52: #{tpu_custom_call.1} parent=27 // pred_fallthru
          _
      $region28: #{tpu_custom_call.1} parent=5 // pred_fallthru
        _
      %p2497 = scmp.le.s32.totalorder 2, %s13
      // Predicated region
      $region53: #{tpu_custom_call.1} parent=5 // pred_check
        %p2498 = pneg %p2497
      $region54: #{tpu_custom_call.1} parent=5 // pred_check_branch
        %2500 = sbr.rel (%p2498) target = $region56
      $region55: #{tpu_custom_call.1} parent=5 // pred_region
        %s2501 = ssub.s32 %s13, 2
        // Predicated region
        $region57: #{tpu_custom_call.1} parent=55 // pred_check
          %p2502 = pneg %p98
        $region58: #{tpu_custom_call.1} parent=55 // pred_check_branch
          %2504 = sbr.rel (%p2502) target = $region60
        $region59: #{tpu_custom_call.1} parent=55 // pred_region
          %s2505 = sand.u32 %s83, 1
          %s2506 = scalar_lea.sflag [#allocation6], %s2505
          %s2507 = sand.u32 %s83, 1
          %s2508 = smul.addr %s2507, 192
          %s2509 = scalar_lea.vmem [#allocation7], %s2508
          %2510 = dma.done %s2506, 3072
        $region60: #{tpu_custom_call.1} parent=55 // pred_fallthru
          _
      $region56: #{tpu_custom_call.1} parent=5 // pred_fallthru
        _
    $region6: #{tpu_custom_call.1} parent=1 // loop_footer
      %s17 = sadd.s32 1, %s13
    $region7: #{tpu_custom_call.1} parent=1 // loop_footer_branch
      %12 = sbr.rel target = $region3
    $region8: #{tpu_custom_call.1} parent=1 // loop_exit
      _
    %2511 = vsyncpa [#allocation5], 1
    %s2512 = scalar_lea.sflag [#allocation5], 1
    %2513 = vsyncpa %s2512, 1
    %2514 = vsyncpa [#allocation6], 1
    %s2515 = scalar_lea.sflag [#allocation6], 1
    %2516 = vsyncpa %s2515, 1
  %2517 = vsyncmov [#allocation3]
  %s2518 = vpop.sfrf %2517
  %p2519 = scmp.eq.s32.totalorder %s2518, 0
  %p2520 = pneg %p2519
  %2522 = shalt.err (%p2520)
  %s2523 = scalar_lea.sflag [#allocation3], 1
  %2524 = vsyncmov %s2523
  %s2525 = vpop.sfrf %2524
  %p2526 = scmp.eq.s32.totalorder %s2525, 0
  %p2527 = pneg %p2526
  %2529 = shalt.err (%p2527)

</llo_original>
